<compile_context>
chip_gen: v5e
topology: v5e:2x2
jax: 0.10.0
libtpu: 0.0.40
codegen_flags: <defaults>
</compile_context>

<pallas_src>
import functools
import math

import jax
import jax.numpy as jnp
import numpy as np
from jax import lax
from jax.experimental import pallas as pl
from jax.experimental.pallas import tpu as pltpu


# ---------------------------------------------------------------------------
# Fused Impala-block kernel (one batch element per grid step)
# ---------------------------------------------------------------------------
def _impala_kernel(x_ref, mLA_ref, mRA_ref, mLB_ref, mRB_ref, sel_ref,
                   w1_ref, b1_ref, w2_ref, b2_ref, w3_ref, b3_ref,
                   w4_ref, b4_ref, w5_ref, b5_ref,
                   o_ref, padA_ref, padB_ref, *, H, W, Ho, Wo):
    HW = H * W
    HWp = Ho * Wo
    NEG = -1e30

    mLA = mLA_ref[...]            # (1, HW)  0. at w == 0     else 1.
    mRA = mRA_ref[...]            # (1, HW)  0. at w == W-1   else 1.
    mLB = mLB_ref[...]            # (1, HWp) same, at pooled resolution
    mRB = mRB_ref[...]
    # additive (-1e30 / 0.) variants for the max-pool edge handling
    aLA = (mLA - 1.0) * 1e30
    aRA = (mRA - 1.0) * 1e30

    def conv3x3(tap, w_ref, b_ref, mL, mR, Wdim):
        """3x3 / stride-1 / pad-1 conv over a row-padded flat (C, L) buffer.

        tap(s) returns the (Cin, Hd*Wd) slice at lane offset s.  The 9 taps are
        grouped by dx so the wrapped left/right edge columns are zeroed with a
        single broadcast mask per group; accumulation is in f32.
        """
        groups = []
        for dx in range(3):
            acc = None
            for dy in range(3):
                d = jnp.dot(w_ref[dy * 3 + dx], tap(dy * Wdim + dx),
                            preferred_element_type=jnp.float32)
                acc = d if acc is None else acc + d
            groups.append(acc)
        return groups[0] * mL + groups[1] + groups[2] * mR + b_ref[...]

    # ---- conv (Cin -> Cout) at (H, W); x_ref arrives pre zero-padded --------
    y = conv3x3(lambda s: x_ref[0, :, pl.ds(s, HW)],
                w1_ref, b1_ref, mLA, mRA, W)

    # ---- fused maxpool 3x3 / stride 2 / pad 1 -------------------------------
    padA_ref[...] = jnp.full(padA_ref.shape, NEG, jnp.float32)
    padA_ref[:, pl.ds(W + 1, HW)] = y
    m = None
    for dh in range(3):
        for dw in range(3):
            tap = padA_ref[:, pl.ds(dh * W + dw, HW)]
            if dw == 0:
                tap = tap + aLA          # drop col w-1 when w == 0
            elif dw == 2:
                tap = tap + aRA          # drop col w+1 when w == W-1
            m = tap if m is None else jnp.maximum(m, tap)
    # stride-2 compaction (even rows / even cols) as one constant 0/1 matmul.
    y = jnp.dot(m, sel_ref[...], preferred_element_type=jnp.float32)  # (Cout, HWp)

    # ---- two residual blocks, all intermediates stay in VMEM ----------------
    padB_ref[...] = jnp.zeros(padB_ref.shape, jnp.float32)
    tapB = lambda s: padB_ref[:, pl.ds(s, HWp)]
    for wa_ref, ba_ref, wb_ref, bb_ref in (
            (w2_ref, b2_ref, w3_ref, b3_ref),
            (w4_ref, b4_ref, w5_ref, b5_ref)):
        padB_ref[:, pl.ds(Wo + 1, HWp)] = jnp.maximum(y, 0.0)        # relu1
        t = conv3x3(tapB, wa_ref, ba_ref, mLB, mRB, Wo)              # conv1
        padB_ref[:, pl.ds(Wo + 1, HWp)] = jnp.maximum(t, 0.0)        # relu2
        y = conv3x3(tapB, wb_ref, bb_ref, mLB, mRB, Wo) + y          # conv2 + res

    o_ref[0] = y


# ---------------------------------------------------------------------------
# Host wrapper: NCHW in, NCHW out (matches the PyTorch module)
# ---------------------------------------------------------------------------
def impala_block_forward(x_nchw, params):
    N, Cin, H, W = x_nchw.shape
    Cout = params["conv"][0].shape[0]
    # pool index mapping (out[i,j] centered at input (2i,2j)) derived for even H,W
    assert H % 2 == 0 and W % 2 == 0
    Ho = (H + 2 - 3) // 2 + 1
    Wo = (W + 2 - 3) // 2 + 1
    HW, HWp = H * W, Ho * Wo
    LA = HW + 2 * W + 2           # one pad row above/below + 1 slack elem each side
    LB = HWp + 2 * Wo + 2

    # NCHW -> (N, C, H*W) is a pure reshape (no transpose); pad rows for conv1.
    x = x_nchw.astype(jnp.float32).reshape(N, Cin, HW)
    x_pad = jnp.pad(x, ((0, 0), (0, 0), (W + 1, W + 1)))

    # Edge-column masks (f32 0/1), built at trace time with numpy.
    colA = np.arange(HW) % W
    colB = np.arange(HWp) % Wo
    mLA = jnp.asarray((colA != 0).astype(np.float32)[None, :])
    mRA = jnp.asarray((colA != W - 1).astype(np.float32)[None, :])
    mLB = jnp.asarray((colB != 0).astype(np.float32)[None, :])
    mRB = jnp.asarray((colB != Wo - 1).astype(np.float32)[None, :])

    # Stride-2 (even row, even col) selection matrix for the pool compaction.
    sel_np = np.zeros((HW, HWp), np.float32)
    src = (2 * np.arange(Ho)[:, None] * W + 2 * np.arange(Wo)[None, :]).ravel()
    sel_np[src, np.arange(HWp)] = 1.0
    sel = jnp.asarray(sel_np)

    def prep(w, b):   # (Cout,Cin,3,3) -> (9, Cout, Cin) tap-major; bias -> (Cout,1)
        co, ci = w.shape[0], w.shape[1]
        return (jnp.transpose(w, (2, 3, 0, 1)).reshape(9, co, ci),
                b.reshape(co, 1))

    w1, b1 = prep(*params["conv"])
    w2, b2 = prep(*params["res1_conv1"])
    w3, b3 = prep(*params["res1_conv2"])
    w4, b4 = prep(*params["res2_conv1"])
    w5, b5 = prep(*params["res2_conv2"])

    def resident(a):              # constant/weight block, identical for every step
        zeros = (0,) * a.ndim
        return pl.BlockSpec(a.shape, lambda n, z=zeros: z)

    consts = (mLA, mRA, mLB, mRB, sel, w1, b1, w2, b2, w3, b3, w4, b4, w5, b5)
    kernel = functools.partial(_impala_kernel, H=H, W=W, Ho=Ho, Wo=Wo)

    out = pl.pallas_call(
        kernel,
        out_shape=jax.ShapeDtypeStruct((N, Cout, HWp), jnp.float32),
        grid=(N,),
        in_specs=[pl.BlockSpec((1, Cin, LA), lambda n: (n, 0, 0))]
                 + [resident(a) for a in consts],
        out_specs=pl.BlockSpec((1, Cout, HWp), lambda n: (n, 0, 0)),
        scratch_shapes=[pltpu.VMEM((Cout, LA), jnp.float32),   # -inf pad buf (pool)
                        pltpu.VMEM((Cout, LB), jnp.float32)],  # zero  pad buf (convs)
        compiler_params=pltpu.CompilerParams(
            dimension_semantics=("parallel",)),
    )(x_pad, *consts)
    return out.reshape(N, Cout, Ho, Wo)


# ---------------------------------------------------------------------------
# Pure-JAX reference (for correctness check)
# ---------------------------------------------------------------------------
def _ref_conv(x, w, b):
    w_hwio = jnp.transpose(w, (2, 3, 1, 0))
    y = lax.conv_general_dilated(x, w_hwio, (1, 1), ((1, 1), (1, 1)),
                                 dimension_numbers=("NHWC", "HWIO", "NHWC"))
    return y + b[None, None, None, :]


def reference_forward(x_nchw, params):
    x = jnp.transpose(x_nchw, (0, 2, 3, 1)).astype(jnp.float32)
    y = _ref_conv(x, *params["conv"])
    y = lax.reduce_window(y, -jnp.inf, lax.max, (1, 3, 3, 1), (1, 2, 2, 1),
                          ((0, 0), (1, 1), (1, 1), (0, 0)))
    for blk in ("res1", "res2"):
        t = _ref_conv(jax.nn.relu(y), *params[f"{blk}_conv1"])
        t = _ref_conv(jax.nn.relu(t), *params[f"{blk}_conv2"])
        y = t + y
    return jnp.transpose(y, (0, 3, 1, 2))


# ---------------------------------------------------------------------------
# Deterministic parameter init (PyTorch Conv2d-style uniform bounds)
# ---------------------------------------------------------------------------
def init_conv_params(key, cin, cout):
    kw, kb = jax.random.split(key)
    bound = 1.0 / math.sqrt(cin * 9)
    w = jax.random.uniform(kw, (cout, cin, 3, 3), jnp.float32, -bound, bound)
    b = jax.random.uniform(kb, (cout,), jnp.float32, -bound, bound)
    return w, b


if __name__ == "__main__":
    key = jax.random.PRNGKey(0)
    N, Cin, Cout, H, W = 2, 4, 8, 16, 16
    k_x, k0, k1, k2, k3, k4 = jax.random.split(key, 6)
    x = jax.random.normal(k_x, (N, Cin, H, W), jnp.float32)
    params = {
        "conv": init_conv_params(k0, Cin, Cout),
        "res1_conv1": init_conv_params(k1, Cout, Cout),
        "res1_conv2": init_conv_params(k2, Cout, Cout),
        "res2_conv1": init_conv_params(k3, Cout, Cout),
        "res2_conv2": init_conv_params(k4, Cout, Cout),
    }

    out = jax.jit(impala_block_forward)(x, params)
    out = jax.block_until_ready(out)
    assert out.shape == (N, Cout, 8, 8), out.shape

    ref = jax.block_until_ready(reference_forward(x, params))
    np.testing.assert_allclose(np.asarray(out), np.asarray(ref),
                               rtol=1e-2, atol=1e-2)

    print("KERNEL_OK")
</pallas_src>

<mosaic_0001>
module attributes {stable_mosaic.version = 11 : i64} {
  func.func @_impala_kernel(%arg0: i32, %arg1: memref<1x4x290xf32, #tpu.memory_space<vmem>>, %arg2: memref<1x256xf32, #tpu.memory_space<vmem>>, %arg3: memref<1x256xf32, #tpu.memory_space<vmem>>, %arg4: memref<1x64xf32, #tpu.memory_space<vmem>>, %arg5: memref<1x64xf32, #tpu.memory_space<vmem>>, %arg6: memref<256x64xf32, #tpu.memory_space<vmem>>, %arg7: memref<9x8x4xf32, #tpu.memory_space<vmem>>, %arg8: memref<8x1xf32, #tpu.memory_space<vmem>>, %arg9: memref<9x8x8xf32, #tpu.memory_space<vmem>>, %arg10: memref<8x1xf32, #tpu.memory_space<vmem>>, %arg11: memref<9x8x8xf32, #tpu.memory_space<vmem>>, %arg12: memref<8x1xf32, #tpu.memory_space<vmem>>, %arg13: memref<9x8x8xf32, #tpu.memory_space<vmem>>, %arg14: memref<8x1xf32, #tpu.memory_space<vmem>>, %arg15: memref<9x8x8xf32, #tpu.memory_space<vmem>>, %arg16: memref<8x1xf32, #tpu.memory_space<vmem>>, %arg17: memref<1x8x64xf32, #tpu.memory_space<vmem>>, %arg18: memref<8x290xf32, #tpu.memory_space<vmem>>, %arg19: memref<8x82xf32, #tpu.memory_space<vmem>>) attributes {dimension_semantics = [#tpu.dimension_semantics<parallel>], iteration_bounds = array<i64: 2>, scalar_prefetch = 0 : i64, scratch_operands = 2 : i64, tpu.core_type = #tpu.core_type<tc>, window_params = [{transform_indices = @transform_0, window_bounds = array<i64: 1, 4, 290>}, {pipeline_mode = #tpu.pipeline_mode<synchronous>, transform_indices = @transform_1, window_bounds = array<i64: 1, 256>}, {pipeline_mode = #tpu.pipeline_mode<synchronous>, transform_indices = @transform_2, window_bounds = array<i64: 1, 256>}, {pipeline_mode = #tpu.pipeline_mode<synchronous>, transform_indices = @transform_3, window_bounds = array<i64: 1, 64>}, {pipeline_mode = #tpu.pipeline_mode<synchronous>, transform_indices = @transform_4, window_bounds = array<i64: 1, 64>}, {pipeline_mode = #tpu.pipeline_mode<synchronous>, transform_indices = @transform_5, window_bounds = array<i64: 256, 64>}, {pipeline_mode = #tpu.pipeline_mode<synchronous>, transform_indices = @transform_6, window_bounds = array<i64: 9, 8, 4>}, {pipeline_mode = #tpu.pipeline_mode<synchronous>, transform_indices = @transform_7, window_bounds = array<i64: 8, 1>}, {pipeline_mode = #tpu.pipeline_mode<synchronous>, transform_indices = @transform_8, window_bounds = array<i64: 9, 8, 8>}, {pipeline_mode = #tpu.pipeline_mode<synchronous>, transform_indices = @transform_9, window_bounds = array<i64: 8, 1>}, {pipeline_mode = #tpu.pipeline_mode<synchronous>, transform_indices = @transform_10, window_bounds = array<i64: 9, 8, 8>}, {pipeline_mode = #tpu.pipeline_mode<synchronous>, transform_indices = @transform_11, window_bounds = array<i64: 8, 1>}, {pipeline_mode = #tpu.pipeline_mode<synchronous>, transform_indices = @transform_12, window_bounds = array<i64: 9, 8, 8>}, {pipeline_mode = #tpu.pipeline_mode<synchronous>, transform_indices = @transform_13, window_bounds = array<i64: 8, 1>}, {pipeline_mode = #tpu.pipeline_mode<synchronous>, transform_indices = @transform_14, window_bounds = array<i64: 9, 8, 8>}, {pipeline_mode = #tpu.pipeline_mode<synchronous>, transform_indices = @transform_15, window_bounds = array<i64: 8, 1>}, {transform_indices = @transform_16, window_bounds = array<i64: 1, 8, 64>}]} {
    %c0 = arith.constant 0 : index
    %c0_0 = arith.constant 0 : index
    %0 = vector.load %arg2[%c0, %c0_0] : memref<1x256xf32, #tpu.memory_space<vmem>>, vector<1x256xf32>
    %c0_1 = arith.constant 0 : index
    %c0_2 = arith.constant 0 : index
    %1 = vector.load %arg3[%c0_1, %c0_2] : memref<1x256xf32, #tpu.memory_space<vmem>>, vector<1x256xf32>
    %c0_3 = arith.constant 0 : index
    %c0_4 = arith.constant 0 : index
    %2 = vector.load %arg4[%c0_3, %c0_4] : memref<1x64xf32, #tpu.memory_space<vmem>>, vector<1x64xf32>
    %c0_5 = arith.constant 0 : index
    %c0_6 = arith.constant 0 : index
    %3 = vector.load %arg5[%c0_5, %c0_6] : memref<1x64xf32, #tpu.memory_space<vmem>>, vector<1x64xf32>
    %cst = arith.constant 1.000000e+00 : f32
    %4 = vector.broadcast %cst : f32 to vector<1x256xf32>
    %5 = arith.subf %0, %4 : vector<1x256xf32>
    %cst_7 = arith.constant 1.000000e+30 : f32
    %6 = vector.broadcast %cst_7 : f32 to vector<1x256xf32>
    %7 = arith.mulf %5, %6 : vector<1x256xf32>
    %cst_8 = arith.constant 1.000000e+00 : f32
    %8 = vector.broadcast %cst_8 : f32 to vector<1x256xf32>
    %9 = arith.subf %1, %8 : vector<1x256xf32>
    %cst_9 = arith.constant 1.000000e+30 : f32
    %10 = vector.broadcast %cst_9 : f32 to vector<1x256xf32>
    %11 = arith.mulf %9, %10 : vector<1x256xf32>
    %c0_10 = arith.constant 0 : index
    %c0_11 = arith.constant 0 : index
    %c0_12 = arith.constant 0 : index
    %12 = vector.load %arg7[%c0_10, %c0_11, %c0_12] : memref<9x8x4xf32, #tpu.memory_space<vmem>>, vector<1x8x4xf32>
    %13 = vector.shape_cast %12 : vector<1x8x4xf32> to vector<8x4xf32>
    %c0_13 = arith.constant 0 : index
    %c0_14 = arith.constant 0 : index
    %c0_15 = arith.constant 0 : index
    %14 = vector.load %arg1[%c0_13, %c0_14, %c0_15] : memref<1x4x290xf32, #tpu.memory_space<vmem>>, vector<1x4x256xf32>
    %15 = vector.shape_cast %14 : vector<1x4x256xf32> to vector<4x256xf32>
    %cst_16 = arith.constant dense<0.000000e+00> : vector<8x256xf32>
    %16 = tpu.matmul %13, %15, %cst_16 {dimension_numbers = #tpu.dot_dimension_numbers<[1], [0], [0], [1], [0, 0, 1, 1], [], []>} : vector<8x4xf32>, vector<4x256xf32>, vector<8x256xf32> -> vector<8x256xf32>
    %c3 = arith.constant 3 : index
    %c0_17 = arith.constant 0 : index
    %c0_18 = arith.constant 0 : index
    %17 = vector.load %arg7[%c3, %c0_17, %c0_18] : memref<9x8x4xf32, #tpu.memory_space<vmem>>, vector<1x8x4xf32>
    %18 = vector.shape_cast %17 : vector<1x8x4xf32> to vector<8x4xf32>
    %c0_19 = arith.constant 0 : index
    %c0_20 = arith.constant 0 : index
    %c16 = arith.constant 16 : index
    %19 = vector.load %arg1[%c0_19, %c0_20, %c16] : memref<1x4x290xf32, #tpu.memory_space<vmem>>, vector<1x4x256xf32>
    %20 = vector.shape_cast %19 : vector<1x4x256xf32> to vector<4x256xf32>
    %cst_21 = arith.constant dense<0.000000e+00> : vector<8x256xf32>
    %21 = tpu.matmul %18, %20, %cst_21 {dimension_numbers = #tpu.dot_dimension_numbers<[1], [0], [0], [1], [0, 0, 1, 1], [], []>} : vector<8x4xf32>, vector<4x256xf32>, vector<8x256xf32> -> vector<8x256xf32>
    %22 = arith.addf %16, %21 : vector<8x256xf32>
    %c6 = arith.constant 6 : index
    %c0_22 = arith.constant 0 : index
    %c0_23 = arith.constant 0 : index
    %23 = vector.load %arg7[%c6, %c0_22, %c0_23] : memref<9x8x4xf32, #tpu.memory_space<vmem>>, vector<1x8x4xf32>
    %24 = vector.shape_cast %23 : vector<1x8x4xf32> to vector<8x4xf32>
    %c0_24 = arith.constant 0 : index
    %c0_25 = arith.constant 0 : index
    %c32 = arith.constant 32 : index
    %25 = vector.load %arg1[%c0_24, %c0_25, %c32] : memref<1x4x290xf32, #tpu.memory_space<vmem>>, vector<1x4x256xf32>
    %26 = vector.shape_cast %25 : vector<1x4x256xf32> to vector<4x256xf32>
    %cst_26 = arith.constant dense<0.000000e+00> : vector<8x256xf32>
    %27 = tpu.matmul %24, %26, %cst_26 {dimension_numbers = #tpu.dot_dimension_numbers<[1], [0], [0], [1], [0, 0, 1, 1], [], []>} : vector<8x4xf32>, vector<4x256xf32>, vector<8x256xf32> -> vector<8x256xf32>
    %28 = arith.addf %22, %27 : vector<8x256xf32>
    %c1 = arith.constant 1 : index
    %c0_27 = arith.constant 0 : index
    %c0_28 = arith.constant 0 : index
    %29 = vector.load %arg7[%c1, %c0_27, %c0_28] : memref<9x8x4xf32, #tpu.memory_space<vmem>>, vector<1x8x4xf32>
    %30 = vector.shape_cast %29 : vector<1x8x4xf32> to vector<8x4xf32>
    %c0_29 = arith.constant 0 : index
    %c0_30 = arith.constant 0 : index
    %c1_31 = arith.constant 1 : index
    %31 = vector.load %arg1[%c0_29, %c0_30, %c1_31] : memref<1x4x290xf32, #tpu.memory_space<vmem>>, vector<1x4x256xf32>
    %32 = vector.shape_cast %31 : vector<1x4x256xf32> to vector<4x256xf32>
    %cst_32 = arith.constant dense<0.000000e+00> : vector<8x256xf32>
    %33 = tpu.matmul %30, %32, %cst_32 {dimension_numbers = #tpu.dot_dimension_numbers<[1], [0], [0], [1], [0, 0, 1, 1], [], []>} : vector<8x4xf32>, vector<4x256xf32>, vector<8x256xf32> -> vector<8x256xf32>
    %c4 = arith.constant 4 : index
    %c0_33 = arith.constant 0 : index
    %c0_34 = arith.constant 0 : index
    %34 = vector.load %arg7[%c4, %c0_33, %c0_34] : memref<9x8x4xf32, #tpu.memory_space<vmem>>, vector<1x8x4xf32>
    %35 = vector.shape_cast %34 : vector<1x8x4xf32> to vector<8x4xf32>
    %c0_35 = arith.constant 0 : index
    %c0_36 = arith.constant 0 : index
    %c17 = arith.constant 17 : index
    %36 = vector.load %arg1[%c0_35, %c0_36, %c17] : memref<1x4x290xf32, #tpu.memory_space<vmem>>, vector<1x4x256xf32>
    %37 = vector.shape_cast %36 : vector<1x4x256xf32> to vector<4x256xf32>
    %cst_37 = arith.constant dense<0.000000e+00> : vector<8x256xf32>
    %38 = tpu.matmul %35, %37, %cst_37 {dimension_numbers = #tpu.dot_dimension_numbers<[1], [0], [0], [1], [0, 0, 1, 1], [], []>} : vector<8x4xf32>, vector<4x256xf32>, vector<8x256xf32> -> vector<8x256xf32>
    %39 = arith.addf %33, %38 : vector<8x256xf32>
    %c7 = arith.constant 7 : index
    %c0_38 = arith.constant 0 : index
    %c0_39 = arith.constant 0 : index
    %40 = vector.load %arg7[%c7, %c0_38, %c0_39] : memref<9x8x4xf32, #tpu.memory_space<vmem>>, vector<1x8x4xf32>
    %41 = vector.shape_cast %40 : vector<1x8x4xf32> to vector<8x4xf32>
    %c0_40 = arith.constant 0 : index
    %c0_41 = arith.constant 0 : index
    %c33 = arith.constant 33 : index
    %42 = vector.load %arg1[%c0_40, %c0_41, %c33] : memref<1x4x290xf32, #tpu.memory_space<vmem>>, vector<1x4x256xf32>
    %43 = vector.shape_cast %42 : vector<1x4x256xf32> to vector<4x256xf32>
    %cst_42 = arith.constant dense<0.000000e+00> : vector<8x256xf32>
    %44 = tpu.matmul %41, %43, %cst_42 {dimension_numbers = #tpu.dot_dimension_numbers<[1], [0], [0], [1], [0, 0, 1, 1], [], []>} : vector<8x4xf32>, vector<4x256xf32>, vector<8x256xf32> -> vector<8x256xf32>
    %45 = arith.addf %39, %44 : vector<8x256xf32>
    %c2 = arith.constant 2 : index
    %c0_43 = arith.constant 0 : index
    %c0_44 = arith.constant 0 : index
    %46 = vector.load %arg7[%c2, %c0_43, %c0_44] : memref<9x8x4xf32, #tpu.memory_space<vmem>>, vector<1x8x4xf32>
    %47 = vector.shape_cast %46 : vector<1x8x4xf32> to vector<8x4xf32>
    %c0_45 = arith.constant 0 : index
    %c0_46 = arith.constant 0 : index
    %c2_47 = arith.constant 2 : index
    %48 = vector.load %arg1[%c0_45, %c0_46, %c2_47] : memref<1x4x290xf32, #tpu.memory_space<vmem>>, vector<1x4x256xf32>
    %49 = vector.shape_cast %48 : vector<1x4x256xf32> to vector<4x256xf32>
    %cst_48 = arith.constant dense<0.000000e+00> : vector<8x256xf32>
    %50 = tpu.matmul %47, %49, %cst_48 {dimension_numbers = #tpu.dot_dimension_numbers<[1], [0], [0], [1], [0, 0, 1, 1], [], []>} : vector<8x4xf32>, vector<4x256xf32>, vector<8x256xf32> -> vector<8x256xf32>
    %c5 = arith.constant 5 : index
    %c0_49 = arith.constant 0 : index
    %c0_50 = arith.constant 0 : index
    %51 = vector.load %arg7[%c5, %c0_49, %c0_50] : memref<9x8x4xf32, #tpu.memory_space<vmem>>, vector<1x8x4xf32>
    %52 = vector.shape_cast %51 : vector<1x8x4xf32> to vector<8x4xf32>
    %c0_51 = arith.constant 0 : index
    %c0_52 = arith.constant 0 : index
    %c18 = arith.constant 18 : index
    %53 = vector.load %arg1[%c0_51, %c0_52, %c18] : memref<1x4x290xf32, #tpu.memory_space<vmem>>, vector<1x4x256xf32>
    %54 = vector.shape_cast %53 : vector<1x4x256xf32> to vector<4x256xf32>
    %cst_53 = arith.constant dense<0.000000e+00> : vector<8x256xf32>
    %55 = tpu.matmul %52, %54, %cst_53 {dimension_numbers = #tpu.dot_dimension_numbers<[1], [0], [0], [1], [0, 0, 1, 1], [], []>} : vector<8x4xf32>, vector<4x256xf32>, vector<8x256xf32> -> vector<8x256xf32>
    %56 = arith.addf %50, %55 : vector<8x256xf32>
    %c8 = arith.constant 8 : index
    %c0_54 = arith.constant 0 : index
    %c0_55 = arith.constant 0 : index
    %57 = vector.load %arg7[%c8, %c0_54, %c0_55] : memref<9x8x4xf32, #tpu.memory_space<vmem>>, vector<1x8x4xf32>
    %58 = vector.shape_cast %57 : vector<1x8x4xf32> to vector<8x4xf32>
    %c0_56 = arith.constant 0 : index
    %c0_57 = arith.constant 0 : index
    %c34 = arith.constant 34 : index
    %59 = vector.load %arg1[%c0_56, %c0_57, %c34] : memref<1x4x290xf32, #tpu.memory_space<vmem>>, vector<1x4x256xf32>
    %60 = vector.shape_cast %59 : vector<1x4x256xf32> to vector<4x256xf32>
    %cst_58 = arith.constant dense<0.000000e+00> : vector<8x256xf32>
    %61 = tpu.matmul %58, %60, %cst_58 {dimension_numbers = #tpu.dot_dimension_numbers<[1], [0], [0], [1], [0, 0, 1, 1], [], []>} : vector<8x4xf32>, vector<4x256xf32>, vector<8x256xf32> -> vector<8x256xf32>
    %62 = arith.addf %56, %61 : vector<8x256xf32>
    %63 = vector.broadcast %0 : vector<1x256xf32> to vector<8x256xf32>
    %64 = arith.mulf %28, %63 : vector<8x256xf32>
    %65 = arith.addf %64, %45 : vector<8x256xf32>
    %66 = vector.broadcast %1 : vector<1x256xf32> to vector<8x256xf32>
    %67 = arith.mulf %62, %66 : vector<8x256xf32>
    %68 = arith.addf %65, %67 : vector<8x256xf32>
    %c0_59 = arith.constant 0 : index
    %c0_60 = arith.constant 0 : index
    %69 = vector.load %arg8[%c0_59, %c0_60] : memref<8x1xf32, #tpu.memory_space<vmem>>, vector<8x1xf32>
    %70 = vector.broadcast %69 : vector<8x1xf32> to vector<8x256xf32>
    %71 = arith.addf %68, %70 : vector<8x256xf32>
    %cst_61 = arith.constant -1.000000e+30 : f32
    %72 = vector.broadcast %cst_61 : f32 to vector<8x290xf32>
    %c0_62 = arith.constant 0 : index
    %c0_63 = arith.constant 0 : index
    %73 = vector.load %arg18[%c0_62, %c0_63] : memref<8x290xf32, #tpu.memory_space<vmem>>, vector<8x290xf32>
    tpu.vector_store %arg18[%c0_62, %c0_63], %72 {strides = array<i32>} : memref<8x290xf32, #tpu.memory_space<vmem>>, vector<8x290xf32>,
    %c0_64 = arith.constant 0 : index
    %c17_65 = arith.constant 17 : index
    %74 = vector.load %arg18[%c0_64, %c17_65] : memref<8x290xf32, #tpu.memory_space<vmem>>, vector<8x256xf32>
    tpu.vector_store %arg18[%c0_64, %c17_65], %71 {strides = array<i32>} : memref<8x290xf32, #tpu.memory_space<vmem>>, vector<8x256xf32>,
    %c0_66 = arith.constant 0 : index
    %c0_67 = arith.constant 0 : index
    %75 = vector.load %arg18[%c0_66, %c0_67] : memref<8x290xf32, #tpu.memory_space<vmem>>, vector<8x256xf32>
    %76 = vector.broadcast %7 : vector<1x256xf32> to vector<8x256xf32>
    %77 = arith.addf %75, %76 : vector<8x256xf32>
    %c0_68 = arith.constant 0 : index
    %c1_69 = arith.constant 1 : index
    %78 = vector.load %arg18[%c0_68, %c1_69] : memref<8x290xf32, #tpu.memory_space<vmem>>, vector<8x256xf32>
    %79 = arith.maximumf %77, %78 : vector<8x256xf32>
    %c0_70 = arith.constant 0 : index
    %c2_71 = arith.constant 2 : index
    %80 = vector.load %arg18[%c0_70, %c2_71] : memref<8x290xf32, #tpu.memory_space<vmem>>, vector<8x256xf32>
    %81 = vector.broadcast %11 : vector<1x256xf32> to vector<8x256xf32>
    %82 = arith.addf %80, %81 : vector<8x256xf32>
    %83 = arith.maximumf %79, %82 : vector<8x256xf32>
    %c0_72 = arith.constant 0 : index
    %c16_73 = arith.constant 16 : index
    %84 = vector.load %arg18[%c0_72, %c16_73] : memref<8x290xf32, #tpu.memory_space<vmem>>, vector<8x256xf32>
    %85 = vector.broadcast %7 : vector<1x256xf32> to vector<8x256xf32>
    %86 = arith.addf %84, %85 : vector<8x256xf32>
    %87 = arith.maximumf %83, %86 : vector<8x256xf32>
    %c0_74 = arith.constant 0 : index
    %c17_75 = arith.constant 17 : index
    %88 = vector.load %arg18[%c0_74, %c17_75] : memref<8x290xf32, #tpu.memory_space<vmem>>, vector<8x256xf32>
    %89 = arith.maximumf %87, %88 : vector<8x256xf32>
    %c0_76 = arith.constant 0 : index
    %c18_77 = arith.constant 18 : index
    %90 = vector.load %arg18[%c0_76, %c18_77] : memref<8x290xf32, #tpu.memory_space<vmem>>, vector<8x256xf32>
    %91 = vector.broadcast %11 : vector<1x256xf32> to vector<8x256xf32>
    %92 = arith.addf %90, %91 : vector<8x256xf32>
    %93 = arith.maximumf %89, %92 : vector<8x256xf32>
    %c0_78 = arith.constant 0 : index
    %c32_79 = arith.constant 32 : index
    %94 = vector.load %arg18[%c0_78, %c32_79] : memref<8x290xf32, #tpu.memory_space<vmem>>, vector<8x256xf32>
    %95 = vector.broadcast %7 : vector<1x256xf32> to vector<8x256xf32>
    %96 = arith.addf %94, %95 : vector<8x256xf32>
    %97 = arith.maximumf %93, %96 : vector<8x256xf32>
    %c0_80 = arith.constant 0 : index
    %c33_81 = arith.constant 33 : index
    %98 = vector.load %arg18[%c0_80, %c33_81] : memref<8x290xf32, #tpu.memory_space<vmem>>, vector<8x256xf32>
    %99 = arith.maximumf %97, %98 : vector<8x256xf32>
    %c0_82 = arith.constant 0 : index
    %c34_83 = arith.constant 34 : index
    %100 = vector.load %arg18[%c0_82, %c34_83] : memref<8x290xf32, #tpu.memory_space<vmem>>, vector<8x256xf32>
    %101 = vector.broadcast %11 : vector<1x256xf32> to vector<8x256xf32>
    %102 = arith.addf %100, %101 : vector<8x256xf32>
    %103 = arith.maximumf %99, %102 : vector<8x256xf32>
    %c0_84 = arith.constant 0 : index
    %c0_85 = arith.constant 0 : index
    %104 = vector.load %arg6[%c0_84, %c0_85] : memref<256x64xf32, #tpu.memory_space<vmem>>, vector<256x64xf32>
    %cst_86 = arith.constant dense<0.000000e+00> : vector<8x64xf32>
    %105 = tpu.matmul %103, %104, %cst_86 {dimension_numbers = #tpu.dot_dimension_numbers<[1], [0], [0], [1], [0, 0, 1, 1], [], []>} : vector<8x256xf32>, vector<256x64xf32>, vector<8x64xf32> -> vector<8x64xf32>
    %cst_87 = arith.constant 0.000000e+00 : f32
    %106 = vector.broadcast %cst_87 : f32 to vector<8x82xf32>
    %c0_88 = arith.constant 0 : index
    %c0_89 = arith.constant 0 : index
    %107 = vector.load %arg19[%c0_88, %c0_89] : memref<8x82xf32, #tpu.memory_space<vmem>>, vector<8x82xf32>
    tpu.vector_store %arg19[%c0_88, %c0_89], %106 {strides = array<i32>} : memref<8x82xf32, #tpu.memory_space<vmem>>, vector<8x82xf32>,
    %cst_90 = arith.constant 0.000000e+00 : f32
    %108 = vector.broadcast %cst_90 : f32 to vector<8x64xf32>
    %109 = arith.maximumf %105, %108 : vector<8x64xf32>
    %c0_91 = arith.constant 0 : index
    %c9 = arith.constant 9 : index
    %110 = vector.load %arg19[%c0_91, %c9] : memref<8x82xf32, #tpu.memory_space<vmem>>, vector<8x64xf32>
    tpu.vector_store %arg19[%c0_91, %c9], %109 {strides = array<i32>} : memref<8x82xf32, #tpu.memory_space<vmem>>, vector<8x64xf32>,
    %c0_92 = arith.constant 0 : index
    %c0_93 = arith.constant 0 : index
    %c0_94 = arith.constant 0 : index
    %111 = vector.load %arg9[%c0_92, %c0_93, %c0_94] : memref<9x8x8xf32, #tpu.memory_space<vmem>>, vector<1x8x8xf32>
    %112 = vector.shape_cast %111 : vector<1x8x8xf32> to vector<8x8xf32>
    %c0_95 = arith.constant 0 : index
    %c0_96 = arith.constant 0 : index
    %113 = vector.load %arg19[%c0_95, %c0_96] : memref<8x82xf32, #tpu.memory_space<vmem>>, vector<8x64xf32>
    %cst_97 = arith.constant dense<0.000000e+00> : vector<8x64xf32>
    %114 = tpu.matmul %112, %113, %cst_97 {dimension_numbers = #tpu.dot_dimension_numbers<[1], [0], [0], [1], [0, 0, 1, 1], [], []>} : vector<8x8xf32>, vector<8x64xf32>, vector<8x64xf32> -> vector<8x64xf32>
    %c3_98 = arith.constant 3 : index
    %c0_99 = arith.constant 0 : index
    %c0_100 = arith.constant 0 : index
    %115 = vector.load %arg9[%c3_98, %c0_99, %c0_100] : memref<9x8x8xf32, #tpu.memory_space<vmem>>, vector<1x8x8xf32>
    %116 = vector.shape_cast %115 : vector<1x8x8xf32> to vector<8x8xf32>
    %c0_101 = arith.constant 0 : index
    %c8_102 = arith.constant 8 : index
    %117 = vector.load %arg19[%c0_101, %c8_102] : memref<8x82xf32, #tpu.memory_space<vmem>>, vector<8x64xf32>
    %cst_103 = arith.constant dense<0.000000e+00> : vector<8x64xf32>
    %118 = tpu.matmul %116, %117, %cst_103 {dimension_numbers = #tpu.dot_dimension_numbers<[1], [0], [0], [1], [0, 0, 1, 1], [], []>} : vector<8x8xf32>, vector<8x64xf32>, vector<8x64xf32> -> vector<8x64xf32>
    %119 = arith.addf %114, %118 : vector<8x64xf32>
    %c6_104 = arith.constant 6 : index
    %c0_105 = arith.constant 0 : index
    %c0_106 = arith.constant 0 : index
    %120 = vector.load %arg9[%c6_104, %c0_105, %c0_106] : memref<9x8x8xf32, #tpu.memory_space<vmem>>, vector<1x8x8xf32>
    %121 = vector.shape_cast %120 : vector<1x8x8xf32> to vector<8x8xf32>
    %c0_107 = arith.constant 0 : index
    %c16_108 = arith.constant 16 : index
    %122 = vector.load %arg19[%c0_107, %c16_108] : memref<8x82xf32, #tpu.memory_space<vmem>>, vector<8x64xf32>
    %cst_109 = arith.constant dense<0.000000e+00> : vector<8x64xf32>
    %123 = tpu.matmul %121, %122, %cst_109 {dimension_numbers = #tpu.dot_dimension_numbers<[1], [0], [0], [1], [0, 0, 1, 1], [], []>} : vector<8x8xf32>, vector<8x64xf32>, vector<8x64xf32> -> vector<8x64xf32>
    %124 = arith.addf %119, %123 : vector<8x64xf32>
    %c1_110 = arith.constant 1 : index
    %c0_111 = arith.constant 0 : index
    %c0_112 = arith.constant 0 : index
    %125 = vector.load %arg9[%c1_110, %c0_111, %c0_112] : memref<9x8x8xf32, #tpu.memory_space<vmem>>, vector<1x8x8xf32>
    %126 = vector.shape_cast %125 : vector<1x8x8xf32> to vector<8x8xf32>
    %c0_113 = arith.constant 0 : index
    %c1_114 = arith.constant 1 : index
    %127 = vector.load %arg19[%c0_113, %c1_114] : memref<8x82xf32, #tpu.memory_space<vmem>>, vector<8x64xf32>
    %cst_115 = arith.constant dense<0.000000e+00> : vector<8x64xf32>
    %128 = tpu.matmul %126, %127, %cst_115 {dimension_numbers = #tpu.dot_dimension_numbers<[1], [0], [0], [1], [0, 0, 1, 1], [], []>} : vector<8x8xf32>, vector<8x64xf32>, vector<8x64xf32> -> vector<8x64xf32>
    %c4_116 = arith.constant 4 : index
    %c0_117 = arith.constant 0 : index
    %c0_118 = arith.constant 0 : index
    %129 = vector.load %arg9[%c4_116, %c0_117, %c0_118] : memref<9x8x8xf32, #tpu.memory_space<vmem>>, vector<1x8x8xf32>
    %130 = vector.shape_cast %129 : vector<1x8x8xf32> to vector<8x8xf32>
    %c0_119 = arith.constant 0 : index
    %c9_120 = arith.constant 9 : index
    %131 = vector.load %arg19[%c0_119, %c9_120] : memref<8x82xf32, #tpu.memory_space<vmem>>, vector<8x64xf32>
    %cst_121 = arith.constant dense<0.000000e+00> : vector<8x64xf32>
    %132 = tpu.matmul %130, %131, %cst_121 {dimension_numbers = #tpu.dot_dimension_numbers<[1], [0], [0], [1], [0, 0, 1, 1], [], []>} : vector<8x8xf32>, vector<8x64xf32>, vector<8x64xf32> -> vector<8x64xf32>
    %133 = arith.addf %128, %132 : vector<8x64xf32>
    %c7_122 = arith.constant 7 : index
    %c0_123 = arith.constant 0 : index
    %c0_124 = arith.constant 0 : index
    %134 = vector.load %arg9[%c7_122, %c0_123, %c0_124] : memref<9x8x8xf32, #tpu.memory_space<vmem>>, vector<1x8x8xf32>
    %135 = vector.shape_cast %134 : vector<1x8x8xf32> to vector<8x8xf32>
    %c0_125 = arith.constant 0 : index
    %c17_126 = arith.constant 17 : index
    %136 = vector.load %arg19[%c0_125, %c17_126] : memref<8x82xf32, #tpu.memory_space<vmem>>, vector<8x64xf32>
    %cst_127 = arith.constant dense<0.000000e+00> : vector<8x64xf32>
    %137 = tpu.matmul %135, %136, %cst_127 {dimension_numbers = #tpu.dot_dimension_numbers<[1], [0], [0], [1], [0, 0, 1, 1], [], []>} : vector<8x8xf32>, vector<8x64xf32>, vector<8x64xf32> -> vector<8x64xf32>
    %138 = arith.addf %133, %137 : vector<8x64xf32>
    %c2_128 = arith.constant 2 : index
    %c0_129 = arith.constant 0 : index
    %c0_130 = arith.constant 0 : index
    %139 = vector.load %arg9[%c2_128, %c0_129, %c0_130] : memref<9x8x8xf32, #tpu.memory_space<vmem>>, vector<1x8x8xf32>
    %140 = vector.shape_cast %139 : vector<1x8x8xf32> to vector<8x8xf32>
    %c0_131 = arith.constant 0 : index
    %c2_132 = arith.constant 2 : index
    %141 = vector.load %arg19[%c0_131, %c2_132] : memref<8x82xf32, #tpu.memory_space<vmem>>, vector<8x64xf32>
    %cst_133 = arith.constant dense<0.000000e+00> : vector<8x64xf32>
    %142 = tpu.matmul %140, %141, %cst_133 {dimension_numbers = #tpu.dot_dimension_numbers<[1], [0], [0], [1], [0, 0, 1, 1], [], []>} : vector<8x8xf32>, vector<8x64xf32>, vector<8x64xf32> -> vector<8x64xf32>
    %c5_134 = arith.constant 5 : index
    %c0_135 = arith.constant 0 : index
    %c0_136 = arith.constant 0 : index
    %143 = vector.load %arg9[%c5_134, %c0_135, %c0_136] : memref<9x8x8xf32, #tpu.memory_space<vmem>>, vector<1x8x8xf32>
    %144 = vector.shape_cast %143 : vector<1x8x8xf32> to vector<8x8xf32>
    %c0_137 = arith.constant 0 : index
    %c10 = arith.constant 10 : index
    %145 = vector.load %arg19[%c0_137, %c10] : memref<8x82xf32, #tpu.memory_space<vmem>>, vector<8x64xf32>
    %cst_138 = arith.constant dense<0.000000e+00> : vector<8x64xf32>
    %146 = tpu.matmul %144, %145, %cst_138 {dimension_numbers = #tpu.dot_dimension_numbers<[1], [0], [0], [1], [0, 0, 1, 1], [], []>} : vector<8x8xf32>, vector<8x64xf32>, vector<8x64xf32> -> vector<8x64xf32>
    %147 = arith.addf %142, %146 : vector<8x64xf32>
    %c8_139 = arith.constant 8 : index
    %c0_140 = arith.constant 0 : index
    %c0_141 = arith.constant 0 : index
    %148 = vector.load %arg9[%c8_139, %c0_140, %c0_141] : memref<9x8x8xf32, #tpu.memory_space<vmem>>, vector<1x8x8xf32>
    %149 = vector.shape_cast %148 : vector<1x8x8xf32> to vector<8x8xf32>
    %c0_142 = arith.constant 0 : index
    %c18_143 = arith.constant 18 : index
    %150 = vector.load %arg19[%c0_142, %c18_143] : memref<8x82xf32, #tpu.memory_space<vmem>>, vector<8x64xf32>
    %cst_144 = arith.constant dense<0.000000e+00> : vector<8x64xf32>
    %151 = tpu.matmul %149, %150, %cst_144 {dimension_numbers = #tpu.dot_dimension_numbers<[1], [0], [0], [1], [0, 0, 1, 1], [], []>} : vector<8x8xf32>, vector<8x64xf32>, vector<8x64xf32> -> vector<8x64xf32>
    %152 = arith.addf %147, %151 : vector<8x64xf32>
    %153 = vector.broadcast %2 : vector<1x64xf32> to vector<8x64xf32>
    %154 = arith.mulf %124, %153 : vector<8x64xf32>
    %155 = arith.addf %154, %138 : vector<8x64xf32>
    %156 = vector.broadcast %3 : vector<1x64xf32> to vector<8x64xf32>
    %157 = arith.mulf %152, %156 : vector<8x64xf32>
    %158 = arith.addf %155, %157 : vector<8x64xf32>
    %c0_145 = arith.constant 0 : index
    %c0_146 = arith.constant 0 : index
    %159 = vector.load %arg10[%c0_145, %c0_146] : memref<8x1xf32, #tpu.memory_space<vmem>>, vector<8x1xf32>
    %160 = vector.broadcast %159 : vector<8x1xf32> to vector<8x64xf32>
    %161 = arith.addf %158, %160 : vector<8x64xf32>
    %cst_147 = arith.constant 0.000000e+00 : f32
    %162 = vector.broadcast %cst_147 : f32 to vector<8x64xf32>
    %163 = arith.maximumf %161, %162 : vector<8x64xf32>
    %c0_148 = arith.constant 0 : index
    %c9_149 = arith.constant 9 : index
    %164 = vector.load %arg19[%c0_148, %c9_149] : memref<8x82xf32, #tpu.memory_space<vmem>>, vector<8x64xf32>
    tpu.vector_store %arg19[%c0_148, %c9_149], %163 {strides = array<i32>} : memref<8x82xf32, #tpu.memory_space<vmem>>, vector<8x64xf32>,
    %c0_150 = arith.constant 0 : index
    %c0_151 = arith.constant 0 : index
    %c0_152 = arith.constant 0 : index
    %165 = vector.load %arg11[%c0_150, %c0_151, %c0_152] : memref<9x8x8xf32, #tpu.memory_space<vmem>>, vector<1x8x8xf32>
    %166 = vector.shape_cast %165 : vector<1x8x8xf32> to vector<8x8xf32>
    %c0_153 = arith.constant 0 : index
    %c0_154 = arith.constant 0 : index
    %167 = vector.load %arg19[%c0_153, %c0_154] : memref<8x82xf32, #tpu.memory_space<vmem>>, vector<8x64xf32>
    %cst_155 = arith.constant dense<0.000000e+00> : vector<8x64xf32>
    %168 = tpu.matmul %166, %167, %cst_155 {dimension_numbers = #tpu.dot_dimension_numbers<[1], [0], [0], [1], [0, 0, 1, 1], [], []>} : vector<8x8xf32>, vector<8x64xf32>, vector<8x64xf32> -> vector<8x64xf32>
    %c3_156 = arith.constant 3 : index
    %c0_157 = arith.constant 0 : index
    %c0_158 = arith.constant 0 : index
    %169 = vector.load %arg11[%c3_156, %c0_157, %c0_158] : memref<9x8x8xf32, #tpu.memory_space<vmem>>, vector<1x8x8xf32>
    %170 = vector.shape_cast %169 : vector<1x8x8xf32> to vector<8x8xf32>
    %c0_159 = arith.constant 0 : index
    %c8_160 = arith.constant 8 : index
    %171 = vector.load %arg19[%c0_159, %c8_160] : memref<8x82xf32, #tpu.memory_space<vmem>>, vector<8x64xf32>
    %cst_161 = arith.constant dense<0.000000e+00> : vector<8x64xf32>
    %172 = tpu.matmul %170, %171, %cst_161 {dimension_numbers = #tpu.dot_dimension_numbers<[1], [0], [0], [1], [0, 0, 1, 1], [], []>} : vector<8x8xf32>, vector<8x64xf32>, vector<8x64xf32> -> vector<8x64xf32>
    %173 = arith.addf %168, %172 : vector<8x64xf32>
    %c6_162 = arith.constant 6 : index
    %c0_163 = arith.constant 0 : index
    %c0_164 = arith.constant 0 : index
    %174 = vector.load %arg11[%c6_162, %c0_163, %c0_164] : memref<9x8x8xf32, #tpu.memory_space<vmem>>, vector<1x8x8xf32>
    %175 = vector.shape_cast %174 : vector<1x8x8xf32> to vector<8x8xf32>
    %c0_165 = arith.constant 0 : index
    %c16_166 = arith.constant 16 : index
    %176 = vector.load %arg19[%c0_165, %c16_166] : memref<8x82xf32, #tpu.memory_space<vmem>>, vector<8x64xf32>
    %cst_167 = arith.constant dense<0.000000e+00> : vector<8x64xf32>
    %177 = tpu.matmul %175, %176, %cst_167 {dimension_numbers = #tpu.dot_dimension_numbers<[1], [0], [0], [1], [0, 0, 1, 1], [], []>} : vector<8x8xf32>, vector<8x64xf32>, vector<8x64xf32> -> vector<8x64xf32>
    %178 = arith.addf %173, %177 : vector<8x64xf32>
    %c1_168 = arith.constant 1 : index
    %c0_169 = arith.constant 0 : index
    %c0_170 = arith.constant 0 : index
    %179 = vector.load %arg11[%c1_168, %c0_169, %c0_170] : memref<9x8x8xf32, #tpu.memory_space<vmem>>, vector<1x8x8xf32>
    %180 = vector.shape_cast %179 : vector<1x8x8xf32> to vector<8x8xf32>
    %c0_171 = arith.constant 0 : index
    %c1_172 = arith.constant 1 : index
    %181 = vector.load %arg19[%c0_171, %c1_172] : memref<8x82xf32, #tpu.memory_space<vmem>>, vector<8x64xf32>
    %cst_173 = arith.constant dense<0.000000e+00> : vector<8x64xf32>
    %182 = tpu.matmul %180, %181, %cst_173 {dimension_numbers = #tpu.dot_dimension_numbers<[1], [0], [0], [1], [0, 0, 1, 1], [], []>} : vector<8x8xf32>, vector<8x64xf32>, vector<8x64xf32> -> vector<8x64xf32>
    %c4_174 = arith.constant 4 : index
    %c0_175 = arith.constant 0 : index
    %c0_176 = arith.constant 0 : index
    %183 = vector.load %arg11[%c4_174, %c0_175, %c0_176] : memref<9x8x8xf32, #tpu.memory_space<vmem>>, vector<1x8x8xf32>
    %184 = vector.shape_cast %183 : vector<1x8x8xf32> to vector<8x8xf32>
    %c0_177 = arith.constant 0 : index
    %c9_178 = arith.constant 9 : index
    %185 = vector.load %arg19[%c0_177, %c9_178] : memref<8x82xf32, #tpu.memory_space<vmem>>, vector<8x64xf32>
    %cst_179 = arith.constant dense<0.000000e+00> : vector<8x64xf32>
    %186 = tpu.matmul %184, %185, %cst_179 {dimension_numbers = #tpu.dot_dimension_numbers<[1], [0], [0], [1], [0, 0, 1, 1], [], []>} : vector<8x8xf32>, vector<8x64xf32>, vector<8x64xf32> -> vector<8x64xf32>
    %187 = arith.addf %182, %186 : vector<8x64xf32>
    %c7_180 = arith.constant 7 : index
    %c0_181 = arith.constant 0 : index
    %c0_182 = arith.constant 0 : index
    %188 = vector.load %arg11[%c7_180, %c0_181, %c0_182] : memref<9x8x8xf32, #tpu.memory_space<vmem>>, vector<1x8x8xf32>
    %189 = vector.shape_cast %188 : vector<1x8x8xf32> to vector<8x8xf32>
    %c0_183 = arith.constant 0 : index
    %c17_184 = arith.constant 17 : index
    %190 = vector.load %arg19[%c0_183, %c17_184] : memref<8x82xf32, #tpu.memory_space<vmem>>, vector<8x64xf32>
    %cst_185 = arith.constant dense<0.000000e+00> : vector<8x64xf32>
    %191 = tpu.matmul %189, %190, %cst_185 {dimension_numbers = #tpu.dot_dimension_numbers<[1], [0], [0], [1], [0, 0, 1, 1], [], []>} : vector<8x8xf32>, vector<8x64xf32>, vector<8x64xf32> -> vector<8x64xf32>
    %192 = arith.addf %187, %191 : vector<8x64xf32>
    %c2_186 = arith.constant 2 : index
    %c0_187 = arith.constant 0 : index
    %c0_188 = arith.constant 0 : index
    %193 = vector.load %arg11[%c2_186, %c0_187, %c0_188] : memref<9x8x8xf32, #tpu.memory_space<vmem>>, vector<1x8x8xf32>
    %194 = vector.shape_cast %193 : vector<1x8x8xf32> to vector<8x8xf32>
    %c0_189 = arith.constant 0 : index
    %c2_190 = arith.constant 2 : index
    %195 = vector.load %arg19[%c0_189, %c2_190] : memref<8x82xf32, #tpu.memory_space<vmem>>, vector<8x64xf32>
    %cst_191 = arith.constant dense<0.000000e+00> : vector<8x64xf32>
    %196 = tpu.matmul %194, %195, %cst_191 {dimension_numbers = #tpu.dot_dimension_numbers<[1], [0], [0], [1], [0, 0, 1, 1], [], []>} : vector<8x8xf32>, vector<8x64xf32>, vector<8x64xf32> -> vector<8x64xf32>
    %c5_192 = arith.constant 5 : index
    %c0_193 = arith.constant 0 : index
    %c0_194 = arith.constant 0 : index
    %197 = vector.load %arg11[%c5_192, %c0_193, %c0_194] : memref<9x8x8xf32, #tpu.memory_space<vmem>>, vector<1x8x8xf32>
    %198 = vector.shape_cast %197 : vector<1x8x8xf32> to vector<8x8xf32>
    %c0_195 = arith.constant 0 : index
    %c10_196 = arith.constant 10 : index
    %199 = vector.load %arg19[%c0_195, %c10_196] : memref<8x82xf32, #tpu.memory_space<vmem>>, vector<8x64xf32>
    %cst_197 = arith.constant dense<0.000000e+00> : vector<8x64xf32>
    %200 = tpu.matmul %198, %199, %cst_197 {dimension_numbers = #tpu.dot_dimension_numbers<[1], [0], [0], [1], [0, 0, 1, 1], [], []>} : vector<8x8xf32>, vector<8x64xf32>, vector<8x64xf32> -> vector<8x64xf32>
    %201 = arith.addf %196, %200 : vector<8x64xf32>
    %c8_198 = arith.constant 8 : index
    %c0_199 = arith.constant 0 : index
    %c0_200 = arith.constant 0 : index
    %202 = vector.load %arg11[%c8_198, %c0_199, %c0_200] : memref<9x8x8xf32, #tpu.memory_space<vmem>>, vector<1x8x8xf32>
    %203 = vector.shape_cast %202 : vector<1x8x8xf32> to vector<8x8xf32>
    %c0_201 = arith.constant 0 : index
    %c18_202 = arith.constant 18 : index
    %204 = vector.load %arg19[%c0_201, %c18_202] : memref<8x82xf32, #tpu.memory_space<vmem>>, vector<8x64xf32>
    %cst_203 = arith.constant dense<0.000000e+00> : vector<8x64xf32>
    %205 = tpu.matmul %203, %204, %cst_203 {dimension_numbers = #tpu.dot_dimension_numbers<[1], [0], [0], [1], [0, 0, 1, 1], [], []>} : vector<8x8xf32>, vector<8x64xf32>, vector<8x64xf32> -> vector<8x64xf32>
    %206 = arith.addf %201, %205 : vector<8x64xf32>
    %207 = vector.broadcast %2 : vector<1x64xf32> to vector<8x64xf32>
    %208 = arith.mulf %178, %207 : vector<8x64xf32>
    %209 = arith.addf %208, %192 : vector<8x64xf32>
    %210 = vector.broadcast %3 : vector<1x64xf32> to vector<8x64xf32>
    %211 = arith.mulf %206, %210 : vector<8x64xf32>
    %212 = arith.addf %209, %211 : vector<8x64xf32>
    %c0_204 = arith.constant 0 : index
    %c0_205 = arith.constant 0 : index
    %213 = vector.load %arg12[%c0_204, %c0_205] : memref<8x1xf32, #tpu.memory_space<vmem>>, vector<8x1xf32>
    %214 = vector.broadcast %213 : vector<8x1xf32> to vector<8x64xf32>
    %215 = arith.addf %212, %214 : vector<8x64xf32>
    %216 = arith.addf %215, %105 : vector<8x64xf32>
    %cst_206 = arith.constant 0.000000e+00 : f32
    %217 = vector.broadcast %cst_206 : f32 to vector<8x64xf32>
    %218 = arith.maximumf %216, %217 : vector<8x64xf32>
    %c0_207 = arith.constant 0 : index
    %c9_208 = arith.constant 9 : index
    %219 = vector.load %arg19[%c0_207, %c9_208] : memref<8x82xf32, #tpu.memory_space<vmem>>, vector<8x64xf32>
    tpu.vector_store %arg19[%c0_207, %c9_208], %218 {strides = array<i32>} : memref<8x82xf32, #tpu.memory_space<vmem>>, vector<8x64xf32>,
    %c0_209 = arith.constant 0 : index
    %c0_210 = arith.constant 0 : index
    %c0_211 = arith.constant 0 : index
    %220 = vector.load %arg13[%c0_209, %c0_210, %c0_211] : memref<9x8x8xf32, #tpu.memory_space<vmem>>, vector<1x8x8xf32>
    %221 = vector.shape_cast %220 : vector<1x8x8xf32> to vector<8x8xf32>
    %c0_212 = arith.constant 0 : index
    %c0_213 = arith.constant 0 : index
    %222 = vector.load %arg19[%c0_212, %c0_213] : memref<8x82xf32, #tpu.memory_space<vmem>>, vector<8x64xf32>
    %cst_214 = arith.constant dense<0.000000e+00> : vector<8x64xf32>
    %223 = tpu.matmul %221, %222, %cst_214 {dimension_numbers = #tpu.dot_dimension_numbers<[1], [0], [0], [1], [0, 0, 1, 1], [], []>} : vector<8x8xf32>, vector<8x64xf32>, vector<8x64xf32> -> vector<8x64xf32>
    %c3_215 = arith.constant 3 : index
    %c0_216 = arith.constant 0 : index
    %c0_217 = arith.constant 0 : index
    %224 = vector.load %arg13[%c3_215, %c0_216, %c0_217] : memref<9x8x8xf32, #tpu.memory_space<vmem>>, vector<1x8x8xf32>
    %225 = vector.shape_cast %224 : vector<1x8x8xf32> to vector<8x8xf32>
    %c0_218 = arith.constant 0 : index
    %c8_219 = arith.constant 8 : index
    %226 = vector.load %arg19[%c0_218, %c8_219] : memref<8x82xf32, #tpu.memory_space<vmem>>, vector<8x64xf32>
    %cst_220 = arith.constant dense<0.000000e+00> : vector<8x64xf32>
    %227 = tpu.matmul %225, %226, %cst_220 {dimension_numbers = #tpu.dot_dimension_numbers<[1], [0], [0], [1], [0, 0, 1, 1], [], []>} : vector<8x8xf32>, vector<8x64xf32>, vector<8x64xf32> -> vector<8x64xf32>
    %228 = arith.addf %223, %227 : vector<8x64xf32>
    %c6_221 = arith.constant 6 : index
    %c0_222 = arith.constant 0 : index
    %c0_223 = arith.constant 0 : index
    %229 = vector.load %arg13[%c6_221, %c0_222, %c0_223] : memref<9x8x8xf32, #tpu.memory_space<vmem>>, vector<1x8x8xf32>
    %230 = vector.shape_cast %229 : vector<1x8x8xf32> to vector<8x8xf32>
    %c0_224 = arith.constant 0 : index
    %c16_225 = arith.constant 16 : index
    %231 = vector.load %arg19[%c0_224, %c16_225] : memref<8x82xf32, #tpu.memory_space<vmem>>, vector<8x64xf32>
    %cst_226 = arith.constant dense<0.000000e+00> : vector<8x64xf32>
    %232 = tpu.matmul %230, %231, %cst_226 {dimension_numbers = #tpu.dot_dimension_numbers<[1], [0], [0], [1], [0, 0, 1, 1], [], []>} : vector<8x8xf32>, vector<8x64xf32>, vector<8x64xf32> -> vector<8x64xf32>
    %233 = arith.addf %228, %232 : vector<8x64xf32>
    %c1_227 = arith.constant 1 : index
    %c0_228 = arith.constant 0 : index
    %c0_229 = arith.constant 0 : index
    %234 = vector.load %arg13[%c1_227, %c0_228, %c0_229] : memref<9x8x8xf32, #tpu.memory_space<vmem>>, vector<1x8x8xf32>
    %235 = vector.shape_cast %234 : vector<1x8x8xf32> to vector<8x8xf32>
    %c0_230 = arith.constant 0 : index
    %c1_231 = arith.constant 1 : index
    %236 = vector.load %arg19[%c0_230, %c1_231] : memref<8x82xf32, #tpu.memory_space<vmem>>, vector<8x64xf32>
    %cst_232 = arith.constant dense<0.000000e+00> : vector<8x64xf32>
    %237 = tpu.matmul %235, %236, %cst_232 {dimension_numbers = #tpu.dot_dimension_numbers<[1], [0], [0], [1], [0, 0, 1, 1], [], []>} : vector<8x8xf32>, vector<8x64xf32>, vector<8x64xf32> -> vector<8x64xf32>
    %c4_233 = arith.constant 4 : index
    %c0_234 = arith.constant 0 : index
    %c0_235 = arith.constant 0 : index
    %238 = vector.load %arg13[%c4_233, %c0_234, %c0_235] : memref<9x8x8xf32, #tpu.memory_space<vmem>>, vector<1x8x8xf32>
    %239 = vector.shape_cast %238 : vector<1x8x8xf32> to vector<8x8xf32>
    %c0_236 = arith.constant 0 : index
    %c9_237 = arith.constant 9 : index
    %240 = vector.load %arg19[%c0_236, %c9_237] : memref<8x82xf32, #tpu.memory_space<vmem>>, vector<8x64xf32>
    %cst_238 = arith.constant dense<0.000000e+00> : vector<8x64xf32>
    %241 = tpu.matmul %239, %240, %cst_238 {dimension_numbers = #tpu.dot_dimension_numbers<[1], [0], [0], [1], [0, 0, 1, 1], [], []>} : vector<8x8xf32>, vector<8x64xf32>, vector<8x64xf32> -> vector<8x64xf32>
    %242 = arith.addf %237, %241 : vector<8x64xf32>
    %c7_239 = arith.constant 7 : index
    %c0_240 = arith.constant 0 : index
    %c0_241 = arith.constant 0 : index
    %243 = vector.load %arg13[%c7_239, %c0_240, %c0_241] : memref<9x8x8xf32, #tpu.memory_space<vmem>>, vector<1x8x8xf32>
    %244 = vector.shape_cast %243 : vector<1x8x8xf32> to vector<8x8xf32>
    %c0_242 = arith.constant 0 : index
    %c17_243 = arith.constant 17 : index
    %245 = vector.load %arg19[%c0_242, %c17_243] : memref<8x82xf32, #tpu.memory_space<vmem>>, vector<8x64xf32>
    %cst_244 = arith.constant dense<0.000000e+00> : vector<8x64xf32>
    %246 = tpu.matmul %244, %245, %cst_244 {dimension_numbers = #tpu.dot_dimension_numbers<[1], [0], [0], [1], [0, 0, 1, 1], [], []>} : vector<8x8xf32>, vector<8x64xf32>, vector<8x64xf32> -> vector<8x64xf32>
    %247 = arith.addf %242, %246 : vector<8x64xf32>
    %c2_245 = arith.constant 2 : index
    %c0_246 = arith.constant 0 : index
    %c0_247 = arith.constant 0 : index
    %248 = vector.load %arg13[%c2_245, %c0_246, %c0_247] : memref<9x8x8xf32, #tpu.memory_space<vmem>>, vector<1x8x8xf32>
    %249 = vector.shape_cast %248 : vector<1x8x8xf32> to vector<8x8xf32>
    %c0_248 = arith.constant 0 : index
    %c2_249 = arith.constant 2 : index
    %250 = vector.load %arg19[%c0_248, %c2_249] : memref<8x82xf32, #tpu.memory_space<vmem>>, vector<8x64xf32>
    %cst_250 = arith.constant dense<0.000000e+00> : vector<8x64xf32>
    %251 = tpu.matmul %249, %250, %cst_250 {dimension_numbers = #tpu.dot_dimension_numbers<[1], [0], [0], [1], [0, 0, 1, 1], [], []>} : vector<8x8xf32>, vector<8x64xf32>, vector<8x64xf32> -> vector<8x64xf32>
    %c5_251 = arith.constant 5 : index
    %c0_252 = arith.constant 0 : index
    %c0_253 = arith.constant 0 : index
    %252 = vector.load %arg13[%c5_251, %c0_252, %c0_253] : memref<9x8x8xf32, #tpu.memory_space<vmem>>, vector<1x8x8xf32>
    %253 = vector.shape_cast %252 : vector<1x8x8xf32> to vector<8x8xf32>
    %c0_254 = arith.constant 0 : index
    %c10_255 = arith.constant 10 : index
    %254 = vector.load %arg19[%c0_254, %c10_255] : memref<8x82xf32, #tpu.memory_space<vmem>>, vector<8x64xf32>
    %cst_256 = arith.constant dense<0.000000e+00> : vector<8x64xf32>
    %255 = tpu.matmul %253, %254, %cst_256 {dimension_numbers = #tpu.dot_dimension_numbers<[1], [0], [0], [1], [0, 0, 1, 1], [], []>} : vector<8x8xf32>, vector<8x64xf32>, vector<8x64xf32> -> vector<8x64xf32>
    %256 = arith.addf %251, %255 : vector<8x64xf32>
    %c8_257 = arith.constant 8 : index
    %c0_258 = arith.constant 0 : index
    %c0_259 = arith.constant 0 : index
    %257 = vector.load %arg13[%c8_257, %c0_258, %c0_259] : memref<9x8x8xf32, #tpu.memory_space<vmem>>, vector<1x8x8xf32>
    %258 = vector.shape_cast %257 : vector<1x8x8xf32> to vector<8x8xf32>
    %c0_260 = arith.constant 0 : index
    %c18_261 = arith.constant 18 : index
    %259 = vector.load %arg19[%c0_260, %c18_261] : memref<8x82xf32, #tpu.memory_space<vmem>>, vector<8x64xf32>
    %cst_262 = arith.constant dense<0.000000e+00> : vector<8x64xf32>
    %260 = tpu.matmul %258, %259, %cst_262 {dimension_numbers = #tpu.dot_dimension_numbers<[1], [0], [0], [1], [0, 0, 1, 1], [], []>} : vector<8x8xf32>, vector<8x64xf32>, vector<8x64xf32> -> vector<8x64xf32>
    %261 = arith.addf %256, %260 : vector<8x64xf32>
    %262 = vector.broadcast %2 : vector<1x64xf32> to vector<8x64xf32>
    %263 = arith.mulf %233, %262 : vector<8x64xf32>
    %264 = arith.addf %263, %247 : vector<8x64xf32>
    %265 = vector.broadcast %3 : vector<1x64xf32> to vector<8x64xf32>
    %266 = arith.mulf %261, %265 : vector<8x64xf32>
    %267 = arith.addf %264, %266 : vector<8x64xf32>
    %c0_263 = arith.constant 0 : index
    %c0_264 = arith.constant 0 : index
    %268 = vector.load %arg14[%c0_263, %c0_264] : memref<8x1xf32, #tpu.memory_space<vmem>>, vector<8x1xf32>
    %269 = vector.broadcast %268 : vector<8x1xf32> to vector<8x64xf32>
    %270 = arith.addf %267, %269 : vector<8x64xf32>
    %cst_265 = arith.constant 0.000000e+00 : f32
    %271 = vector.broadcast %cst_265 : f32 to vector<8x64xf32>
    %272 = arith.maximumf %270, %271 : vector<8x64xf32>
    %c0_266 = arith.constant 0 : index
    %c9_267 = arith.constant 9 : index
    %273 = vector.load %arg19[%c0_266, %c9_267] : memref<8x82xf32, #tpu.memory_space<vmem>>, vector<8x64xf32>
    tpu.vector_store %arg19[%c0_266, %c9_267], %272 {strides = array<i32>} : memref<8x82xf32, #tpu.memory_space<vmem>>, vector<8x64xf32>,
    %c0_268 = arith.constant 0 : index
    %c0_269 = arith.constant 0 : index
    %c0_270 = arith.constant 0 : index
    %274 = vector.load %arg15[%c0_268, %c0_269, %c0_270] : memref<9x8x8xf32, #tpu.memory_space<vmem>>, vector<1x8x8xf32>
    %275 = vector.shape_cast %274 : vector<1x8x8xf32> to vector<8x8xf32>
    %c0_271 = arith.constant 0 : index
    %c0_272 = arith.constant 0 : index
    %276 = vector.load %arg19[%c0_271, %c0_272] : memref<8x82xf32, #tpu.memory_space<vmem>>, vector<8x64xf32>
    %cst_273 = arith.constant dense<0.000000e+00> : vector<8x64xf32>
    %277 = tpu.matmul %275, %276, %cst_273 {dimension_numbers = #tpu.dot_dimension_numbers<[1], [0], [0], [1], [0, 0, 1, 1], [], []>} : vector<8x8xf32>, vector<8x64xf32>, vector<8x64xf32> -> vector<8x64xf32>
    %c3_274 = arith.constant 3 : index
    %c0_275 = arith.constant 0 : index
    %c0_276 = arith.constant 0 : index
    %278 = vector.load %arg15[%c3_274, %c0_275, %c0_276] : memref<9x8x8xf32, #tpu.memory_space<vmem>>, vector<1x8x8xf32>
    %279 = vector.shape_cast %278 : vector<1x8x8xf32> to vector<8x8xf32>
    %c0_277 = arith.constant 0 : index
    %c8_278 = arith.constant 8 : index
    %280 = vector.load %arg19[%c0_277, %c8_278] : memref<8x82xf32, #tpu.memory_space<vmem>>, vector<8x64xf32>
    %cst_279 = arith.constant dense<0.000000e+00> : vector<8x64xf32>
    %281 = tpu.matmul %279, %280, %cst_279 {dimension_numbers = #tpu.dot_dimension_numbers<[1], [0], [0], [1], [0, 0, 1, 1], [], []>} : vector<8x8xf32>, vector<8x64xf32>, vector<8x64xf32> -> vector<8x64xf32>
    %282 = arith.addf %277, %281 : vector<8x64xf32>
    %c6_280 = arith.constant 6 : index
    %c0_281 = arith.constant 0 : index
    %c0_282 = arith.constant 0 : index
    %283 = vector.load %arg15[%c6_280, %c0_281, %c0_282] : memref<9x8x8xf32, #tpu.memory_space<vmem>>, vector<1x8x8xf32>
    %284 = vector.shape_cast %283 : vector<1x8x8xf32> to vector<8x8xf32>
    %c0_283 = arith.constant 0 : index
    %c16_284 = arith.constant 16 : index
    %285 = vector.load %arg19[%c0_283, %c16_284] : memref<8x82xf32, #tpu.memory_space<vmem>>, vector<8x64xf32>
    %cst_285 = arith.constant dense<0.000000e+00> : vector<8x64xf32>
    %286 = tpu.matmul %284, %285, %cst_285 {dimension_numbers = #tpu.dot_dimension_numbers<[1], [0], [0], [1], [0, 0, 1, 1], [], []>} : vector<8x8xf32>, vector<8x64xf32>, vector<8x64xf32> -> vector<8x64xf32>
    %287 = arith.addf %282, %286 : vector<8x64xf32>
    %c1_286 = arith.constant 1 : index
    %c0_287 = arith.constant 0 : index
    %c0_288 = arith.constant 0 : index
    %288 = vector.load %arg15[%c1_286, %c0_287, %c0_288] : memref<9x8x8xf32, #tpu.memory_space<vmem>>, vector<1x8x8xf32>
    %289 = vector.shape_cast %288 : vector<1x8x8xf32> to vector<8x8xf32>
    %c0_289 = arith.constant 0 : index
    %c1_290 = arith.constant 1 : index
    %290 = vector.load %arg19[%c0_289, %c1_290] : memref<8x82xf32, #tpu.memory_space<vmem>>, vector<8x64xf32>
    %cst_291 = arith.constant dense<0.000000e+00> : vector<8x64xf32>
    %291 = tpu.matmul %289, %290, %cst_291 {dimension_numbers = #tpu.dot_dimension_numbers<[1], [0], [0], [1], [0, 0, 1, 1], [], []>} : vector<8x8xf32>, vector<8x64xf32>, vector<8x64xf32> -> vector<8x64xf32>
    %c4_292 = arith.constant 4 : index
    %c0_293 = arith.constant 0 : index
    %c0_294 = arith.constant 0 : index
    %292 = vector.load %arg15[%c4_292, %c0_293, %c0_294] : memref<9x8x8xf32, #tpu.memory_space<vmem>>, vector<1x8x8xf32>
    %293 = vector.shape_cast %292 : vector<1x8x8xf32> to vector<8x8xf32>
    %c0_295 = arith.constant 0 : index
    %c9_296 = arith.constant 9 : index
    %294 = vector.load %arg19[%c0_295, %c9_296] : memref<8x82xf32, #tpu.memory_space<vmem>>, vector<8x64xf32>
    %cst_297 = arith.constant dense<0.000000e+00> : vector<8x64xf32>
    %295 = tpu.matmul %293, %294, %cst_297 {dimension_numbers = #tpu.dot_dimension_numbers<[1], [0], [0], [1], [0, 0, 1, 1], [], []>} : vector<8x8xf32>, vector<8x64xf32>, vector<8x64xf32> -> vector<8x64xf32>
    %296 = arith.addf %291, %295 : vector<8x64xf32>
    %c7_298 = arith.constant 7 : index
    %c0_299 = arith.constant 0 : index
    %c0_300 = arith.constant 0 : index
    %297 = vector.load %arg15[%c7_298, %c0_299, %c0_300] : memref<9x8x8xf32, #tpu.memory_space<vmem>>, vector<1x8x8xf32>
    %298 = vector.shape_cast %297 : vector<1x8x8xf32> to vector<8x8xf32>
    %c0_301 = arith.constant 0 : index
    %c17_302 = arith.constant 17 : index
    %299 = vector.load %arg19[%c0_301, %c17_302] : memref<8x82xf32, #tpu.memory_space<vmem>>, vector<8x64xf32>
    %cst_303 = arith.constant dense<0.000000e+00> : vector<8x64xf32>
    %300 = tpu.matmul %298, %299, %cst_303 {dimension_numbers = #tpu.dot_dimension_numbers<[1], [0], [0], [1], [0, 0, 1, 1], [], []>} : vector<8x8xf32>, vector<8x64xf32>, vector<8x64xf32> -> vector<8x64xf32>
    %301 = arith.addf %296, %300 : vector<8x64xf32>
    %c2_304 = arith.constant 2 : index
    %c0_305 = arith.constant 0 : index
    %c0_306 = arith.constant 0 : index
    %302 = vector.load %arg15[%c2_304, %c0_305, %c0_306] : memref<9x8x8xf32, #tpu.memory_space<vmem>>, vector<1x8x8xf32>
    %303 = vector.shape_cast %302 : vector<1x8x8xf32> to vector<8x8xf32>
    %c0_307 = arith.constant 0 : index
    %c2_308 = arith.constant 2 : index
    %304 = vector.load %arg19[%c0_307, %c2_308] : memref<8x82xf32, #tpu.memory_space<vmem>>, vector<8x64xf32>
    %cst_309 = arith.constant dense<0.000000e+00> : vector<8x64xf32>
    %305 = tpu.matmul %303, %304, %cst_309 {dimension_numbers = #tpu.dot_dimension_numbers<[1], [0], [0], [1], [0, 0, 1, 1], [], []>} : vector<8x8xf32>, vector<8x64xf32>, vector<8x64xf32> -> vector<8x64xf32>
    %c5_310 = arith.constant 5 : index
    %c0_311 = arith.constant 0 : index
    %c0_312 = arith.constant 0 : index
    %306 = vector.load %arg15[%c5_310, %c0_311, %c0_312] : memref<9x8x8xf32, #tpu.memory_space<vmem>>, vector<1x8x8xf32>
    %307 = vector.shape_cast %306 : vector<1x8x8xf32> to vector<8x8xf32>
    %c0_313 = arith.constant 0 : index
    %c10_314 = arith.constant 10 : index
    %308 = vector.load %arg19[%c0_313, %c10_314] : memref<8x82xf32, #tpu.memory_space<vmem>>, vector<8x64xf32>
    %cst_315 = arith.constant dense<0.000000e+00> : vector<8x64xf32>
    %309 = tpu.matmul %307, %308, %cst_315 {dimension_numbers = #tpu.dot_dimension_numbers<[1], [0], [0], [1], [0, 0, 1, 1], [], []>} : vector<8x8xf32>, vector<8x64xf32>, vector<8x64xf32> -> vector<8x64xf32>
    %310 = arith.addf %305, %309 : vector<8x64xf32>
    %c8_316 = arith.constant 8 : index
    %c0_317 = arith.constant 0 : index
    %c0_318 = arith.constant 0 : index
    %311 = vector.load %arg15[%c8_316, %c0_317, %c0_318] : memref<9x8x8xf32, #tpu.memory_space<vmem>>, vector<1x8x8xf32>
    %312 = vector.shape_cast %311 : vector<1x8x8xf32> to vector<8x8xf32>
    %c0_319 = arith.constant 0 : index
    %c18_320 = arith.constant 18 : index
    %313 = vector.load %arg19[%c0_319, %c18_320] : memref<8x82xf32, #tpu.memory_space<vmem>>, vector<8x64xf32>
    %cst_321 = arith.constant dense<0.000000e+00> : vector<8x64xf32>
    %314 = tpu.matmul %312, %313, %cst_321 {dimension_numbers = #tpu.dot_dimension_numbers<[1], [0], [0], [1], [0, 0, 1, 1], [], []>} : vector<8x8xf32>, vector<8x64xf32>, vector<8x64xf32> -> vector<8x64xf32>
    %315 = arith.addf %310, %314 : vector<8x64xf32>
    %316 = vector.broadcast %2 : vector<1x64xf32> to vector<8x64xf32>
    %317 = arith.mulf %287, %316 : vector<8x64xf32>
    %318 = arith.addf %317, %301 : vector<8x64xf32>
    %319 = vector.broadcast %3 : vector<1x64xf32> to vector<8x64xf32>
    %320 = arith.mulf %315, %319 : vector<8x64xf32>
    %321 = arith.addf %318, %320 : vector<8x64xf32>
    %c0_322 = arith.constant 0 : index
    %c0_323 = arith.constant 0 : index
    %322 = vector.load %arg16[%c0_322, %c0_323] : memref<8x1xf32, #tpu.memory_space<vmem>>, vector<8x1xf32>
    %323 = vector.broadcast %322 : vector<8x1xf32> to vector<8x64xf32>
    %324 = arith.addf %321, %323 : vector<8x64xf32>
    %325 = arith.addf %324, %216 : vector<8x64xf32>
    %c0_324 = arith.constant 0 : index
    %c0_325 = arith.constant 0 : index
    %c0_326 = arith.constant 0 : index
    %326 = vector.load %arg17[%c0_324, %c0_325, %c0_326] : memref<1x8x64xf32, #tpu.memory_space<vmem>>, vector<1x8x64xf32>
    %327 = vector.shape_cast %326 : vector<1x8x64xf32> to vector<8x64xf32>
    %328 = vector.shape_cast %325 : vector<8x64xf32> to vector<1x8x64xf32>
    tpu.vector_store %arg17[%c0_324, %c0_325, %c0_326], %328 {strides = array<i32>} : memref<1x8x64xf32, #tpu.memory_space<vmem>>, vector<1x8x64xf32>,
    return
  }
  func.func @transform_0(%arg0: i32) -> (i32, i32, i32) {
    %c0_i32 = arith.constant 0 : i32
    %c0_i32_0 = arith.constant 0 : i32
    %c0_i32_1 = arith.constant 0 : i32
    return %arg0, %c0_i32, %c0_i32_0 : i32, i32, i32
  }
  func.func @transform_1(%arg0: i32) -> (i32, i32) {
    %c0_i32 = arith.constant 0 : i32
    %c0_i32_0 = arith.constant 0 : i32
    %c0_i32_1 = arith.constant 0 : i32
    return %c0_i32, %c0_i32_0 : i32, i32
  }
  func.func @transform_2(%arg0: i32) -> (i32, i32) {
    %c0_i32 = arith.constant 0 : i32
    %c0_i32_0 = arith.constant 0 : i32
    %c0_i32_1 = arith.constant 0 : i32
    return %c0_i32, %c0_i32_0 : i32, i32
  }
  func.func @transform_3(%arg0: i32) -> (i32, i32) {
    %c0_i32 = arith.constant 0 : i32
    %c0_i32_0 = arith.constant 0 : i32
    %c0_i32_1 = arith.constant 0 : i32
    return %c0_i32, %c0_i32_0 : i32, i32
  }
  func.func @transform_4(%arg0: i32) -> (i32, i32) {
    %c0_i32 = arith.constant 0 : i32
    %c0_i32_0 = arith.constant 0 : i32
    %c0_i32_1 = arith.constant 0 : i32
    return %c0_i32, %c0_i32_0 : i32, i32
  }
  func.func @transform_5(%arg0: i32) -> (i32, i32) {
    %c0_i32 = arith.constant 0 : i32
    %c0_i32_0 = arith.constant 0 : i32
    %c0_i32_1 = arith.constant 0 : i32
    return %c0_i32, %c0_i32_0 : i32, i32
  }
  func.func @transform_6(%arg0: i32) -> (i32, i32, i32) {
    %c0_i32 = arith.constant 0 : i32
    %c0_i32_0 = arith.constant 0 : i32
    %c0_i32_1 = arith.constant 0 : i32
    %c0_i32_2 = arith.constant 0 : i32
    return %c0_i32, %c0_i32_0, %c0_i32_1 : i32, i32, i32
  }
  func.func @transform_7(%arg0: i32) -> (i32, i32) {
    %c0_i32 = arith.constant 0 : i32
    %c0_i32_0 = arith.constant 0 : i32
    %c0_i32_1 = arith.constant 0 : i32
    return %c0_i32, %c0_i32_0 : i32, i32
  }
  func.func @transform_8(%arg0: i32) -> (i32, i32, i32) {
    %c0_i32 = arith.constant 0 : i32
    %c0_i32_0 = arith.constant 0 : i32
    %c0_i32_1 = arith.constant 0 : i32
    %c0_i32_2 = arith.constant 0 : i32
    return %c0_i32, %c0_i32_0, %c0_i32_1 : i32, i32, i32
  }
  func.func @transform_9(%arg0: i32) -> (i32, i32) {
    %c0_i32 = arith.constant 0 : i32
    %c0_i32_0 = arith.constant 0 : i32
    %c0_i32_1 = arith.constant 0 : i32
    return %c0_i32, %c0_i32_0 : i32, i32
  }
  func.func @transform_10(%arg0: i32) -> (i32, i32, i32) {
    %c0_i32 = arith.constant 0 : i32
    %c0_i32_0 = arith.constant 0 : i32
    %c0_i32_1 = arith.constant 0 : i32
    %c0_i32_2 = arith.constant 0 : i32
    return %c0_i32, %c0_i32_0, %c0_i32_1 : i32, i32, i32
  }
  func.func @transform_11(%arg0: i32) -> (i32, i32) {
    %c0_i32 = arith.constant 0 : i32
    %c0_i32_0 = arith.constant 0 : i32
    %c0_i32_1 = arith.constant 0 : i32
    return %c0_i32, %c0_i32_0 : i32, i32
  }
  func.func @transform_12(%arg0: i32) -> (i32, i32, i32) {
    %c0_i32 = arith.constant 0 : i32
    %c0_i32_0 = arith.constant 0 : i32
    %c0_i32_1 = arith.constant 0 : i32
    %c0_i32_2 = arith.constant 0 : i32
    return %c0_i32, %c0_i32_0, %c0_i32_1 : i32, i32, i32
  }
  func.func @transform_13(%arg0: i32) -> (i32, i32) {
    %c0_i32 = arith.constant 0 : i32
    %c0_i32_0 = arith.constant 0 : i32
    %c0_i32_1 = arith.constant 0 : i32
    return %c0_i32, %c0_i32_0 : i32, i32
  }
  func.func @transform_14(%arg0: i32) -> (i32, i32, i32) {
    %c0_i32 = arith.constant 0 : i32
    %c0_i32_0 = arith.constant 0 : i32
    %c0_i32_1 = arith.constant 0 : i32
    %c0_i32_2 = arith.constant 0 : i32
    return %c0_i32, %c0_i32_0, %c0_i32_1 : i32, i32, i32
  }
  func.func @transform_15(%arg0: i32) -> (i32, i32) {
    %c0_i32 = arith.constant 0 : i32
    %c0_i32_0 = arith.constant 0 : i32
    %c0_i32_1 = arith.constant 0 : i32
    return %c0_i32, %c0_i32_0 : i32, i32
  }
  func.func @transform_16(%arg0: i32) -> (i32, i32, i32) {
    %c0_i32 = arith.constant 0 : i32
    %c0_i32_0 = arith.constant 0 : i32
    %c0_i32_1 = arith.constant 0 : i32
    return %arg0, %c0_i32, %c0_i32_0 : i32, i32, i32
  }
}

</mosaic_0001>

<llo_original>
// kernel: impala_block_forward.1
$region0: #{impala_block_forward.1}
  #allocation0 [shape = 'u32[]', space=smem, size = 0x4, offset = 0x4, fixed_abs, tag = 'smem constant byte address 0x4 - core index']
  #allocation1 [shape = 'u32[72,128]{1,0:T(1,128)}', space=vmem, size = 0x9000, scoped, tag = 'internal scratch']
  #allocation2 [shape = 'f32[8,290]{1,0:T(8,128)}', space=vmem, size = 0x3000, scoped, tag = 'scratch operand']
  #allocation3 [shape = 'f32[8,82]{1,0:T(8,128)}', space=vmem, size = 0x1000, scoped, tag = 'scratch operand']
  %s0 = inlined_call_operand.vmem [shape: f32[2,4,290], index: 0, kind: input, shape index: {}]
  %s1 = inlined_call_operand.vmem [shape: f32[1,256], index: 1, kind: input, shape index: {}]
  %s2 = inlined_call_operand.vmem [shape: f32[1,256], index: 2, kind: input, shape index: {}]
  %s3 = inlined_call_operand.vmem [shape: f32[1,64], index: 3, kind: input, shape index: {}]
  %s4 = inlined_call_operand.vmem [shape: f32[1,64], index: 4, kind: input, shape index: {}]
  %s5 = inlined_call_operand.hbm [shape: f32[256,64], index: 5, kind: input, shape index: {}]
  %s6 = inlined_call_operand.vmem [shape: f32[9,8,4], index: 6, kind: input, shape index: {}]
  %s7 = inlined_call_operand.vmem [shape: f32[8,1], index: 7, kind: input, shape index: {}]
  %s8 = inlined_call_operand.vmem [shape: f32[9,8,8], index: 8, kind: input, shape index: {}]
  %s9 = inlined_call_operand.vmem [shape: f32[8,1], index: 9, kind: input, shape index: {}]
  %s10 = inlined_call_operand.vmem [shape: f32[9,8,8], index: 10, kind: input, shape index: {}]
  %s11 = inlined_call_operand.vmem [shape: f32[8,1], index: 11, kind: input, shape index: {}]
  %s12 = inlined_call_operand.vmem [shape: f32[9,8,8], index: 12, kind: input, shape index: {}]
  %s13 = inlined_call_operand.vmem [shape: f32[8,1], index: 13, kind: input, shape index: {}]
  %s14 = inlined_call_operand.hbm [shape: f32[9,8,8], index: 14, kind: input, shape index: {}]
  %s15 = inlined_call_operand.vmem [shape: f32[8,1], index: 15, kind: input, shape index: {}]
  %s16 = inlined_call_operand.vmem [shape: f32[2,8,64], index: 16, kind: output, shape index: {}]
  %s17 = sld [smem:[#allocation0]]
  $region105: #{impala_block_forward.1} parent=0
    _
  %s19 = ssub.s32 1, %s17
  %s20 = scalar_select 0, %s19, %s17
  $region1: #{impala_block_forward.1} parent=0
    #allocation4 [shape = 'u8[131072]{0}', space=vmem, size = 0x20000, scoped, tag = 'input window, operand 5, single buffered']
    #allocation5 [shape = 's32[2]{0}', space=sflag, size = 0x8, scoped, tag = 'scoped memory for impala_block_forward.1']
    #allocation6 [shape = 'u8[36864]{0}', space=vmem, size = 0x9000, scoped, tag = 'input window, operand 14, single buffered']
    #allocation7 [shape = 's32[1]{0}', space=sflag, size = 0x4, scoped, tag = 'scoped memory for impala_block_forward.1']
    %21 = vsyncpa [#allocation5], 0
    %22 = vsyncpa [#allocation7], 0
    loop: start=0, step=1, limit=4
    $region2: #{impala_block_forward.1} parent=1 // loop_pre_header
      _
    $region3: #{impala_block_forward.1} parent=1 // loop_header
      %s24 = sphi 0, %s28
      %p25 = scmp.ge.s32.totalorder %s24, 4
      %s34 = sphi 0, %s36
      %s37 = sphi 0, %s34
      %s38 = sphi 0, %s37
      %s54 = sphi 0, %s38
      %s58 = sphi 0, %s58
      %s60 = sphi 0, %s58
      %s61 = sphi 0, %s60
      %s75 = sphi 0, %s61
      %s79 = sphi 0, %s79
      %s81 = sphi 0, %s79
      %s82 = sphi 0, %s81
      %s96 = sphi 0, %s82
      %s100 = sphi 0, %s100
      %s102 = sphi 0, %s100
      %s103 = sphi 0, %s102
      %s117 = sphi 0, %s103
      %s121 = sphi 0, %s121
      %s123 = sphi 0, %s121
      %s124 = sphi 0, %s123
      %s138 = sphi 0, %s124
      %s142 = sphi 0, %s142
      %s144 = sphi 0, %s142
      %s145 = sphi 0, %s144
      %s159 = sphi 0, %s145
      %s163 = sphi 0, %s163
      %s165 = sphi 0, %s163
      %s166 = sphi 0, %s165
      %s180 = sphi 0, %s166
      %s184 = sphi 0, %s184
      %s186 = sphi 0, %s184
      %s187 = sphi 0, %s186
      %s201 = sphi 0, %s187
      %s205 = sphi 0, %s205
      %s207 = sphi 0, %s205
      %s208 = sphi 0, %s207
      %s222 = sphi 0, %s208
      %s226 = sphi 0, %s226
      %s228 = sphi 0, %s226
      %s229 = sphi 0, %s228
      %s243 = sphi 0, %s229
      %s247 = sphi 0, %s247
      %s249 = sphi 0, %s247
      %s250 = sphi 0, %s249
      %s264 = sphi 0, %s250
      %s268 = sphi 0, %s268
      %s270 = sphi 0, %s268
      %s271 = sphi 0, %s270
      %s285 = sphi 0, %s271
      %s289 = sphi 0, %s289
      %s291 = sphi 0, %s289
      %s292 = sphi 0, %s291
      %s306 = sphi 0, %s292
      %s310 = sphi 0, %s310
      %s312 = sphi 0, %s310
      %s313 = sphi 0, %s312
      %s327 = sphi 0, %s313
      %s331 = sphi 0, %s331
      %s333 = sphi 0, %s331
      %s334 = sphi 0, %s333
      %s348 = sphi 0, %s334
      %s352 = sphi 0, %s352
      %s354 = sphi 0, %s352
      %s355 = sphi 0, %s354
      %s369 = sphi 0, %s355
      %s375 = sphi 0, %s377
      %s378 = sphi 0, %s375
      %s379 = sphi 0, %s378
      %s395 = sphi 0, %s379
    $region4: #{impala_block_forward.1} parent=1 // loop_header_branch
      %27 = sbr.rel (%p25) target = $region8
    $region5: #{impala_block_forward.1} parent=1 // loop_body
      %s29 = ssub.s32 %s24, 1
      %s30 = ssub.s32 %s24, 2
      %s31 = sadd.s32 %s24, 1
      %s32 = ssub.s32 %s24, %s31
      %p33 = scmp.eq.s32.totalorder %s32, 0
      %s35 = sadd.s32 %s34, 1
      %s36 = scalar_select %p33, %s34, %s35
      %p39 = pneg %p33
      %p40 = scmp.eq.s32.totalorder %s24, 1
      %p41 = por %p39, %p40
      %p42 = scmp.ne.s32.totalorder %s34, %s37
      %p43 = scmp.eq.s32.totalorder %s24, 0
      %p44 = por %p42, %p43
      %p45 = scmp.ne.s32.totalorder %s34, %s37
      %p46 = scmp.eq.s32.totalorder %s29, 1
      %p47 = por %p45, %p46
      %p48 = scmp.ne.s32.totalorder %s37, %s38
      %p49 = scmp.eq.s32.totalorder %s29, 0
      %p50 = por %p48, %p49
      %p51 = scmp.ne.s32.totalorder %s37, %s38
      %p52 = scmp.eq.s32.totalorder %s30, 1
      %p53 = por %p51, %p52
      %p55 = scmp.ne.s32.totalorder %s38, %s54
      %p56 = scmp.eq.s32.totalorder %s30, 0
      %p57 = por %p55, %p56
      %s59 = sadd.s32 %s58, 1
      %p62 = scmp.eq.s32.totalorder %s24, 1
      %p63 = scmp.ne.s32.totalorder %s58, %s60
      %p64 = scmp.eq.s32.totalorder %s24, 0
      %p65 = por %p63, %p64
      %p66 = scmp.ne.s32.totalorder %s58, %s60
      %p67 = scmp.eq.s32.totalorder %s29, 1
      %p68 = por %p66, %p67
      %p69 = scmp.ne.s32.totalorder %s60, %s61
      %p70 = scmp.eq.s32.totalorder %s29, 0
      %p71 = por %p69, %p70
      %p72 = scmp.ne.s32.totalorder %s60, %s61
      %p73 = scmp.eq.s32.totalorder %s30, 1
      %p74 = por %p72, %p73
      %p76 = scmp.ne.s32.totalorder %s61, %s75
      %p77 = scmp.eq.s32.totalorder %s30, 0
      %p78 = por %p76, %p77
      %s80 = sadd.s32 %s79, 1
      %p83 = scmp.eq.s32.totalorder %s24, 1
      %p84 = scmp.ne.s32.totalorder %s79, %s81
      %p85 = scmp.eq.s32.totalorder %s24, 0
      %p86 = por %p84, %p85
      %p87 = scmp.ne.s32.totalorder %s79, %s81
      %p88 = scmp.eq.s32.totalorder %s29, 1
      %p89 = por %p87, %p88
      %p90 = scmp.ne.s32.totalorder %s81, %s82
      %p91 = scmp.eq.s32.totalorder %s29, 0
      %p92 = por %p90, %p91
      %p93 = scmp.ne.s32.totalorder %s81, %s82
      %p94 = scmp.eq.s32.totalorder %s30, 1
      %p95 = por %p93, %p94
      %p97 = scmp.ne.s32.totalorder %s82, %s96
      %p98 = scmp.eq.s32.totalorder %s30, 0
      %p99 = por %p97, %p98
      %s101 = sadd.s32 %s100, 1
      %p104 = scmp.eq.s32.totalorder %s24, 1
      %p105 = scmp.ne.s32.totalorder %s100, %s102
      %p106 = scmp.eq.s32.totalorder %s24, 0
      %p107 = por %p105, %p106
      %p108 = scmp.ne.s32.totalorder %s100, %s102
      %p109 = scmp.eq.s32.totalorder %s29, 1
      %p110 = por %p108, %p109
      %p111 = scmp.ne.s32.totalorder %s102, %s103
      %p112 = scmp.eq.s32.totalorder %s29, 0
      %p113 = por %p111, %p112
      %p114 = scmp.ne.s32.totalorder %s102, %s103
      %p115 = scmp.eq.s32.totalorder %s30, 1
      %p116 = por %p114, %p115
      %p118 = scmp.ne.s32.totalorder %s103, %s117
      %p119 = scmp.eq.s32.totalorder %s30, 0
      %p120 = por %p118, %p119
      %s122 = sadd.s32 %s121, 1
      %p125 = scmp.eq.s32.totalorder %s24, 1
      %p126 = scmp.ne.s32.totalorder %s121, %s123
      %p127 = scmp.eq.s32.totalorder %s24, 0
      %p128 = por %p126, %p127
      %p129 = scmp.ne.s32.totalorder %s121, %s123
      %p130 = scmp.eq.s32.totalorder %s29, 1
      %p131 = por %p129, %p130
      %p132 = scmp.ne.s32.totalorder %s123, %s124
      %p133 = scmp.eq.s32.totalorder %s29, 0
      %p134 = por %p132, %p133
      %p135 = scmp.ne.s32.totalorder %s123, %s124
      %p136 = scmp.eq.s32.totalorder %s30, 1
      %p137 = por %p135, %p136
      %p139 = scmp.ne.s32.totalorder %s124, %s138
      %p140 = scmp.eq.s32.totalorder %s30, 0
      %p141 = por %p139, %p140
      %s143 = sadd.s32 %s142, 1
      %p146 = scmp.eq.s32.totalorder %s24, 1
      %p147 = scmp.ne.s32.totalorder %s142, %s144
      %p148 = scmp.eq.s32.totalorder %s24, 0
      %p149 = por %p147, %p148
      %p150 = scmp.ne.s32.totalorder %s142, %s144
      %p151 = scmp.eq.s32.totalorder %s29, 1
      %p152 = por %p150, %p151
      %p153 = scmp.ne.s32.totalorder %s144, %s145
      %p154 = scmp.eq.s32.totalorder %s29, 0
      %p155 = por %p153, %p154
      %p156 = scmp.ne.s32.totalorder %s144, %s145
      %p157 = scmp.eq.s32.totalorder %s30, 1
      %p158 = por %p156, %p157
      %p160 = scmp.ne.s32.totalorder %s145, %s159
      %p161 = scmp.eq.s32.totalorder %s30, 0
      %p162 = por %p160, %p161
      %s164 = sadd.s32 %s163, 1
      %p167 = scmp.eq.s32.totalorder %s24, 1
      %p168 = scmp.ne.s32.totalorder %s163, %s165
      %p169 = scmp.eq.s32.totalorder %s24, 0
      %p170 = por %p168, %p169
      %p171 = scmp.ne.s32.totalorder %s163, %s165
      %p172 = scmp.eq.s32.totalorder %s29, 1
      %p173 = por %p171, %p172
      %p174 = scmp.ne.s32.totalorder %s165, %s166
      %p175 = scmp.eq.s32.totalorder %s29, 0
      %p176 = por %p174, %p175
      %p177 = scmp.ne.s32.totalorder %s165, %s166
      %p178 = scmp.eq.s32.totalorder %s30, 1
      %p179 = por %p177, %p178
      %p181 = scmp.ne.s32.totalorder %s166, %s180
      %p182 = scmp.eq.s32.totalorder %s30, 0
      %p183 = por %p181, %p182
      %s185 = sadd.s32 %s184, 1
      %p188 = scmp.eq.s32.totalorder %s24, 1
      %p189 = scmp.ne.s32.totalorder %s184, %s186
      %p190 = scmp.eq.s32.totalorder %s24, 0
      %p191 = por %p189, %p190
      %p192 = scmp.ne.s32.totalorder %s184, %s186
      %p193 = scmp.eq.s32.totalorder %s29, 1
      %p194 = por %p192, %p193
      %p195 = scmp.ne.s32.totalorder %s186, %s187
      %p196 = scmp.eq.s32.totalorder %s29, 0
      %p197 = por %p195, %p196
      %p198 = scmp.ne.s32.totalorder %s186, %s187
      %p199 = scmp.eq.s32.totalorder %s30, 1
      %p200 = por %p198, %p199
      %p202 = scmp.ne.s32.totalorder %s187, %s201
      %p203 = scmp.eq.s32.totalorder %s30, 0
      %p204 = por %p202, %p203
      %s206 = sadd.s32 %s205, 1
      %p209 = scmp.eq.s32.totalorder %s24, 1
      %p210 = scmp.ne.s32.totalorder %s205, %s207
      %p211 = scmp.eq.s32.totalorder %s24, 0
      %p212 = por %p210, %p211
      %p213 = scmp.ne.s32.totalorder %s205, %s207
      %p214 = scmp.eq.s32.totalorder %s29, 1
      %p215 = por %p213, %p214
      %p216 = scmp.ne.s32.totalorder %s207, %s208
      %p217 = scmp.eq.s32.totalorder %s29, 0
      %p218 = por %p216, %p217
      %p219 = scmp.ne.s32.totalorder %s207, %s208
      %p220 = scmp.eq.s32.totalorder %s30, 1
      %p221 = por %p219, %p220
      %p223 = scmp.ne.s32.totalorder %s208, %s222
      %p224 = scmp.eq.s32.totalorder %s30, 0
      %p225 = por %p223, %p224
      %s227 = sadd.s32 %s226, 1
      %p230 = scmp.eq.s32.totalorder %s24, 1
      %p231 = scmp.ne.s32.totalorder %s226, %s228
      %p232 = scmp.eq.s32.totalorder %s24, 0
      %p233 = por %p231, %p232
      %p234 = scmp.ne.s32.totalorder %s226, %s228
      %p235 = scmp.eq.s32.totalorder %s29, 1
      %p236 = por %p234, %p235
      %p237 = scmp.ne.s32.totalorder %s228, %s229
      %p238 = scmp.eq.s32.totalorder %s29, 0
      %p239 = por %p237, %p238
      %p240 = scmp.ne.s32.totalorder %s228, %s229
      %p241 = scmp.eq.s32.totalorder %s30, 1
      %p242 = por %p240, %p241
      %p244 = scmp.ne.s32.totalorder %s229, %s243
      %p245 = scmp.eq.s32.totalorder %s30, 0
      %p246 = por %p244, %p245
      %s248 = sadd.s32 %s247, 1
      %p251 = scmp.eq.s32.totalorder %s24, 1
      %p252 = scmp.ne.s32.totalorder %s247, %s249
      %p253 = scmp.eq.s32.totalorder %s24, 0
      %p254 = por %p252, %p253
      %p255 = scmp.ne.s32.totalorder %s247, %s249
      %p256 = scmp.eq.s32.totalorder %s29, 1
      %p257 = por %p255, %p256
      %p258 = scmp.ne.s32.totalorder %s249, %s250
      %p259 = scmp.eq.s32.totalorder %s29, 0
      %p260 = por %p258, %p259
      %p261 = scmp.ne.s32.totalorder %s249, %s250
      %p262 = scmp.eq.s32.totalorder %s30, 1
      %p263 = por %p261, %p262
      %p265 = scmp.ne.s32.totalorder %s250, %s264
      %p266 = scmp.eq.s32.totalorder %s30, 0
      %p267 = por %p265, %p266
      %s269 = sadd.s32 %s268, 1
      %p272 = scmp.eq.s32.totalorder %s24, 1
      %p273 = scmp.ne.s32.totalorder %s268, %s270
      %p274 = scmp.eq.s32.totalorder %s24, 0
      %p275 = por %p273, %p274
      %p276 = scmp.ne.s32.totalorder %s268, %s270
      %p277 = scmp.eq.s32.totalorder %s29, 1
      %p278 = por %p276, %p277
      %p279 = scmp.ne.s32.totalorder %s270, %s271
      %p280 = scmp.eq.s32.totalorder %s29, 0
      %p281 = por %p279, %p280
      %p282 = scmp.ne.s32.totalorder %s270, %s271
      %p283 = scmp.eq.s32.totalorder %s30, 1
      %p284 = por %p282, %p283
      %p286 = scmp.ne.s32.totalorder %s271, %s285
      %p287 = scmp.eq.s32.totalorder %s30, 0
      %p288 = por %p286, %p287
      %s290 = sadd.s32 %s289, 1
      %p293 = scmp.eq.s32.totalorder %s24, 1
      %p294 = scmp.ne.s32.totalorder %s289, %s291
      %p295 = scmp.eq.s32.totalorder %s24, 0
      %p296 = por %p294, %p295
      %p297 = scmp.ne.s32.totalorder %s289, %s291
      %p298 = scmp.eq.s32.totalorder %s29, 1
      %p299 = por %p297, %p298
      %p300 = scmp.ne.s32.totalorder %s291, %s292
      %p301 = scmp.eq.s32.totalorder %s29, 0
      %p302 = por %p300, %p301
      %p303 = scmp.ne.s32.totalorder %s291, %s292
      %p304 = scmp.eq.s32.totalorder %s30, 1
      %p305 = por %p303, %p304
      %p307 = scmp.ne.s32.totalorder %s292, %s306
      %p308 = scmp.eq.s32.totalorder %s30, 0
      %p309 = por %p307, %p308
      %s311 = sadd.s32 %s310, 1
      %p314 = scmp.eq.s32.totalorder %s24, 1
      %p315 = scmp.ne.s32.totalorder %s310, %s312
      %p316 = scmp.eq.s32.totalorder %s24, 0
      %p317 = por %p315, %p316
      %p318 = scmp.ne.s32.totalorder %s310, %s312
      %p319 = scmp.eq.s32.totalorder %s29, 1
      %p320 = por %p318, %p319
      %p321 = scmp.ne.s32.totalorder %s312, %s313
      %p322 = scmp.eq.s32.totalorder %s29, 0
      %p323 = por %p321, %p322
      %p324 = scmp.ne.s32.totalorder %s312, %s313
      %p325 = scmp.eq.s32.totalorder %s30, 1
      %p326 = por %p324, %p325
      %p328 = scmp.ne.s32.totalorder %s313, %s327
      %p329 = scmp.eq.s32.totalorder %s30, 0
      %p330 = por %p328, %p329
      %s332 = sadd.s32 %s331, 1
      %p335 = scmp.eq.s32.totalorder %s24, 1
      %p336 = scmp.ne.s32.totalorder %s331, %s333
      %p337 = scmp.eq.s32.totalorder %s24, 0
      %p338 = por %p336, %p337
      %p339 = scmp.ne.s32.totalorder %s331, %s333
      %p340 = scmp.eq.s32.totalorder %s29, 1
      %p341 = por %p339, %p340
      %p342 = scmp.ne.s32.totalorder %s333, %s334
      %p343 = scmp.eq.s32.totalorder %s29, 0
      %p344 = por %p342, %p343
      %p345 = scmp.ne.s32.totalorder %s333, %s334
      %p346 = scmp.eq.s32.totalorder %s30, 1
      %p347 = por %p345, %p346
      %p349 = scmp.ne.s32.totalorder %s334, %s348
      %p350 = scmp.eq.s32.totalorder %s30, 0
      %p351 = por %p349, %p350
      %s353 = sadd.s32 %s352, 1
      %p356 = scmp.eq.s32.totalorder %s24, 1
      %p357 = scmp.ne.s32.totalorder %s352, %s354
      %p358 = scmp.eq.s32.totalorder %s24, 0
      %p359 = por %p357, %p358
      %p360 = scmp.ne.s32.totalorder %s352, %s354
      %p361 = scmp.eq.s32.totalorder %s29, 1
      %p362 = por %p360, %p361
      %p363 = scmp.ne.s32.totalorder %s354, %s355
      %p364 = scmp.eq.s32.totalorder %s29, 0
      %p365 = por %p363, %p364
      %p366 = scmp.ne.s32.totalorder %s354, %s355
      %p367 = scmp.eq.s32.totalorder %s30, 1
      %p368 = por %p366, %p367
      %p370 = scmp.ne.s32.totalorder %s355, %s369
      %p371 = scmp.eq.s32.totalorder %s30, 0
      %p372 = por %p370, %p371
      %s373 = ssub.s32 %s24, %s31
      %p374 = scmp.eq.s32.totalorder %s373, 0
      %s376 = sadd.s32 %s375, 1
      %s377 = scalar_select %p374, %s375, %s376
      %p380 = pneg %p374
      %p381 = scmp.eq.s32.totalorder %s24, 1
      %p382 = por %p380, %p381
      %p383 = scmp.ne.s32.totalorder %s375, %s378
      %p384 = scmp.eq.s32.totalorder %s24, 0
      %p385 = por %p383, %p384
      %p386 = scmp.ne.s32.totalorder %s375, %s378
      %p387 = scmp.eq.s32.totalorder %s29, 1
      %p388 = por %p386, %p387
      %p389 = scmp.ne.s32.totalorder %s378, %s379
      %p390 = scmp.eq.s32.totalorder %s29, 0
      %p391 = por %p389, %p390
      %p392 = scmp.ne.s32.totalorder %s378, %s379
      %p393 = scmp.eq.s32.totalorder %s30, 1
      %p394 = por %p392, %p393
      %p396 = scmp.ne.s32.totalorder %s379, %s395
      %p397 = scmp.eq.s32.totalorder %s30, 0
      %p398 = por %p396, %p397
      %p399 = scmp.le.s32.totalorder 1, %s24
      %p400 = scmp.lt.s32.totalorder %s24, 3
      %p401 = pnand %p399, %p400
      %p402 = pneg %p401
      // Predicated region
      $region9: #{impala_block_forward.1} parent=5 // pred_check
        _
      $region10: #{impala_block_forward.1} parent=5 // pred_check_branch
        %404 = sbr.rel (%p401) target = $region12
      $region11: #{impala_block_forward.1} parent=5 // pred_region
        %s405 = ssub.s32 %s24, 1
        // Predicated region
        $region13: #{impala_block_forward.1} parent=11 // pred_check
          %p406 = pneg %p71
        $region14: #{impala_block_forward.1} parent=11 // pred_check_branch
          %408 = sbr.rel (%p406) target = $region16
        $region15: #{impala_block_forward.1} parent=11 // pred_region
          _
        $region16: #{impala_block_forward.1} parent=11 // pred_fallthru
          _
        // Predicated region
        $region17: #{impala_block_forward.1} parent=11 // pred_check
          %p409 = pneg %p92
        $region18: #{impala_block_forward.1} parent=11 // pred_check_branch
          %411 = sbr.rel (%p409) target = $region20
        $region19: #{impala_block_forward.1} parent=11 // pred_region
          _
        $region20: #{impala_block_forward.1} parent=11 // pred_fallthru
          _
        // Predicated region
        $region21: #{impala_block_forward.1} parent=11 // pred_check
          %p412 = pneg %p113
        $region22: #{impala_block_forward.1} parent=11 // pred_check_branch
          %414 = sbr.rel (%p412) target = $region24
        $region23: #{impala_block_forward.1} parent=11 // pred_region
          _
        $region24: #{impala_block_forward.1} parent=11 // pred_fallthru
          _
        // Predicated region
        $region25: #{impala_block_forward.1} parent=11 // pred_check
          %p415 = pneg %p134
        $region26: #{impala_block_forward.1} parent=11 // pred_check_branch
          %417 = sbr.rel (%p415) target = $region28
        $region27: #{impala_block_forward.1} parent=11 // pred_region
          _
        $region28: #{impala_block_forward.1} parent=11 // pred_fallthru
          _
        // Predicated region
        $region29: #{impala_block_forward.1} parent=11 // pred_check
          %p418 = pneg %p155
        $region30: #{impala_block_forward.1} parent=11 // pred_check_branch
          %420 = sbr.rel (%p418) target = $region32
        $region31: #{impala_block_forward.1} parent=11 // pred_region
          %422 = vsyncadd [#allocation5], 0
          %s423 = sshll.u32 %s5, 4
          %s424 = int_to_ptr.hbm [resolvable:$true] %s423
          %s425 = sshll.u32 [#allocation4], 4
          %s426 = int_to_ptr.vmem [resolvable:$true] %s425
          %431 = dma.hbm_to_vmem [thread:$0]  %s424, 4096, %s426, [#allocation5], 128, 128, 8
        $region32: #{impala_block_forward.1} parent=11 // pred_fallthru
          _
        // Predicated region
        $region33: #{impala_block_forward.1} parent=11 // pred_check
          %p432 = pneg %p176
        $region34: #{impala_block_forward.1} parent=11 // pred_check_branch
          %434 = sbr.rel (%p432) target = $region36
        $region35: #{impala_block_forward.1} parent=11 // pred_region
          _
        $region36: #{impala_block_forward.1} parent=11 // pred_fallthru
          _
        // Predicated region
        $region37: #{impala_block_forward.1} parent=11 // pred_check
          %p435 = pneg %p197
        $region38: #{impala_block_forward.1} parent=11 // pred_check_branch
          %437 = sbr.rel (%p435) target = $region40
        $region39: #{impala_block_forward.1} parent=11 // pred_region
          _
        $region40: #{impala_block_forward.1} parent=11 // pred_fallthru
          _
        // Predicated region
        $region41: #{impala_block_forward.1} parent=11 // pred_check
          %p438 = pneg %p218
        $region42: #{impala_block_forward.1} parent=11 // pred_check_branch
          %440 = sbr.rel (%p438) target = $region44
        $region43: #{impala_block_forward.1} parent=11 // pred_region
          _
        $region44: #{impala_block_forward.1} parent=11 // pred_fallthru
          _
        // Predicated region
        $region45: #{impala_block_forward.1} parent=11 // pred_check
          %p441 = pneg %p239
        $region46: #{impala_block_forward.1} parent=11 // pred_check_branch
          %443 = sbr.rel (%p441) target = $region48
        $region47: #{impala_block_forward.1} parent=11 // pred_region
          _
        $region48: #{impala_block_forward.1} parent=11 // pred_fallthru
          _
        // Predicated region
        $region49: #{impala_block_forward.1} parent=11 // pred_check
          %p444 = pneg %p260
        $region50: #{impala_block_forward.1} parent=11 // pred_check_branch
          %446 = sbr.rel (%p444) target = $region52
        $region51: #{impala_block_forward.1} parent=11 // pred_region
          _
        $region52: #{impala_block_forward.1} parent=11 // pred_fallthru
          _
        // Predicated region
        $region53: #{impala_block_forward.1} parent=11 // pred_check
          %p447 = pneg %p281
        $region54: #{impala_block_forward.1} parent=11 // pred_check_branch
          %449 = sbr.rel (%p447) target = $region56
        $region55: #{impala_block_forward.1} parent=11 // pred_region
          _
        $region56: #{impala_block_forward.1} parent=11 // pred_fallthru
          _
        // Predicated region
        $region57: #{impala_block_forward.1} parent=11 // pred_check
          %p450 = pneg %p302
        $region58: #{impala_block_forward.1} parent=11 // pred_check_branch
          %452 = sbr.rel (%p450) target = $region60
        $region59: #{impala_block_forward.1} parent=11 // pred_region
          _
        $region60: #{impala_block_forward.1} parent=11 // pred_fallthru
          _
        // Predicated region
        $region61: #{impala_block_forward.1} parent=11 // pred_check
          %p453 = pneg %p323
        $region62: #{impala_block_forward.1} parent=11 // pred_check_branch
          %455 = sbr.rel (%p453) target = $region64
        $region63: #{impala_block_forward.1} parent=11 // pred_region
          _
        $region64: #{impala_block_forward.1} parent=11 // pred_fallthru
          _
        // Predicated region
        $region65: #{impala_block_forward.1} parent=11 // pred_check
          %p456 = pneg %p344
        $region66: #{impala_block_forward.1} parent=11 // pred_check_branch
          %458 = sbr.rel (%p456) target = $region68
        $region67: #{impala_block_forward.1} parent=11 // pred_region
          %460 = vsyncadd [#allocation7], 0
          %s461 = sshll.u32 %s14, 4
          %s462 = int_to_ptr.hbm [resolvable:$true] %s461
          %s463 = sshll.u32 [#allocation6], 4
          %s464 = int_to_ptr.vmem [resolvable:$true] %s463
          %469 = dma.hbm_to_vmem [thread:$0]  %s462, 1152, %s464, [#allocation7], 128, 128, 8
        $region68: #{impala_block_forward.1} parent=11 // pred_fallthru
          _
        // Predicated region
        $region69: #{impala_block_forward.1} parent=11 // pred_check
          %p470 = pneg %p365
        $region70: #{impala_block_forward.1} parent=11 // pred_check_branch
          %472 = sbr.rel (%p470) target = $region72
        $region71: #{impala_block_forward.1} parent=11 // pred_region
          _
        $region72: #{impala_block_forward.1} parent=11 // pred_fallthru
          _
      $region12: #{impala_block_forward.1} parent=5 // pred_fallthru
        _
      %p473 = scmp.lt.s32.totalorder %s24, 2
      // Predicated region
      $region73: #{impala_block_forward.1} parent=5 // pred_check
        %p474 = pneg %p473
      $region74: #{impala_block_forward.1} parent=5 // pred_check_branch
        %476 = sbr.rel (%p474) target = $region76
      $region75: #{impala_block_forward.1} parent=5 // pred_region
        // Predicated region
        $region77: #{impala_block_forward.1} parent=75 // pred_check
          %p477 = pneg %p44
        $region78: #{impala_block_forward.1} parent=75 // pred_check_branch
          %479 = sbr.rel (%p477) target = $region80
        $region79: #{impala_block_forward.1} parent=75 // pred_region
          %p480 = scmp.lt.s32.totalorder %s24, 1
          %s481 = scalar_select %p480, %s24, 1
          %s482 = smul.addr %s481, 3
          %s483 = smul.addr %s482, 4
          %s484 = scalar_lea.vmem %s0, %s483
        $region80: #{impala_block_forward.1} parent=75 // pred_fallthru
          _
      $region76: #{impala_block_forward.1} parent=5 // pred_fallthru
        _
      %p485 = scmp.le.s32.totalorder 1, %s24
      %p486 = scmp.lt.s32.totalorder %s24, 3
      %p487 = pnand %p485, %p486
      %p488 = pneg %p487
      // Predicated region
      $region81: #{impala_block_forward.1} parent=5 // pred_check
        _
      $region82: #{impala_block_forward.1} parent=5 // pred_check_branch
        %490 = sbr.rel (%p487) target = $region84
      $region83: #{impala_block_forward.1} parent=5 // pred_region
        %s491 = ssub.s32 %s24, 1
        // Predicated region
        $region85: #{impala_block_forward.1} parent=83 // pred_check
          %p492 = pneg %p155
        $region86: #{impala_block_forward.1} parent=83 // pred_check_branch
          %494 = sbr.rel (%p492) target = $region88
        $region87: #{impala_block_forward.1} parent=83 // pred_region
          %496 = dma.done [#allocation5], 4096
        $region88: #{impala_block_forward.1} parent=83 // pred_fallthru
          _
        // Predicated region
        $region89: #{impala_block_forward.1} parent=83 // pred_check
          %p497 = pneg %p344
        $region90: #{impala_block_forward.1} parent=83 // pred_check_branch
          %499 = sbr.rel (%p497) target = $region92
        $region91: #{impala_block_forward.1} parent=83 // pred_region
          %501 = dma.done [#allocation7], 1152
        $region92: #{impala_block_forward.1} parent=83 // pred_fallthru
          _
        %p502 = scmp.lt.s32.totalorder %s29, 1
        %s503 = scalar_select %p502, %s29, 1
        %s504 = smul.addr %s503, 3
        %s505 = smul.addr %s504, 4
        %s506 = scalar_lea.vmem %s0, %s505
        %p507 = pneg %p50
        %p508 = pneg %p47
        %p509 = pneg %p71
        %p510 = pneg %p68
        %p511 = pneg %p92
        %p512 = pneg %p89
        %p513 = pneg %p113
        %p514 = pneg %p110
        %p515 = pneg %p134
        %p516 = pneg %p131
        %p517 = pneg %p155
        %p518 = pneg %p152
        %p519 = pneg %p176
        %p520 = pneg %p173
        %p521 = pneg %p197
        %p522 = pneg %p194
        %p523 = pneg %p218
        %p524 = pneg %p215
        %p525 = pneg %p239
        %p526 = pneg %p236
        %p527 = pneg %p260
        %p528 = pneg %p257
        %p529 = pneg %p281
        %p530 = pneg %p278
        %p531 = pneg %p302
        %p532 = pneg %p299
        %p533 = pneg %p323
        %p534 = pneg %p320
        %p535 = pneg %p344
        %p536 = pneg %p341
        %p537 = pneg %p365
        %p538 = pneg %p362
        %p539 = pneg %p391
        %p540 = pneg %p388
        %p541 = scmp.lt.s32.totalorder %s29, 1
        %s542 = scalar_select %p541, %s29, 1
        %s543 = smul.addr %s542, 8
        %s544 = scalar_lea.vmem %s16, %s543
        %p545 = scmp.lt.s32.totalorder %s29, 1
        %s546 = scalar_select %p545, %s29, 1
        %s547 = smul.addr %s546, 3
        %s548 = smul.addr %s547, 4
        %s549 = scalar_lea.vmem %s0, %s548
        %p550 = scmp.lt.s32.totalorder %s29, 1
        %s551 = scalar_select %p550, %s29, 1
        %s552 = smul.addr %s551, 8
        %s553 = scalar_lea.vmem %s16, %s552
        %v554 = vld [vmem:[%s1] sm:$0x3]
        %v555 = vld [vmem:[%s2] sm:$0x3]
        %v556 = vld [vmem:[%s3] sm:$0x1]
        %v557 = vld [vmem:[%s4] sm:$0x1]
        %v558 = vsub.f32 %v554, 1.0
        %v559 = vmul.f32 %v558, 1e+30
        %v560 = vsub.f32 %v555, 1.0
        %v561 = vmul.f32 %v560, 1e+30
        %v562 = vld [vmem:[%s6] sm:$0xff]
        %v563 = vld [vmem:[%s549] sm:$0xff]
        %s564 = scalar_lea.vmem %s6, 24
        %v565 = vld [vmem:[%s564] sm:$0xff]
        %v566 = vld [vmem:[%s549 + $0x8] sm:$0xf]
        %569 = vst [vmem:[#allocation1] ss:$2 sm:$0xff] %v563
        %s570 = scalar_lea.vmem [#allocation1], 16
        %571 = vst [vmem:[%s570] ss:$2 sm:$0xff] %v566
        %v572 = vld.sshfl [vmem:[#allocation1] sm:$0xff pattern:$0x75316420]
        %v573 = vld.sshfl [vmem:[#allocation1 + $0x8] sm:$0xff pattern:$0x75316420]
        %v574 = vld.sshfl [vmem:[#allocation1 + $0x10] sm:$0xff pattern:$0x75316420]
        %575 = vrot.lane.b32.xlu0 %v572, 112
        %v576 = vpop.permute.xlu0 %575
        %577 = vrot.lane.b32.xlu0 %v573, 112
        %v578 = vpop.permute.xlu0 %577
        %579 = vrot.lane.b32.xlu0 %v574, 112
        %v580 = vpop.permute.xlu0 %579
        %vm581 = vcmask 916480
        %v582 = vsel %vm581, %v576, %v578
        %v583 = vsel %vm581, %v578, %v580
        %vm584 = vcmask 31744
        %v586 = vsel %vm584, %v565, 0
        %vm588 = vcmask 1043456
        %v589 = vsel %vm588, %v582, 0
        %v591 = vsel %vm588, %v583, 0
        %593 = vmatpush.msra.mxu0 0.0
        %594 = vmatpush.msra.mxu0 0.0
        %595 = vmatpush.msra.mxu0 0.0
        %596 = vmatpush.msra.mxu0 0.0
        %597 = vmatpush.msra.mxu0 0.0
        %598 = vmatpush.msra.mxu0 0.0
        %599 = vmatpush.msra.mxu0 0.0
        %600 = vmatpush.msra.mxu0 0.0
        %601 = vmatpush.msra.mxu0 0.0
        %602 = vmatpush.msra.mxu0 0.0
        %603 = vmatpush.msra.mxu0 0.0
        %604 = vmatpush.msra.mxu0 0.0
        %605 = vmatpush.msra.mxu0 0.0
        %606 = vmatpush.msra.mxu0 0.0
        %607 = vmatpush.msra.mxu0 0.0
        %608 = vmatpush.msra.mxu0 %v589
        %609 = vmatmul.f32.gmra.mxu0 %v586
        %v610 = vpop.f32.mrf.mxu0
        %v611 = vadd.f32 0.0, %v610
        %612 = vdwg.mxu0
        %613 = vmatpush.msra.mxu0 0.0
        %614 = vmatpush.msra.mxu0 0.0
        %615 = vmatpush.msra.mxu0 0.0
        %616 = vmatpush.msra.mxu0 0.0
        %617 = vmatpush.msra.mxu0 0.0
        %618 = vmatpush.msra.mxu0 0.0
        %619 = vmatpush.msra.mxu0 0.0
        %620 = vmatpush.msra.mxu0 0.0
        %621 = vmatpush.msra.mxu0 0.0
        %622 = vmatpush.msra.mxu0 0.0
        %623 = vmatpush.msra.mxu0 0.0
        %624 = vmatpush.msra.mxu0 0.0
        %625 = vmatpush.msra.mxu0 0.0
        %626 = vmatpush.msra.mxu0 0.0
        %627 = vmatpush.msra.mxu0 0.0
        %628 = vmatpush.msra.mxu0 %v591
        %629 = vmatmul.f32.gmra.mxu0 %v586
        %v630 = vpop.f32.mrf.mxu0
        %v631 = vadd.f32 0.0, %v630
        %632 = vdwg.mxu0
        %633 = vst [vmem:[#allocation1] ss:$2 sm:$0xff] %v563
        %v634 = vld.sshfl [vmem:[#allocation1] sm:$0xff pattern:$0x75316420]
        %v635 = vld.sshfl [vmem:[#allocation1 + $0x8] sm:$0xff pattern:$0x75316420]
        %v637 = vsel %vm584, %v562, 0
        %v639 = vsel %vm588, %v634, 0
        %v641 = vsel %vm588, %v635, 0
        %643 = vmatpush.msra.mxu0 0.0
        %644 = vmatpush.msra.mxu0 0.0
        %645 = vmatpush.msra.mxu0 0.0
        %646 = vmatpush.msra.mxu0 0.0
        %647 = vmatpush.msra.mxu0 0.0
        %648 = vmatpush.msra.mxu0 0.0
        %649 = vmatpush.msra.mxu0 0.0
        %650 = vmatpush.msra.mxu0 0.0
        %651 = vmatpush.msra.mxu0 0.0
        %652 = vmatpush.msra.mxu0 0.0
        %653 = vmatpush.msra.mxu0 0.0
        %654 = vmatpush.msra.mxu0 0.0
        %655 = vmatpush.msra.mxu0 0.0
        %656 = vmatpush.msra.mxu0 0.0
        %657 = vmatpush.msra.mxu0 0.0
        %658 = vmatpush.msra.mxu0 %v639
        %659 = vmatmul.f32.gmra.mxu0 %v637
        %v660 = vpop.f32.mrf.mxu0
        %v661 = vadd.f32 %v611, %v660
        %662 = vdwg.mxu0
        %663 = vmatpush.msra.mxu0 0.0
        %664 = vmatpush.msra.mxu0 0.0
        %665 = vmatpush.msra.mxu0 0.0
        %666 = vmatpush.msra.mxu0 0.0
        %667 = vmatpush.msra.mxu0 0.0
        %668 = vmatpush.msra.mxu0 0.0
        %669 = vmatpush.msra.mxu0 0.0
        %670 = vmatpush.msra.mxu0 0.0
        %671 = vmatpush.msra.mxu0 0.0
        %672 = vmatpush.msra.mxu0 0.0
        %673 = vmatpush.msra.mxu0 0.0
        %674 = vmatpush.msra.mxu0 0.0
        %675 = vmatpush.msra.mxu0 0.0
        %676 = vmatpush.msra.mxu0 0.0
        %677 = vmatpush.msra.mxu0 0.0
        %678 = vmatpush.msra.mxu0 %v641
        %679 = vmatmul.f32.gmra.mxu0 %v637
        %v680 = vpop.f32.mrf.mxu0
        %v681 = vadd.f32 %v631, %v680
        %682 = vdwg.mxu0
        %s683 = scalar_lea.vmem %s6, 48
        %v684 = vld [vmem:[%s683] sm:$0xff]
        %v685 = vld [vmem:[%s549] sm:$0xff]
        %v686 = vld [vmem:[%s549 + $0x8] sm:$0xf]
        %689 = vst [vmem:[#allocation1] ss:$2 sm:$0xff] %v685
        %s690 = scalar_lea.vmem [#allocation1], 16
        %691 = vst [vmem:[%s690] ss:$2 sm:$0xff] %v686
        %v692 = vld.sshfl [vmem:[#allocation1] sm:$0xff pattern:$0x75316420]
        %v693 = vld.sshfl [vmem:[#allocation1 + $0x8] sm:$0xff pattern:$0x75316420]
        %v694 = vld.sshfl [vmem:[#allocation1 + $0x10] sm:$0xff pattern:$0x75316420]
        %695 = vrot.lane.b32.xlu0 %v692, 96
        %v696 = vpop.permute.xlu0 %695
        %697 = vrot.lane.b32.xlu0 %v693, 96
        %v698 = vpop.permute.xlu0 %697
        %699 = vrot.lane.b32.xlu0 %v694, 96
        %v700 = vpop.permute.xlu0 %699
        %vm701 = vcmask 785408
        %v702 = vsel %vm701, %v696, %v698
        %v703 = vsel %vm701, %v698, %v700
        %v705 = vsel %vm584, %v684, 0
        %v707 = vsel %vm588, %v702, 0
        %v709 = vsel %vm588, %v703, 0
        %711 = vmatpush.msra.mxu0 0.0
        %712 = vmatpush.msra.mxu0 0.0
        %713 = vmatpush.msra.mxu0 0.0
        %714 = vmatpush.msra.mxu0 0.0
        %715 = vmatpush.msra.mxu0 0.0
        %716 = vmatpush.msra.mxu0 0.0
        %717 = vmatpush.msra.mxu0 0.0
        %718 = vmatpush.msra.mxu0 0.0
        %719 = vmatpush.msra.mxu0 0.0
        %720 = vmatpush.msra.mxu0 0.0
        %721 = vmatpush.msra.mxu0 0.0
        %722 = vmatpush.msra.mxu0 0.0
        %723 = vmatpush.msra.mxu0 0.0
        %724 = vmatpush.msra.mxu0 0.0
        %725 = vmatpush.msra.mxu0 0.0
        %726 = vmatpush.msra.mxu0 %v707
        %727 = vmatmul.f32.gmra.mxu0 %v705
        %v728 = vpop.f32.mrf.mxu0
        %v729 = vadd.f32 0.0, %v728
        %730 = vdwg.mxu0
        %731 = vmatpush.msra.mxu0 0.0
        %732 = vmatpush.msra.mxu0 0.0
        %733 = vmatpush.msra.mxu0 0.0
        %734 = vmatpush.msra.mxu0 0.0
        %735 = vmatpush.msra.mxu0 0.0
        %736 = vmatpush.msra.mxu0 0.0
        %737 = vmatpush.msra.mxu0 0.0
        %738 = vmatpush.msra.mxu0 0.0
        %739 = vmatpush.msra.mxu0 0.0
        %740 = vmatpush.msra.mxu0 0.0
        %741 = vmatpush.msra.mxu0 0.0
        %742 = vmatpush.msra.mxu0 0.0
        %743 = vmatpush.msra.mxu0 0.0
        %744 = vmatpush.msra.mxu0 0.0
        %745 = vmatpush.msra.mxu0 0.0
        %746 = vmatpush.msra.mxu0 %v709
        %747 = vmatmul.f32.gmra.mxu0 %v705
        %v748 = vpop.f32.mrf.mxu0
        %v749 = vadd.f32 0.0, %v748
        %750 = vdwg.mxu0
        %v751 = vadd.f32 %v661, %v729
        %v752 = vadd.f32 %v681, %v749
        %s753 = scalar_lea.vmem %s6, 8
        %v754 = vld [vmem:[%s753] sm:$0xff]
        %v755 = vld [vmem:[%s549] sm:$0xff]
        %v756 = vld [vmem:[%s549 + $0x8] sm:$0xf]
        %s757 = scalar_lea.vmem %s6, 32
        %v758 = vld [vmem:[%s757] sm:$0xff]
        %761 = vst [vmem:[#allocation1] ss:$2 sm:$0xff] %v755
        %s762 = scalar_lea.vmem [#allocation1], 16
        %763 = vst [vmem:[%s762] ss:$2 sm:$0xff] %v756
        %v764 = vld.sshfl [vmem:[#allocation1] sm:$0xff pattern:$0x75316420]
        %v765 = vld.sshfl [vmem:[#allocation1 + $0x8] sm:$0xff pattern:$0x75316420]
        %v766 = vld.sshfl [vmem:[#allocation1 + $0x10] sm:$0xff pattern:$0x75316420]
        %767 = vrot.lane.b32.xlu0 %v764, 111
        %v768 = vpop.permute.xlu0 %767
        %769 = vrot.lane.b32.xlu0 %v765, 111
        %v770 = vpop.permute.xlu0 %769
        %771 = vrot.lane.b32.xlu0 %v766, 111
        %v772 = vpop.permute.xlu0 %771
        %vm773 = vcmask 908288
        %v774 = vsel %vm773, %v768, %v770
        %v775 = vsel %vm773, %v770, %v772
        %v777 = vsel %vm584, %v758, 0
        %v779 = vsel %vm588, %v774, 0
        %v781 = vsel %vm588, %v775, 0
        %783 = vmatpush.msra.mxu0 0.0
        %784 = vmatpush.msra.mxu0 0.0
        %785 = vmatpush.msra.mxu0 0.0
        %786 = vmatpush.msra.mxu0 0.0
        %787 = vmatpush.msra.mxu0 0.0
        %788 = vmatpush.msra.mxu0 0.0
        %789 = vmatpush.msra.mxu0 0.0
        %790 = vmatpush.msra.mxu0 0.0
        %791 = vmatpush.msra.mxu0 0.0
        %792 = vmatpush.msra.mxu0 0.0
        %793 = vmatpush.msra.mxu0 0.0
        %794 = vmatpush.msra.mxu0 0.0
        %795 = vmatpush.msra.mxu0 0.0
        %796 = vmatpush.msra.mxu0 0.0
        %797 = vmatpush.msra.mxu0 0.0
        %798 = vmatpush.msra.mxu0 %v779
        %799 = vmatmul.f32.gmra.mxu0 %v777
        %v800 = vpop.f32.mrf.mxu0
        %v801 = vadd.f32 0.0, %v800
        %802 = vdwg.mxu0
        %803 = vmatpush.msra.mxu0 0.0
        %804 = vmatpush.msra.mxu0 0.0
        %805 = vmatpush.msra.mxu0 0.0
        %806 = vmatpush.msra.mxu0 0.0
        %807 = vmatpush.msra.mxu0 0.0
        %808 = vmatpush.msra.mxu0 0.0
        %809 = vmatpush.msra.mxu0 0.0
        %810 = vmatpush.msra.mxu0 0.0
        %811 = vmatpush.msra.mxu0 0.0
        %812 = vmatpush.msra.mxu0 0.0
        %813 = vmatpush.msra.mxu0 0.0
        %814 = vmatpush.msra.mxu0 0.0
        %815 = vmatpush.msra.mxu0 0.0
        %816 = vmatpush.msra.mxu0 0.0
        %817 = vmatpush.msra.mxu0 0.0
        %818 = vmatpush.msra.mxu0 %v781
        %819 = vmatmul.f32.gmra.mxu0 %v777
        %v820 = vpop.f32.mrf.mxu0
        %v821 = vadd.f32 0.0, %v820
        %822 = vdwg.mxu0
        %823 = vst [vmem:[#allocation1] ss:$2 sm:$0xff] %v755
        %s824 = scalar_lea.vmem [#allocation1], 16
        %825 = vst [vmem:[%s824] ss:$2 sm:$0xff] %v756
        %v826 = vld.sshfl [vmem:[#allocation1] sm:$0xff pattern:$0x75316420]
        %v827 = vld.sshfl [vmem:[#allocation1 + $0x8] sm:$0xff pattern:$0x75316420]
        %v828 = vld.sshfl [vmem:[#allocation1 + $0x10] sm:$0xff pattern:$0x75316420]
        %829 = vrot.lane.b32.xlu0 %v826, 127
        %v830 = vpop.permute.xlu0 %829
        %831 = vrot.lane.b32.xlu0 %v827, 127
        %v832 = vpop.permute.xlu0 %831
        %833 = vrot.lane.b32.xlu0 %v828, 127
        %v834 = vpop.permute.xlu0 %833
        %vm835 = vcmask 1039360
        %v836 = vsel %vm835, %v830, %v832
        %v837 = vsel %vm835, %v832, %v834
        %v839 = vsel %vm584, %v754, 0
        %v841 = vsel %vm588, %v836, 0
        %v843 = vsel %vm588, %v837, 0
        %845 = vmatpush.msra.mxu0 0.0
        %846 = vmatpush.msra.mxu0 0.0
        %847 = vmatpush.msra.mxu0 0.0
        %848 = vmatpush.msra.mxu0 0.0
        %849 = vmatpush.msra.mxu0 0.0
        %850 = vmatpush.msra.mxu0 0.0
        %851 = vmatpush.msra.mxu0 0.0
        %852 = vmatpush.msra.mxu0 0.0
        %853 = vmatpush.msra.mxu0 0.0
        %854 = vmatpush.msra.mxu0 0.0
        %855 = vmatpush.msra.mxu0 0.0
        %856 = vmatpush.msra.mxu0 0.0
        %857 = vmatpush.msra.mxu0 0.0
        %858 = vmatpush.msra.mxu0 0.0
        %859 = vmatpush.msra.mxu0 0.0
        %860 = vmatpush.msra.mxu0 %v841
        %861 = vmatmul.f32.gmra.mxu0 %v839
        %v862 = vpop.f32.mrf.mxu0
        %v863 = vadd.f32 %v801, %v862
        %864 = vdwg.mxu0
        %865 = vmatpush.msra.mxu0 0.0
        %866 = vmatpush.msra.mxu0 0.0
        %867 = vmatpush.msra.mxu0 0.0
        %868 = vmatpush.msra.mxu0 0.0
        %869 = vmatpush.msra.mxu0 0.0
        %870 = vmatpush.msra.mxu0 0.0
        %871 = vmatpush.msra.mxu0 0.0
        %872 = vmatpush.msra.mxu0 0.0
        %873 = vmatpush.msra.mxu0 0.0
        %874 = vmatpush.msra.mxu0 0.0
        %875 = vmatpush.msra.mxu0 0.0
        %876 = vmatpush.msra.mxu0 0.0
        %877 = vmatpush.msra.mxu0 0.0
        %878 = vmatpush.msra.mxu0 0.0
        %879 = vmatpush.msra.mxu0 0.0
        %880 = vmatpush.msra.mxu0 %v843
        %881 = vmatmul.f32.gmra.mxu0 %v839
        %v882 = vpop.f32.mrf.mxu0
        %v883 = vadd.f32 %v821, %v882
        %884 = vdwg.mxu0
        %s885 = scalar_lea.vmem %s6, 56
        %v886 = vld [vmem:[%s885] sm:$0xff]
        %v887 = vld [vmem:[%s549] sm:$0xff]
        %v888 = vld [vmem:[%s549 + $0x8] sm:$0xf]
        %891 = vst [vmem:[#allocation1] ss:$2 sm:$0xff] %v887
        %s892 = scalar_lea.vmem [#allocation1], 16
        %893 = vst [vmem:[%s892] ss:$2 sm:$0xff] %v888
        %v894 = vld.sshfl [vmem:[#allocation1] sm:$0xff pattern:$0x75316420]
        %v895 = vld.sshfl [vmem:[#allocation1 + $0x8] sm:$0xff pattern:$0x75316420]
        %v896 = vld.sshfl [vmem:[#allocation1 + $0x10] sm:$0xff pattern:$0x75316420]
        %897 = vrot.lane.b32.xlu0 %v894, 95
        %v898 = vpop.permute.xlu0 %897
        %899 = vrot.lane.b32.xlu0 %v895, 95
        %v900 = vpop.permute.xlu0 %899
        %901 = vrot.lane.b32.xlu0 %v896, 95
        %v902 = vpop.permute.xlu0 %901
        %vm903 = vcmask 777216
        %v904 = vsel %vm903, %v898, %v900
        %v905 = vsel %vm903, %v900, %v902
        %v907 = vsel %vm584, %v886, 0
        %v909 = vsel %vm588, %v904, 0
        %v911 = vsel %vm588, %v905, 0
        %913 = vmatpush.msra.mxu0 0.0
        %914 = vmatpush.msra.mxu0 0.0
        %915 = vmatpush.msra.mxu0 0.0
        %916 = vmatpush.msra.mxu0 0.0
        %917 = vmatpush.msra.mxu0 0.0
        %918 = vmatpush.msra.mxu0 0.0
        %919 = vmatpush.msra.mxu0 0.0
        %920 = vmatpush.msra.mxu0 0.0
        %921 = vmatpush.msra.mxu0 0.0
        %922 = vmatpush.msra.mxu0 0.0
        %923 = vmatpush.msra.mxu0 0.0
        %924 = vmatpush.msra.mxu0 0.0
        %925 = vmatpush.msra.mxu0 0.0
        %926 = vmatpush.msra.mxu0 0.0
        %927 = vmatpush.msra.mxu0 0.0
        %928 = vmatpush.msra.mxu0 %v909
        %929 = vmatmul.f32.gmra.mxu0 %v907
        %v930 = vpop.f32.mrf.mxu0
        %v931 = vadd.f32 0.0, %v930
        %932 = vdwg.mxu0
        %933 = vmatpush.msra.mxu0 0.0
        %934 = vmatpush.msra.mxu0 0.0
        %935 = vmatpush.msra.mxu0 0.0
        %936 = vmatpush.msra.mxu0 0.0
        %937 = vmatpush.msra.mxu0 0.0
        %938 = vmatpush.msra.mxu0 0.0
        %939 = vmatpush.msra.mxu0 0.0
        %940 = vmatpush.msra.mxu0 0.0
        %941 = vmatpush.msra.mxu0 0.0
        %942 = vmatpush.msra.mxu0 0.0
        %943 = vmatpush.msra.mxu0 0.0
        %944 = vmatpush.msra.mxu0 0.0
        %945 = vmatpush.msra.mxu0 0.0
        %946 = vmatpush.msra.mxu0 0.0
        %947 = vmatpush.msra.mxu0 0.0
        %948 = vmatpush.msra.mxu0 %v911
        %949 = vmatmul.f32.gmra.mxu0 %v907
        %v950 = vpop.f32.mrf.mxu0
        %v951 = vadd.f32 0.0, %v950
        %952 = vdwg.mxu0
        %v953 = vadd.f32 %v863, %v931
        %v954 = vadd.f32 %v883, %v951
        %s955 = scalar_lea.vmem %s6, 16
        %v956 = vld [vmem:[%s955] sm:$0xff]
        %v957 = vld [vmem:[%s549] sm:$0xff]
        %v958 = vld [vmem:[%s549 + $0x8] sm:$0xf]
        %s959 = scalar_lea.vmem %s6, 40
        %v960 = vld [vmem:[%s959] sm:$0xff]
        %963 = vst [vmem:[#allocation1] ss:$2 sm:$0xff] %v957
        %s964 = scalar_lea.vmem [#allocation1], 16
        %965 = vst [vmem:[%s964] ss:$2 sm:$0xff] %v958
        %v966 = vld.sshfl [vmem:[#allocation1] sm:$0xff pattern:$0x75316420]
        %v967 = vld.sshfl [vmem:[#allocation1 + $0x8] sm:$0xff pattern:$0x75316420]
        %v968 = vld.sshfl [vmem:[#allocation1 + $0x10] sm:$0xff pattern:$0x75316420]
        %969 = vrot.lane.b32.xlu0 %v966, 110
        %v970 = vpop.permute.xlu0 %969
        %971 = vrot.lane.b32.xlu0 %v967, 110
        %v972 = vpop.permute.xlu0 %971
        %973 = vrot.lane.b32.xlu0 %v968, 110
        %v974 = vpop.permute.xlu0 %973
        %vm975 = vcmask 900096
        %v976 = vsel %vm975, %v970, %v972
        %v977 = vsel %vm975, %v972, %v974
        %v979 = vsel %vm584, %v960, 0
        %v981 = vsel %vm588, %v976, 0
        %v983 = vsel %vm588, %v977, 0
        %985 = vmatpush.msra.mxu0 0.0
        %986 = vmatpush.msra.mxu0 0.0
        %987 = vmatpush.msra.mxu0 0.0
        %988 = vmatpush.msra.mxu0 0.0
        %989 = vmatpush.msra.mxu0 0.0
        %990 = vmatpush.msra.mxu0 0.0
        %991 = vmatpush.msra.mxu0 0.0
        %992 = vmatpush.msra.mxu0 0.0
        %993 = vmatpush.msra.mxu0 0.0
        %994 = vmatpush.msra.mxu0 0.0
        %995 = vmatpush.msra.mxu0 0.0
        %996 = vmatpush.msra.mxu0 0.0
        %997 = vmatpush.msra.mxu0 0.0
        %998 = vmatpush.msra.mxu0 0.0
        %999 = vmatpush.msra.mxu0 0.0
        %1000 = vmatpush.msra.mxu0 %v981
        %1001 = vmatmul.f32.gmra.mxu0 %v979
        %v1002 = vpop.f32.mrf.mxu0
        %v1003 = vadd.f32 0.0, %v1002
        %1004 = vdwg.mxu0
        %1005 = vmatpush.msra.mxu0 0.0
        %1006 = vmatpush.msra.mxu0 0.0
        %1007 = vmatpush.msra.mxu0 0.0
        %1008 = vmatpush.msra.mxu0 0.0
        %1009 = vmatpush.msra.mxu0 0.0
        %1010 = vmatpush.msra.mxu0 0.0
        %1011 = vmatpush.msra.mxu0 0.0
        %1012 = vmatpush.msra.mxu0 0.0
        %1013 = vmatpush.msra.mxu0 0.0
        %1014 = vmatpush.msra.mxu0 0.0
        %1015 = vmatpush.msra.mxu0 0.0
        %1016 = vmatpush.msra.mxu0 0.0
        %1017 = vmatpush.msra.mxu0 0.0
        %1018 = vmatpush.msra.mxu0 0.0
        %1019 = vmatpush.msra.mxu0 0.0
        %1020 = vmatpush.msra.mxu0 %v983
        %1021 = vmatmul.f32.gmra.mxu0 %v979
        %v1022 = vpop.f32.mrf.mxu0
        %v1023 = vadd.f32 0.0, %v1022
        %1024 = vdwg.mxu0
        %1025 = vst [vmem:[#allocation1] ss:$2 sm:$0xff] %v957
        %s1026 = scalar_lea.vmem [#allocation1], 16
        %1027 = vst [vmem:[%s1026] ss:$2 sm:$0xff] %v958
        %v1028 = vld.sshfl [vmem:[#allocation1] sm:$0xff pattern:$0x75316420]
        %v1029 = vld.sshfl [vmem:[#allocation1 + $0x8] sm:$0xff pattern:$0x75316420]
        %v1030 = vld.sshfl [vmem:[#allocation1 + $0x10] sm:$0xff pattern:$0x75316420]
        %1031 = vrot.lane.b32.xlu0 %v1028, 126
        %v1032 = vpop.permute.xlu0 %1031
        %1033 = vrot.lane.b32.xlu0 %v1029, 126
        %v1034 = vpop.permute.xlu0 %1033
        %1035 = vrot.lane.b32.xlu0 %v1030, 126
        %v1036 = vpop.permute.xlu0 %1035
        %vm1037 = vcmask 1031168
        %v1038 = vsel %vm1037, %v1032, %v1034
        %v1039 = vsel %vm1037, %v1034, %v1036
        %v1041 = vsel %vm584, %v956, 0
        %v1043 = vsel %vm588, %v1038, 0
        %v1045 = vsel %vm588, %v1039, 0
        %1047 = vmatpush.msra.mxu0 0.0
        %1048 = vmatpush.msra.mxu0 0.0
        %1049 = vmatpush.msra.mxu0 0.0
        %1050 = vmatpush.msra.mxu0 0.0
        %1051 = vmatpush.msra.mxu0 0.0
        %1052 = vmatpush.msra.mxu0 0.0
        %1053 = vmatpush.msra.mxu0 0.0
        %1054 = vmatpush.msra.mxu0 0.0
        %1055 = vmatpush.msra.mxu0 0.0
        %1056 = vmatpush.msra.mxu0 0.0
        %1057 = vmatpush.msra.mxu0 0.0
        %1058 = vmatpush.msra.mxu0 0.0
        %1059 = vmatpush.msra.mxu0 0.0
        %1060 = vmatpush.msra.mxu0 0.0
        %1061 = vmatpush.msra.mxu0 0.0
        %1062 = vmatpush.msra.mxu0 %v1043
        %1063 = vmatmul.f32.gmra.mxu0 %v1041
        %v1064 = vpop.f32.mrf.mxu0
        %v1065 = vadd.f32 %v1003, %v1064
        %1066 = vdwg.mxu0
        %1067 = vmatpush.msra.mxu0 0.0
        %1068 = vmatpush.msra.mxu0 0.0
        %1069 = vmatpush.msra.mxu0 0.0
        %1070 = vmatpush.msra.mxu0 0.0
        %1071 = vmatpush.msra.mxu0 0.0
        %1072 = vmatpush.msra.mxu0 0.0
        %1073 = vmatpush.msra.mxu0 0.0
        %1074 = vmatpush.msra.mxu0 0.0
        %1075 = vmatpush.msra.mxu0 0.0
        %1076 = vmatpush.msra.mxu0 0.0
        %1077 = vmatpush.msra.mxu0 0.0
        %1078 = vmatpush.msra.mxu0 0.0
        %1079 = vmatpush.msra.mxu0 0.0
        %1080 = vmatpush.msra.mxu0 0.0
        %1081 = vmatpush.msra.mxu0 0.0
        %1082 = vmatpush.msra.mxu0 %v1045
        %1083 = vmatmul.f32.gmra.mxu0 %v1041
        %v1084 = vpop.f32.mrf.mxu0
        %v1085 = vadd.f32 %v1023, %v1084
        %1086 = vdwg.mxu0
        %s1087 = scalar_lea.vmem %s6, 64
        %v1088 = vld [vmem:[%s1087] sm:$0xff]
        %v1089 = vld [vmem:[%s549] sm:$0xff]
        %v1090 = vld [vmem:[%s549 + $0x8] sm:$0xf]
        %1093 = vst [vmem:[#allocation1] ss:$2 sm:$0xff] %v1089
        %s1094 = scalar_lea.vmem [#allocation1], 16
        %1095 = vst [vmem:[%s1094] ss:$2 sm:$0xff] %v1090
        %v1096 = vld.sshfl [vmem:[#allocation1] sm:$0xff pattern:$0x75316420]
        %v1097 = vld.sshfl [vmem:[#allocation1 + $0x8] sm:$0xff pattern:$0x75316420]
        %v1098 = vld.sshfl [vmem:[#allocation1 + $0x10] sm:$0xff pattern:$0x75316420]
        %1099 = vrot.lane.b32.xlu0 %v1096, 94
        %v1100 = vpop.permute.xlu0 %1099
        %1101 = vrot.lane.b32.xlu0 %v1097, 94
        %v1102 = vpop.permute.xlu0 %1101
        %1103 = vrot.lane.b32.xlu0 %v1098, 94
        %v1104 = vpop.permute.xlu0 %1103
        %vm1105 = vcmask 769024
        %v1106 = vsel %vm1105, %v1100, %v1102
        %v1107 = vsel %vm1105, %v1102, %v1104
        %v1109 = vsel %vm584, %v1088, 0
        %v1111 = vsel %vm588, %v1106, 0
        %v1113 = vsel %vm588, %v1107, 0
        %1115 = vmatpush.msra.mxu0 0.0
        %1116 = vmatpush.msra.mxu0 0.0
        %1117 = vmatpush.msra.mxu0 0.0
        %1118 = vmatpush.msra.mxu0 0.0
        %1119 = vmatpush.msra.mxu0 0.0
        %1120 = vmatpush.msra.mxu0 0.0
        %1121 = vmatpush.msra.mxu0 0.0
        %1122 = vmatpush.msra.mxu0 0.0
        %1123 = vmatpush.msra.mxu0 0.0
        %1124 = vmatpush.msra.mxu0 0.0
        %1125 = vmatpush.msra.mxu0 0.0
        %1126 = vmatpush.msra.mxu0 0.0
        %1127 = vmatpush.msra.mxu0 0.0
        %1128 = vmatpush.msra.mxu0 0.0
        %1129 = vmatpush.msra.mxu0 0.0
        %1130 = vmatpush.msra.mxu0 %v1111
        %1131 = vmatmul.f32.gmra.mxu0 %v1109
        %v1132 = vpop.f32.mrf.mxu0
        %v1133 = vadd.f32 0.0, %v1132
        %1134 = vdwg.mxu0
        %1135 = vmatpush.msra.mxu0 0.0
        %1136 = vmatpush.msra.mxu0 0.0
        %1137 = vmatpush.msra.mxu0 0.0
        %1138 = vmatpush.msra.mxu0 0.0
        %1139 = vmatpush.msra.mxu0 0.0
        %1140 = vmatpush.msra.mxu0 0.0
        %1141 = vmatpush.msra.mxu0 0.0
        %1142 = vmatpush.msra.mxu0 0.0
        %1143 = vmatpush.msra.mxu0 0.0
        %1144 = vmatpush.msra.mxu0 0.0
        %1145 = vmatpush.msra.mxu0 0.0
        %1146 = vmatpush.msra.mxu0 0.0
        %1147 = vmatpush.msra.mxu0 0.0
        %1148 = vmatpush.msra.mxu0 0.0
        %1149 = vmatpush.msra.mxu0 0.0
        %1150 = vmatpush.msra.mxu0 %v1113
        %1151 = vmatmul.f32.gmra.mxu0 %v1109
        %v1152 = vpop.f32.mrf.mxu0
        %v1153 = vadd.f32 0.0, %v1152
        %1154 = vdwg.mxu0
        %v1155 = vadd.f32 %v1065, %v1133
        %v1156 = vadd.f32 %v1085, %v1153
        %v1158 = vperm.slane %v554, 0
        %v1159 = vperm.slane %v554, 1
        %v1162 = vmul.f32 %v751, %v1158
        %v1163 = vmul.f32 %v752, %v1159
        %v1164 = vadd.f32 %v1162, %v953
        %v1165 = vadd.f32 %v1163, %v954
        %v1167 = vperm.slane %v555, 0
        %v1168 = vperm.slane %v555, 1
        %v1171 = vmul.f32 %v1155, %v1167
        %v1172 = vmul.f32 %v1156, %v1168
        %v1173 = vadd.f32 %v1164, %v1171
        %v1174 = vadd.f32 %v1165, %v1172
        %v1175 = vld [vmem:[%s7] sm:$0xff]
        %1177 = vset.pattern.permute.xlu0 0
        %1178 = vperm.xlu0 %1177, %v1175
        %v1179 = vpop.permute.xlu0 %1178
        %v1181 = vadd.f32 %v1173, %v1179
        %v1182 = vadd.f32 %v1174, %v1179
        %1183 = vst [vmem:[#allocation2] sm:$0xff] -1e+30
        %1184 = vst [vmem:[#allocation2 + $0x8] sm:$0xff] -1e+30
        %vm1185 = vcmask 277504
        %1186 = vst.msk [vmem:[#allocation2 + $0x10] sm:$0xff] %vm1185, -1e+30
        %1189 = vrot.lane.b32.xlu0 %v1181, 17
        %v1190 = vpop.permute.xlu0 %1189
        %1191 = vrot.lane.b32.xlu0 %v1182, 17
        %v1192 = vpop.permute.xlu0 %1191
        %vm1193 = vcmask 138240
        %v1194 = vsel %vm1193, %v1190, %v1192
        %vm1198 = vcmask 1047688
        %1199 = vst.msk [vmem:[#allocation2] sm:$0xff] %vm1198, %v1190
        %1200 = vst [vmem:[#allocation2 + $0x8] sm:$0xff] %v1194
        %1201 = vst.msk [vmem:[#allocation2 + $0x10] sm:$0xff] %vm1193, %v1192
        %v1202 = vld [vmem:[#allocation2] sm:$0xff]
        %v1203 = vld [vmem:[#allocation2 + $0x8] sm:$0xff]
        %v1205 = vperm.slane %v559, 0
        %v1206 = vperm.slane %v559, 1
        %v1209 = vadd.f32 %v1202, %v1205
        %v1210 = vadd.f32 %v1203, %v1206
        %v1211 = vld [vmem:[#allocation2 + $0x10] sm:$0xff]
        %1215 = vrot.lane.b32.xlu0 %v1202, 127
        %v1216 = vpop.permute.xlu0 %1215
        %1217 = vrot.lane.b32.xlu0 %v1203, 127
        %v1218 = vpop.permute.xlu0 %1217
        %1219 = vrot.lane.b32.xlu0 %v1211, 127
        %v1220 = vpop.permute.xlu0 %1219
        %v1221 = vsel %vm835, %v1216, %v1218
        %v1222 = vsel %vm835, %v1218, %v1220
        %v1225 = vmax.f32 %v1209, %v1221
        %v1226 = vmax.f32 %v1210, %v1222
        %v1228 = vperm.slane %v561, 0
        %v1229 = vperm.slane %v561, 1
        %1230 = vrot.lane.b32.xlu0 %v1228, 2
        %v1231 = vpop.permute.xlu0 %1230
        %1232 = vrot.lane.b32.xlu0 %v1229, 2
        %v1233 = vpop.permute.xlu0 %1232
        %vm1234 = vcmask 15360
        %v1235 = vsel %vm1234, %v1231, %v1233
        %v1239 = vadd.f32 %v1202, %v1231
        %v1240 = vadd.f32 %v1203, %v1235
        %v1241 = vadd.f32 %v1211, %v1233
        %1245 = vrot.lane.b32.xlu0 %v1239, 126
        %v1246 = vpop.permute.xlu0 %1245
        %1247 = vrot.lane.b32.xlu0 %v1240, 126
        %v1248 = vpop.permute.xlu0 %1247
        %1249 = vrot.lane.b32.xlu0 %v1241, 126
        %v1250 = vpop.permute.xlu0 %1249
        %v1251 = vsel %vm1037, %v1246, %v1248
        %v1252 = vsel %vm1037, %v1248, %v1250
        %v1255 = vmax.f32 %v1225, %v1251
        %v1256 = vmax.f32 %v1226, %v1252
        %1257 = vrot.lane.b32.xlu0 %v1205, 16
        %v1258 = vpop.permute.xlu0 %1257
        %1259 = vrot.lane.b32.xlu0 %v1206, 16
        %v1260 = vpop.permute.xlu0 %1259
        %vm1261 = vcmask 130048
        %v1262 = vsel %vm1261, %v1258, %v1260
        %v1266 = vadd.f32 %v1202, %v1258
        %v1267 = vadd.f32 %v1203, %v1262
        %v1268 = vadd.f32 %v1211, %v1260
        %1272 = vrot.lane.b32.xlu0 %v1266, 112
        %v1273 = vpop.permute.xlu0 %1272
        %1274 = vrot.lane.b32.xlu0 %v1267, 112
        %v1275 = vpop.permute.xlu0 %1274
        %1276 = vrot.lane.b32.xlu0 %v1268, 112
        %v1277 = vpop.permute.xlu0 %1276
        %v1278 = vsel %vm581, %v1273, %v1275
        %v1279 = vsel %vm581, %v1275, %v1277
        %v1282 = vmax.f32 %v1255, %v1278
        %v1283 = vmax.f32 %v1256, %v1279
        %1284 = vrot.lane.b32.xlu0 %v1202, 111
        %v1285 = vpop.permute.xlu0 %1284
        %1286 = vrot.lane.b32.xlu0 %v1203, 111
        %v1287 = vpop.permute.xlu0 %1286
        %1288 = vrot.lane.b32.xlu0 %v1211, 111
        %v1289 = vpop.permute.xlu0 %1288
        %v1290 = vsel %vm773, %v1285, %v1287
        %v1291 = vsel %vm773, %v1287, %v1289
        %v1294 = vmax.f32 %v1282, %v1290
        %v1295 = vmax.f32 %v1283, %v1291
        %1296 = vrot.lane.b32.xlu0 %v1228, 18
        %v1297 = vpop.permute.xlu0 %1296
        %1298 = vrot.lane.b32.xlu0 %v1229, 18
        %v1299 = vpop.permute.xlu0 %1298
        %vm1300 = vcmask 146432
        %v1301 = vsel %vm1300, %v1297, %v1299
        %v1305 = vadd.f32 %v1202, %v1297
        %v1306 = vadd.f32 %v1203, %v1301
        %v1307 = vadd.f32 %v1211, %v1299
        %1311 = vrot.lane.b32.xlu0 %v1305, 110
        %v1312 = vpop.permute.xlu0 %1311
        %1313 = vrot.lane.b32.xlu0 %v1306, 110
        %v1314 = vpop.permute.xlu0 %1313
        %1315 = vrot.lane.b32.xlu0 %v1307, 110
        %v1316 = vpop.permute.xlu0 %1315
        %v1317 = vsel %vm975, %v1312, %v1314
        %v1318 = vsel %vm975, %v1314, %v1316
        %v1321 = vmax.f32 %v1294, %v1317
        %v1322 = vmax.f32 %v1295, %v1318
        %1323 = vrot.lane.b32.xlu0 %v1205, 32
        %v1324 = vpop.permute.xlu0 %1323
        %1325 = vrot.lane.b32.xlu0 %v1206, 32
        %v1326 = vpop.permute.xlu0 %1325
        %vm1327 = vcmask 261120
        %v1328 = vsel %vm1327, %v1324, %v1326
        %v1332 = vadd.f32 %v1202, %v1324
        %v1333 = vadd.f32 %v1203, %v1328
        %v1334 = vadd.f32 %v1211, %v1326
        %1338 = vrot.lane.b32.xlu0 %v1332, 96
        %v1339 = vpop.permute.xlu0 %1338
        %1340 = vrot.lane.b32.xlu0 %v1333, 96
        %v1341 = vpop.permute.xlu0 %1340
        %1342 = vrot.lane.b32.xlu0 %v1334, 96
        %v1343 = vpop.permute.xlu0 %1342
        %v1344 = vsel %vm701, %v1339, %v1341
        %v1345 = vsel %vm701, %v1341, %v1343
        %v1348 = vmax.f32 %v1321, %v1344
        %v1349 = vmax.f32 %v1322, %v1345
        %1350 = vrot.lane.b32.xlu0 %v1202, 95
        %v1351 = vpop.permute.xlu0 %1350
        %1352 = vrot.lane.b32.xlu0 %v1203, 95
        %v1353 = vpop.permute.xlu0 %1352
        %1354 = vrot.lane.b32.xlu0 %v1211, 95
        %v1355 = vpop.permute.xlu0 %1354
        %v1356 = vsel %vm903, %v1351, %v1353
        %v1357 = vsel %vm903, %v1353, %v1355
        %v1360 = vmax.f32 %v1348, %v1356
        %v1361 = vmax.f32 %v1349, %v1357
        %1362 = vrot.lane.b32.xlu0 %v1228, 34
        %v1363 = vpop.permute.xlu0 %1362
        %1364 = vrot.lane.b32.xlu0 %v1229, 34
        %v1365 = vpop.permute.xlu0 %1364
        %v1366 = vsel %vm1185, %v1363, %v1365
        %v1370 = vadd.f32 %v1202, %v1363
        %v1371 = vadd.f32 %v1203, %v1366
        %v1372 = vadd.f32 %v1211, %v1365
        %1376 = vrot.lane.b32.xlu0 %v1370, 94
        %v1377 = vpop.permute.xlu0 %1376
        %1378 = vrot.lane.b32.xlu0 %v1371, 94
        %v1379 = vpop.permute.xlu0 %1378
        %1380 = vrot.lane.b32.xlu0 %v1372, 94
        %v1381 = vpop.permute.xlu0 %1380
        %v1382 = vsel %vm1105, %v1377, %v1379
        %v1383 = vsel %vm1105, %v1379, %v1381
        %v1386 = vmax.f32 %v1360, %v1382
        %v1387 = vmax.f32 %v1361, %v1383
        %v1388 = vld [vmem:[#allocation4] sm:$0xff]
        %v1389 = vld [vmem:[#allocation4 + $0x8] sm:$0xff]
        %v1390 = vld [vmem:[#allocation4 + $0x10] sm:$0xff]
        %v1391 = vld [vmem:[#allocation4 + $0x18] sm:$0xff]
        %v1392 = vld [vmem:[#allocation4 + $0x20] sm:$0xff]
        %v1393 = vld [vmem:[#allocation4 + $0x28] sm:$0xff]
        %v1394 = vld [vmem:[#allocation4 + $0x30] sm:$0xff]
        %v1395 = vld [vmem:[#allocation4 + $0x38] sm:$0xff]
        %v1396 = vld [vmem:[#allocation4 + $0x40] sm:$0xff]
        %v1397 = vld [vmem:[#allocation4 + $0x48] sm:$0xff]
        %v1398 = vld [vmem:[#allocation4 + $0x50] sm:$0xff]
        %v1399 = vld [vmem:[#allocation4 + $0x58] sm:$0xff]
        %v1400 = vld [vmem:[#allocation4 + $0x60] sm:$0xff]
        %v1401 = vld [vmem:[#allocation4 + $0x68] sm:$0xff]
        %v1402 = vld [vmem:[#allocation4 + $0x70] sm:$0xff]
        %v1403 = vld [vmem:[#allocation4 + $0x78] sm:$0xff]
        %v1404 = vld [vmem:[#allocation4 + $0x80] sm:$0xff]
        %v1405 = vld [vmem:[#allocation4 + $0x88] sm:$0xff]
        %v1406 = vld [vmem:[#allocation4 + $0x90] sm:$0xff]
        %v1407 = vld [vmem:[#allocation4 + $0x98] sm:$0xff]
        %v1408 = vld [vmem:[#allocation4 + $0xa0] sm:$0xff]
        %v1409 = vld [vmem:[#allocation4 + $0xa8] sm:$0xff]
        %v1410 = vld [vmem:[#allocation4 + $0xb0] sm:$0xff]
        %v1411 = vld [vmem:[#allocation4 + $0xb8] sm:$0xff]
        %v1412 = vld [vmem:[#allocation4 + $0xc0] sm:$0xff]
        %v1413 = vld [vmem:[#allocation4 + $0xc8] sm:$0xff]
        %v1414 = vld [vmem:[#allocation4 + $0xd0] sm:$0xff]
        %v1415 = vld [vmem:[#allocation4 + $0xd8] sm:$0xff]
        %v1416 = vld [vmem:[#allocation4 + $0xe0] sm:$0xff]
        %v1417 = vld [vmem:[#allocation4 + $0xe8] sm:$0xff]
        %v1418 = vld [vmem:[#allocation4 + $0xf0] sm:$0xff]
        %v1419 = vld [vmem:[#allocation4 + $0xf8] sm:$0xff]
        %1420 = vmatpush.msra.mxu0 %v1403
        %1421 = vmatpush.msra.mxu0 %v1402
        %1422 = vmatpush.msra.mxu0 %v1401
        %1423 = vmatpush.msra.mxu0 %v1400
        %1424 = vmatpush.msra.mxu0 %v1399
        %1425 = vmatpush.msra.mxu0 %v1398
        %1426 = vmatpush.msra.mxu0 %v1397
        %1427 = vmatpush.msra.mxu0 %v1396
        %1428 = vmatpush.msra.mxu0 %v1395
        %1429 = vmatpush.msra.mxu0 %v1394
        %1430 = vmatpush.msra.mxu0 %v1393
        %1431 = vmatpush.msra.mxu0 %v1392
        %1432 = vmatpush.msra.mxu0 %v1391
        %1433 = vmatpush.msra.mxu0 %v1390
        %1434 = vmatpush.msra.mxu0 %v1389
        %1435 = vmatpush.msra.mxu0 %v1388
        %1436 = vmatmul.f32.gmra.mxu0 %v1386
        %v1437 = vpop.f32.mrf.mxu0
        %v1438 = vadd.f32 0.0, %v1437
        %1439 = vdwg.mxu0
        %1440 = vmatpush.msra.mxu0 %v1419
        %1441 = vmatpush.msra.mxu0 %v1418
        %1442 = vmatpush.msra.mxu0 %v1417
        %1443 = vmatpush.msra.mxu0 %v1416
        %1444 = vmatpush.msra.mxu0 %v1415
        %1445 = vmatpush.msra.mxu0 %v1414
        %1446 = vmatpush.msra.mxu0 %v1413
        %1447 = vmatpush.msra.mxu0 %v1412
        %1448 = vmatpush.msra.mxu0 %v1411
        %1449 = vmatpush.msra.mxu0 %v1410
        %1450 = vmatpush.msra.mxu0 %v1409
        %1451 = vmatpush.msra.mxu0 %v1408
        %1452 = vmatpush.msra.mxu0 %v1407
        %1453 = vmatpush.msra.mxu0 %v1406
        %1454 = vmatpush.msra.mxu0 %v1405
        %1455 = vmatpush.msra.mxu0 %v1404
        %1456 = vmatmul.f32.gmra.mxu0 %v1387
        %v1457 = vpop.f32.mrf.mxu0
        %v1458 = vadd.f32 %v1438, %v1457
        %1459 = vdwg.mxu0
        %vm1460 = vcmask 670720
        %1461 = vst.msk [vmem:[#allocation3] sm:$0xff] %vm1460, 0.0
        %v1462 = vmax.f32 %v1458, 0.0
        %1464 = vrot.lane.b32.xlu0 %v1462, 9
        %v1465 = vpop.permute.xlu0 %1464
        %vm1467 = vcmask 597064
        %1468 = vst.msk [vmem:[#allocation3] sm:$0xff] %vm1467, %v1465
        %v1469 = vld [vmem:[%s8] sm:$0xff]
        %v1470 = vld [vmem:[#allocation3] sm:$0xff]
        %s1471 = scalar_lea.vmem %s8, 24
        %v1472 = vld [vmem:[%s1471] sm:$0xff]
        %1474 = vrot.lane.b32.xlu0 %v1470, 120
        %v1475 = vpop.permute.xlu0 %1474
        %vm1477 = vcmask 64512
        %v1479 = vsel %vm1477, %v1472, 0
        %1481 = vmatpush.msra.mxu0 0.0
        %1482 = vmatpush.msra.mxu0 0.0
        %1483 = vmatpush.msra.mxu0 0.0
        %1484 = vmatpush.msra.mxu0 0.0
        %1485 = vmatpush.msra.mxu0 0.0
        %1486 = vmatpush.msra.mxu0 0.0
        %1487 = vmatpush.msra.mxu0 0.0
        %1488 = vmatpush.msra.mxu0 0.0
        %1489 = vmatpush.msra.mxu0 0.0
        %1490 = vmatpush.msra.mxu0 0.0
        %1491 = vmatpush.msra.mxu0 0.0
        %1492 = vmatpush.msra.mxu0 0.0
        %1493 = vmatpush.msra.mxu0 0.0
        %1494 = vmatpush.msra.mxu0 0.0
        %1495 = vmatpush.msra.mxu0 0.0
        %1496 = vmatpush.msra.mxu0 %v1475
        %1497 = vmatmul.f32.gmra.mxu0 %v1479
        %v1498 = vpop.f32.mrf.mxu0
        %v1499 = vadd.f32 0.0, %v1498
        %1500 = vdwg.mxu0
        %v1502 = vsel %vm1477, %v1469, 0
        %1504 = vmatpush.msra.mxu0 0.0
        %1505 = vmatpush.msra.mxu0 0.0
        %1506 = vmatpush.msra.mxu0 0.0
        %1507 = vmatpush.msra.mxu0 0.0
        %1508 = vmatpush.msra.mxu0 0.0
        %1509 = vmatpush.msra.mxu0 0.0
        %1510 = vmatpush.msra.mxu0 0.0
        %1511 = vmatpush.msra.mxu0 0.0
        %1512 = vmatpush.msra.mxu0 0.0
        %1513 = vmatpush.msra.mxu0 0.0
        %1514 = vmatpush.msra.mxu0 0.0
        %1515 = vmatpush.msra.mxu0 0.0
        %1516 = vmatpush.msra.mxu0 0.0
        %1517 = vmatpush.msra.mxu0 0.0
        %1518 = vmatpush.msra.mxu0 0.0
        %1519 = vmatpush.msra.mxu0 %v1470
        %1520 = vmatmul.f32.gmra.mxu0 %v1502
        %v1521 = vpop.f32.mrf.mxu0
        %v1522 = vadd.f32 %v1499, %v1521
        %1523 = vdwg.mxu0
        %s1524 = scalar_lea.vmem %s8, 48
        %v1525 = vld [vmem:[%s1524] sm:$0xff]
        %1526 = vrot.lane.b32.xlu0 %v1470, 112
        %v1527 = vpop.permute.xlu0 %1526
        %v1530 = vsel %vm1477, %v1525, 0
        %1532 = vmatpush.msra.mxu0 0.0
        %1533 = vmatpush.msra.mxu0 0.0
        %1534 = vmatpush.msra.mxu0 0.0
        %1535 = vmatpush.msra.mxu0 0.0
        %1536 = vmatpush.msra.mxu0 0.0
        %1537 = vmatpush.msra.mxu0 0.0
        %1538 = vmatpush.msra.mxu0 0.0
        %1539 = vmatpush.msra.mxu0 0.0
        %1540 = vmatpush.msra.mxu0 0.0
        %1541 = vmatpush.msra.mxu0 0.0
        %1542 = vmatpush.msra.mxu0 0.0
        %1543 = vmatpush.msra.mxu0 0.0
        %1544 = vmatpush.msra.mxu0 0.0
        %1545 = vmatpush.msra.mxu0 0.0
        %1546 = vmatpush.msra.mxu0 0.0
        %1547 = vmatpush.msra.mxu0 %v1527
        %1548 = vmatmul.f32.gmra.mxu0 %v1530
        %v1549 = vpop.f32.mrf.mxu0
        %v1550 = vadd.f32 0.0, %v1549
        %1551 = vdwg.mxu0
        %v1552 = vadd.f32 %v1522, %v1550
        %s1553 = scalar_lea.vmem %s8, 8
        %v1554 = vld [vmem:[%s1553] sm:$0xff]
        %s1555 = scalar_lea.vmem %s8, 32
        %v1556 = vld [vmem:[%s1555] sm:$0xff]
        %1557 = vrot.lane.b32.xlu0 %v1470, 119
        %v1558 = vpop.permute.xlu0 %1557
        %v1561 = vsel %vm1477, %v1556, 0
        %1563 = vmatpush.msra.mxu0 0.0
        %1564 = vmatpush.msra.mxu0 0.0
        %1565 = vmatpush.msra.mxu0 0.0
        %1566 = vmatpush.msra.mxu0 0.0
        %1567 = vmatpush.msra.mxu0 0.0
        %1568 = vmatpush.msra.mxu0 0.0
        %1569 = vmatpush.msra.mxu0 0.0
        %1570 = vmatpush.msra.mxu0 0.0
        %1571 = vmatpush.msra.mxu0 0.0
        %1572 = vmatpush.msra.mxu0 0.0
        %1573 = vmatpush.msra.mxu0 0.0
        %1574 = vmatpush.msra.mxu0 0.0
        %1575 = vmatpush.msra.mxu0 0.0
        %1576 = vmatpush.msra.mxu0 0.0
        %1577 = vmatpush.msra.mxu0 0.0
        %1578 = vmatpush.msra.mxu0 %v1558
        %1579 = vmatmul.f32.gmra.mxu0 %v1561
        %v1580 = vpop.f32.mrf.mxu0
        %v1581 = vadd.f32 0.0, %v1580
        %1582 = vdwg.mxu0
        %1583 = vrot.lane.b32.xlu0 %v1470, 127
        %v1584 = vpop.permute.xlu0 %1583
        %v1587 = vsel %vm1477, %v1554, 0
        %1589 = vmatpush.msra.mxu0 0.0
        %1590 = vmatpush.msra.mxu0 0.0
        %1591 = vmatpush.msra.mxu0 0.0
        %1592 = vmatpush.msra.mxu0 0.0
        %1593 = vmatpush.msra.mxu0 0.0
        %1594 = vmatpush.msra.mxu0 0.0
        %1595 = vmatpush.msra.mxu0 0.0
        %1596 = vmatpush.msra.mxu0 0.0
        %1597 = vmatpush.msra.mxu0 0.0
        %1598 = vmatpush.msra.mxu0 0.0
        %1599 = vmatpush.msra.mxu0 0.0
        %1600 = vmatpush.msra.mxu0 0.0
        %1601 = vmatpush.msra.mxu0 0.0
        %1602 = vmatpush.msra.mxu0 0.0
        %1603 = vmatpush.msra.mxu0 0.0
        %1604 = vmatpush.msra.mxu0 %v1584
        %1605 = vmatmul.f32.gmra.mxu0 %v1587
        %v1606 = vpop.f32.mrf.mxu0
        %v1607 = vadd.f32 %v1581, %v1606
        %1608 = vdwg.mxu0
        %s1609 = scalar_lea.vmem %s8, 56
        %v1610 = vld [vmem:[%s1609] sm:$0xff]
        %1611 = vrot.lane.b32.xlu0 %v1470, 111
        %v1612 = vpop.permute.xlu0 %1611
        %v1615 = vsel %vm1477, %v1610, 0
        %1617 = vmatpush.msra.mxu0 0.0
        %1618 = vmatpush.msra.mxu0 0.0
        %1619 = vmatpush.msra.mxu0 0.0
        %1620 = vmatpush.msra.mxu0 0.0
        %1621 = vmatpush.msra.mxu0 0.0
        %1622 = vmatpush.msra.mxu0 0.0
        %1623 = vmatpush.msra.mxu0 0.0
        %1624 = vmatpush.msra.mxu0 0.0
        %1625 = vmatpush.msra.mxu0 0.0
        %1626 = vmatpush.msra.mxu0 0.0
        %1627 = vmatpush.msra.mxu0 0.0
        %1628 = vmatpush.msra.mxu0 0.0
        %1629 = vmatpush.msra.mxu0 0.0
        %1630 = vmatpush.msra.mxu0 0.0
        %1631 = vmatpush.msra.mxu0 0.0
        %1632 = vmatpush.msra.mxu0 %v1612
        %1633 = vmatmul.f32.gmra.mxu0 %v1615
        %v1634 = vpop.f32.mrf.mxu0
        %v1635 = vadd.f32 0.0, %v1634
        %1636 = vdwg.mxu0
        %v1637 = vadd.f32 %v1607, %v1635
        %s1638 = scalar_lea.vmem %s8, 16
        %v1639 = vld [vmem:[%s1638] sm:$0xff]
        %s1640 = scalar_lea.vmem %s8, 40
        %v1641 = vld [vmem:[%s1640] sm:$0xff]
        %1642 = vrot.lane.b32.xlu0 %v1470, 118
        %v1643 = vpop.permute.xlu0 %1642
        %v1646 = vsel %vm1477, %v1641, 0
        %1648 = vmatpush.msra.mxu0 0.0
        %1649 = vmatpush.msra.mxu0 0.0
        %1650 = vmatpush.msra.mxu0 0.0
        %1651 = vmatpush.msra.mxu0 0.0
        %1652 = vmatpush.msra.mxu0 0.0
        %1653 = vmatpush.msra.mxu0 0.0
        %1654 = vmatpush.msra.mxu0 0.0
        %1655 = vmatpush.msra.mxu0 0.0
        %1656 = vmatpush.msra.mxu0 0.0
        %1657 = vmatpush.msra.mxu0 0.0
        %1658 = vmatpush.msra.mxu0 0.0
        %1659 = vmatpush.msra.mxu0 0.0
        %1660 = vmatpush.msra.mxu0 0.0
        %1661 = vmatpush.msra.mxu0 0.0
        %1662 = vmatpush.msra.mxu0 0.0
        %1663 = vmatpush.msra.mxu0 %v1643
        %1664 = vmatmul.f32.gmra.mxu0 %v1646
        %v1665 = vpop.f32.mrf.mxu0
        %v1666 = vadd.f32 0.0, %v1665
        %1667 = vdwg.mxu0
        %1668 = vrot.lane.b32.xlu0 %v1470, 126
        %v1669 = vpop.permute.xlu0 %1668
        %v1672 = vsel %vm1477, %v1639, 0
        %1674 = vmatpush.msra.mxu0 0.0
        %1675 = vmatpush.msra.mxu0 0.0
        %1676 = vmatpush.msra.mxu0 0.0
        %1677 = vmatpush.msra.mxu0 0.0
        %1678 = vmatpush.msra.mxu0 0.0
        %1679 = vmatpush.msra.mxu0 0.0
        %1680 = vmatpush.msra.mxu0 0.0
        %1681 = vmatpush.msra.mxu0 0.0
        %1682 = vmatpush.msra.mxu0 0.0
        %1683 = vmatpush.msra.mxu0 0.0
        %1684 = vmatpush.msra.mxu0 0.0
        %1685 = vmatpush.msra.mxu0 0.0
        %1686 = vmatpush.msra.mxu0 0.0
        %1687 = vmatpush.msra.mxu0 0.0
        %1688 = vmatpush.msra.mxu0 0.0
        %1689 = vmatpush.msra.mxu0 %v1669
        %1690 = vmatmul.f32.gmra.mxu0 %v1672
        %v1691 = vpop.f32.mrf.mxu0
        %v1692 = vadd.f32 %v1666, %v1691
        %1693 = vdwg.mxu0
        %s1694 = scalar_lea.vmem %s8, 64
        %v1695 = vld [vmem:[%s1694] sm:$0xff]
        %1696 = vrot.lane.b32.xlu0 %v1470, 110
        %v1697 = vpop.permute.xlu0 %1696
        %v1700 = vsel %vm1477, %v1695, 0
        %1702 = vmatpush.msra.mxu0 0.0
        %1703 = vmatpush.msra.mxu0 0.0
        %1704 = vmatpush.msra.mxu0 0.0
        %1705 = vmatpush.msra.mxu0 0.0
        %1706 = vmatpush.msra.mxu0 0.0
        %1707 = vmatpush.msra.mxu0 0.0
        %1708 = vmatpush.msra.mxu0 0.0
        %1709 = vmatpush.msra.mxu0 0.0
        %1710 = vmatpush.msra.mxu0 0.0
        %1711 = vmatpush.msra.mxu0 0.0
        %1712 = vmatpush.msra.mxu0 0.0
        %1713 = vmatpush.msra.mxu0 0.0
        %1714 = vmatpush.msra.mxu0 0.0
        %1715 = vmatpush.msra.mxu0 0.0
        %1716 = vmatpush.msra.mxu0 0.0
        %1717 = vmatpush.msra.mxu0 %v1697
        %1718 = vmatmul.f32.gmra.mxu0 %v1700
        %v1719 = vpop.f32.mrf.mxu0
        %v1720 = vadd.f32 0.0, %v1719
        %1721 = vdwg.mxu0
        %v1722 = vadd.f32 %v1692, %v1720
        %v1724 = vperm.slane %v556, 0
        %v1726 = vmul.f32 %v1552, %v1724
        %v1727 = vadd.f32 %v1726, %v1637
        %v1729 = vperm.slane %v557, 0
        %v1731 = vmul.f32 %v1722, %v1729
        %v1732 = vadd.f32 %v1727, %v1731
        %v1733 = vld [vmem:[%s9] sm:$0xff]
        %1735 = vset.pattern.permute.xlu0 0
        %1736 = vperm.xlu0 %1735, %v1733
        %v1737 = vpop.permute.xlu0 %1736
        %v1739 = vadd.f32 %v1732, %v1737
        %v1740 = vmax.f32 %v1739, 0.0
        %1742 = vrot.lane.b32.xlu0 %v1740, 9
        %v1743 = vpop.permute.xlu0 %1742
        %1745 = vst.msk [vmem:[#allocation3] sm:$0xff] %vm1467, %v1743
        %v1746 = vld [vmem:[%s10] sm:$0xff]
        %v1747 = vld [vmem:[#allocation3] sm:$0xff]
        %s1748 = scalar_lea.vmem %s10, 24
        %v1749 = vld [vmem:[%s1748] sm:$0xff]
        %1751 = vrot.lane.b32.xlu0 %v1747, 120
        %v1752 = vpop.permute.xlu0 %1751
        %v1755 = vsel %vm1477, %v1749, 0
        %1757 = vmatpush.msra.mxu0 0.0
        %1758 = vmatpush.msra.mxu0 0.0
        %1759 = vmatpush.msra.mxu0 0.0
        %1760 = vmatpush.msra.mxu0 0.0
        %1761 = vmatpush.msra.mxu0 0.0
        %1762 = vmatpush.msra.mxu0 0.0
        %1763 = vmatpush.msra.mxu0 0.0
        %1764 = vmatpush.msra.mxu0 0.0
        %1765 = vmatpush.msra.mxu0 0.0
        %1766 = vmatpush.msra.mxu0 0.0
        %1767 = vmatpush.msra.mxu0 0.0
        %1768 = vmatpush.msra.mxu0 0.0
        %1769 = vmatpush.msra.mxu0 0.0
        %1770 = vmatpush.msra.mxu0 0.0
        %1771 = vmatpush.msra.mxu0 0.0
        %1772 = vmatpush.msra.mxu0 %v1752
        %1773 = vmatmul.f32.gmra.mxu0 %v1755
        %v1774 = vpop.f32.mrf.mxu0
        %v1775 = vadd.f32 0.0, %v1774
        %1776 = vdwg.mxu0
        %v1778 = vsel %vm1477, %v1746, 0
        %1780 = vmatpush.msra.mxu0 0.0
        %1781 = vmatpush.msra.mxu0 0.0
        %1782 = vmatpush.msra.mxu0 0.0
        %1783 = vmatpush.msra.mxu0 0.0
        %1784 = vmatpush.msra.mxu0 0.0
        %1785 = vmatpush.msra.mxu0 0.0
        %1786 = vmatpush.msra.mxu0 0.0
        %1787 = vmatpush.msra.mxu0 0.0
        %1788 = vmatpush.msra.mxu0 0.0
        %1789 = vmatpush.msra.mxu0 0.0
        %1790 = vmatpush.msra.mxu0 0.0
        %1791 = vmatpush.msra.mxu0 0.0
        %1792 = vmatpush.msra.mxu0 0.0
        %1793 = vmatpush.msra.mxu0 0.0
        %1794 = vmatpush.msra.mxu0 0.0
        %1795 = vmatpush.msra.mxu0 %v1747
        %1796 = vmatmul.f32.gmra.mxu0 %v1778
        %v1797 = vpop.f32.mrf.mxu0
        %v1798 = vadd.f32 %v1775, %v1797
        %1799 = vdwg.mxu0
        %s1800 = scalar_lea.vmem %s10, 48
        %v1801 = vld [vmem:[%s1800] sm:$0xff]
        %1802 = vrot.lane.b32.xlu0 %v1747, 112
        %v1803 = vpop.permute.xlu0 %1802
        %v1806 = vsel %vm1477, %v1801, 0
        %1808 = vmatpush.msra.mxu0 0.0
        %1809 = vmatpush.msra.mxu0 0.0
        %1810 = vmatpush.msra.mxu0 0.0
        %1811 = vmatpush.msra.mxu0 0.0
        %1812 = vmatpush.msra.mxu0 0.0
        %1813 = vmatpush.msra.mxu0 0.0
        %1814 = vmatpush.msra.mxu0 0.0
        %1815 = vmatpush.msra.mxu0 0.0
        %1816 = vmatpush.msra.mxu0 0.0
        %1817 = vmatpush.msra.mxu0 0.0
        %1818 = vmatpush.msra.mxu0 0.0
        %1819 = vmatpush.msra.mxu0 0.0
        %1820 = vmatpush.msra.mxu0 0.0
        %1821 = vmatpush.msra.mxu0 0.0
        %1822 = vmatpush.msra.mxu0 0.0
        %1823 = vmatpush.msra.mxu0 %v1803
        %1824 = vmatmul.f32.gmra.mxu0 %v1806
        %v1825 = vpop.f32.mrf.mxu0
        %v1826 = vadd.f32 0.0, %v1825
        %1827 = vdwg.mxu0
        %v1828 = vadd.f32 %v1798, %v1826
        %s1829 = scalar_lea.vmem %s10, 8
        %v1830 = vld [vmem:[%s1829] sm:$0xff]
        %s1831 = scalar_lea.vmem %s10, 32
        %v1832 = vld [vmem:[%s1831] sm:$0xff]
        %1833 = vrot.lane.b32.xlu0 %v1747, 119
        %v1834 = vpop.permute.xlu0 %1833
        %v1837 = vsel %vm1477, %v1832, 0
        %1839 = vmatpush.msra.mxu0 0.0
        %1840 = vmatpush.msra.mxu0 0.0
        %1841 = vmatpush.msra.mxu0 0.0
        %1842 = vmatpush.msra.mxu0 0.0
        %1843 = vmatpush.msra.mxu0 0.0
        %1844 = vmatpush.msra.mxu0 0.0
        %1845 = vmatpush.msra.mxu0 0.0
        %1846 = vmatpush.msra.mxu0 0.0
        %1847 = vmatpush.msra.mxu0 0.0
        %1848 = vmatpush.msra.mxu0 0.0
        %1849 = vmatpush.msra.mxu0 0.0
        %1850 = vmatpush.msra.mxu0 0.0
        %1851 = vmatpush.msra.mxu0 0.0
        %1852 = vmatpush.msra.mxu0 0.0
        %1853 = vmatpush.msra.mxu0 0.0
        %1854 = vmatpush.msra.mxu0 %v1834
        %1855 = vmatmul.f32.gmra.mxu0 %v1837
        %v1856 = vpop.f32.mrf.mxu0
        %v1857 = vadd.f32 0.0, %v1856
        %1858 = vdwg.mxu0
        %1859 = vrot.lane.b32.xlu0 %v1747, 127
        %v1860 = vpop.permute.xlu0 %1859
        %v1863 = vsel %vm1477, %v1830, 0
        %1865 = vmatpush.msra.mxu0 0.0
        %1866 = vmatpush.msra.mxu0 0.0
        %1867 = vmatpush.msra.mxu0 0.0
        %1868 = vmatpush.msra.mxu0 0.0
        %1869 = vmatpush.msra.mxu0 0.0
        %1870 = vmatpush.msra.mxu0 0.0
        %1871 = vmatpush.msra.mxu0 0.0
        %1872 = vmatpush.msra.mxu0 0.0
        %1873 = vmatpush.msra.mxu0 0.0
        %1874 = vmatpush.msra.mxu0 0.0
        %1875 = vmatpush.msra.mxu0 0.0
        %1876 = vmatpush.msra.mxu0 0.0
        %1877 = vmatpush.msra.mxu0 0.0
        %1878 = vmatpush.msra.mxu0 0.0
        %1879 = vmatpush.msra.mxu0 0.0
        %1880 = vmatpush.msra.mxu0 %v1860
        %1881 = vmatmul.f32.gmra.mxu0 %v1863
        %v1882 = vpop.f32.mrf.mxu0
        %v1883 = vadd.f32 %v1857, %v1882
        %1884 = vdwg.mxu0
        %s1885 = scalar_lea.vmem %s10, 56
        %v1886 = vld [vmem:[%s1885] sm:$0xff]
        %1887 = vrot.lane.b32.xlu0 %v1747, 111
        %v1888 = vpop.permute.xlu0 %1887
        %v1891 = vsel %vm1477, %v1886, 0
        %1893 = vmatpush.msra.mxu0 0.0
        %1894 = vmatpush.msra.mxu0 0.0
        %1895 = vmatpush.msra.mxu0 0.0
        %1896 = vmatpush.msra.mxu0 0.0
        %1897 = vmatpush.msra.mxu0 0.0
        %1898 = vmatpush.msra.mxu0 0.0
        %1899 = vmatpush.msra.mxu0 0.0
        %1900 = vmatpush.msra.mxu0 0.0
        %1901 = vmatpush.msra.mxu0 0.0
        %1902 = vmatpush.msra.mxu0 0.0
        %1903 = vmatpush.msra.mxu0 0.0
        %1904 = vmatpush.msra.mxu0 0.0
        %1905 = vmatpush.msra.mxu0 0.0
        %1906 = vmatpush.msra.mxu0 0.0
        %1907 = vmatpush.msra.mxu0 0.0
        %1908 = vmatpush.msra.mxu0 %v1888
        %1909 = vmatmul.f32.gmra.mxu0 %v1891
        %v1910 = vpop.f32.mrf.mxu0
        %v1911 = vadd.f32 0.0, %v1910
        %1912 = vdwg.mxu0
        %v1913 = vadd.f32 %v1883, %v1911
        %s1914 = scalar_lea.vmem %s10, 16
        %v1915 = vld [vmem:[%s1914] sm:$0xff]
        %s1916 = scalar_lea.vmem %s10, 40
        %v1917 = vld [vmem:[%s1916] sm:$0xff]
        %1918 = vrot.lane.b32.xlu0 %v1747, 118
        %v1919 = vpop.permute.xlu0 %1918
        %v1922 = vsel %vm1477, %v1917, 0
        %1924 = vmatpush.msra.mxu0 0.0
        %1925 = vmatpush.msra.mxu0 0.0
        %1926 = vmatpush.msra.mxu0 0.0
        %1927 = vmatpush.msra.mxu0 0.0
        %1928 = vmatpush.msra.mxu0 0.0
        %1929 = vmatpush.msra.mxu0 0.0
        %1930 = vmatpush.msra.mxu0 0.0
        %1931 = vmatpush.msra.mxu0 0.0
        %1932 = vmatpush.msra.mxu0 0.0
        %1933 = vmatpush.msra.mxu0 0.0
        %1934 = vmatpush.msra.mxu0 0.0
        %1935 = vmatpush.msra.mxu0 0.0
        %1936 = vmatpush.msra.mxu0 0.0
        %1937 = vmatpush.msra.mxu0 0.0
        %1938 = vmatpush.msra.mxu0 0.0
        %1939 = vmatpush.msra.mxu0 %v1919
        %1940 = vmatmul.f32.gmra.mxu0 %v1922
        %v1941 = vpop.f32.mrf.mxu0
        %v1942 = vadd.f32 0.0, %v1941
        %1943 = vdwg.mxu0
        %1944 = vrot.lane.b32.xlu0 %v1747, 126
        %v1945 = vpop.permute.xlu0 %1944
        %v1948 = vsel %vm1477, %v1915, 0
        %1950 = vmatpush.msra.mxu0 0.0
        %1951 = vmatpush.msra.mxu0 0.0
        %1952 = vmatpush.msra.mxu0 0.0
        %1953 = vmatpush.msra.mxu0 0.0
        %1954 = vmatpush.msra.mxu0 0.0
        %1955 = vmatpush.msra.mxu0 0.0
        %1956 = vmatpush.msra.mxu0 0.0
        %1957 = vmatpush.msra.mxu0 0.0
        %1958 = vmatpush.msra.mxu0 0.0
        %1959 = vmatpush.msra.mxu0 0.0
        %1960 = vmatpush.msra.mxu0 0.0
        %1961 = vmatpush.msra.mxu0 0.0
        %1962 = vmatpush.msra.mxu0 0.0
        %1963 = vmatpush.msra.mxu0 0.0
        %1964 = vmatpush.msra.mxu0 0.0
        %1965 = vmatpush.msra.mxu0 %v1945
        %1966 = vmatmul.f32.gmra.mxu0 %v1948
        %v1967 = vpop.f32.mrf.mxu0
        %v1968 = vadd.f32 %v1942, %v1967
        %1969 = vdwg.mxu0
        %s1970 = scalar_lea.vmem %s10, 64
        %v1971 = vld [vmem:[%s1970] sm:$0xff]
        %1972 = vrot.lane.b32.xlu0 %v1747, 110
        %v1973 = vpop.permute.xlu0 %1972
        %v1976 = vsel %vm1477, %v1971, 0
        %1978 = vmatpush.msra.mxu0 0.0
        %1979 = vmatpush.msra.mxu0 0.0
        %1980 = vmatpush.msra.mxu0 0.0
        %1981 = vmatpush.msra.mxu0 0.0
        %1982 = vmatpush.msra.mxu0 0.0
        %1983 = vmatpush.msra.mxu0 0.0
        %1984 = vmatpush.msra.mxu0 0.0
        %1985 = vmatpush.msra.mxu0 0.0
        %1986 = vmatpush.msra.mxu0 0.0
        %1987 = vmatpush.msra.mxu0 0.0
        %1988 = vmatpush.msra.mxu0 0.0
        %1989 = vmatpush.msra.mxu0 0.0
        %1990 = vmatpush.msra.mxu0 0.0
        %1991 = vmatpush.msra.mxu0 0.0
        %1992 = vmatpush.msra.mxu0 0.0
        %1993 = vmatpush.msra.mxu0 %v1973
        %1994 = vmatmul.f32.gmra.mxu0 %v1976
        %v1995 = vpop.f32.mrf.mxu0
        %v1996 = vadd.f32 0.0, %v1995
        %1997 = vdwg.mxu0
        %v1998 = vadd.f32 %v1968, %v1996
        %v1999 = vmul.f32 %v1828, %v1724
        %v2000 = vadd.f32 %v1999, %v1913
        %v2001 = vmul.f32 %v1998, %v1729
        %v2002 = vadd.f32 %v2000, %v2001
        %v2003 = vld [vmem:[%s11] sm:$0xff]
        %2005 = vset.pattern.permute.xlu0 0
        %2006 = vperm.xlu0 %2005, %v2003
        %v2007 = vpop.permute.xlu0 %2006
        %v2009 = vadd.f32 %v2002, %v2007
        %v2010 = vadd.f32 %v2009, %v1458
        %v2011 = vmax.f32 %v2010, 0.0
        %2013 = vrot.lane.b32.xlu0 %v2011, 9
        %v2014 = vpop.permute.xlu0 %2013
        %2016 = vst.msk [vmem:[#allocation3] sm:$0xff] %vm1467, %v2014
        %v2017 = vld [vmem:[%s12] sm:$0xff]
        %v2018 = vld [vmem:[#allocation3] sm:$0xff]
        %s2019 = scalar_lea.vmem %s12, 24
        %v2020 = vld [vmem:[%s2019] sm:$0xff]
        %2022 = vrot.lane.b32.xlu0 %v2018, 120
        %v2023 = vpop.permute.xlu0 %2022
        %v2026 = vsel %vm1477, %v2020, 0
        %2028 = vmatpush.msra.mxu0 0.0
        %2029 = vmatpush.msra.mxu0 0.0
        %2030 = vmatpush.msra.mxu0 0.0
        %2031 = vmatpush.msra.mxu0 0.0
        %2032 = vmatpush.msra.mxu0 0.0
        %2033 = vmatpush.msra.mxu0 0.0
        %2034 = vmatpush.msra.mxu0 0.0
        %2035 = vmatpush.msra.mxu0 0.0
        %2036 = vmatpush.msra.mxu0 0.0
        %2037 = vmatpush.msra.mxu0 0.0
        %2038 = vmatpush.msra.mxu0 0.0
        %2039 = vmatpush.msra.mxu0 0.0
        %2040 = vmatpush.msra.mxu0 0.0
        %2041 = vmatpush.msra.mxu0 0.0
        %2042 = vmatpush.msra.mxu0 0.0
        %2043 = vmatpush.msra.mxu0 %v2023
        %2044 = vmatmul.f32.gmra.mxu0 %v2026
        %v2045 = vpop.f32.mrf.mxu0
        %v2046 = vadd.f32 0.0, %v2045
        %2047 = vdwg.mxu0
        %v2049 = vsel %vm1477, %v2017, 0
        %2051 = vmatpush.msra.mxu0 0.0
        %2052 = vmatpush.msra.mxu0 0.0
        %2053 = vmatpush.msra.mxu0 0.0
        %2054 = vmatpush.msra.mxu0 0.0
        %2055 = vmatpush.msra.mxu0 0.0
        %2056 = vmatpush.msra.mxu0 0.0
        %2057 = vmatpush.msra.mxu0 0.0
        %2058 = vmatpush.msra.mxu0 0.0
        %2059 = vmatpush.msra.mxu0 0.0
        %2060 = vmatpush.msra.mxu0 0.0
        %2061 = vmatpush.msra.mxu0 0.0
        %2062 = vmatpush.msra.mxu0 0.0
        %2063 = vmatpush.msra.mxu0 0.0
        %2064 = vmatpush.msra.mxu0 0.0
        %2065 = vmatpush.msra.mxu0 0.0
        %2066 = vmatpush.msra.mxu0 %v2018
        %2067 = vmatmul.f32.gmra.mxu0 %v2049
        %v2068 = vpop.f32.mrf.mxu0
        %v2069 = vadd.f32 %v2046, %v2068
        %2070 = vdwg.mxu0
        %s2071 = scalar_lea.vmem %s12, 48
        %v2072 = vld [vmem:[%s2071] sm:$0xff]
        %2073 = vrot.lane.b32.xlu0 %v2018, 112
        %v2074 = vpop.permute.xlu0 %2073
        %v2077 = vsel %vm1477, %v2072, 0
        %2079 = vmatpush.msra.mxu0 0.0
        %2080 = vmatpush.msra.mxu0 0.0
        %2081 = vmatpush.msra.mxu0 0.0
        %2082 = vmatpush.msra.mxu0 0.0
        %2083 = vmatpush.msra.mxu0 0.0
        %2084 = vmatpush.msra.mxu0 0.0
        %2085 = vmatpush.msra.mxu0 0.0
        %2086 = vmatpush.msra.mxu0 0.0
        %2087 = vmatpush.msra.mxu0 0.0
        %2088 = vmatpush.msra.mxu0 0.0
        %2089 = vmatpush.msra.mxu0 0.0
        %2090 = vmatpush.msra.mxu0 0.0
        %2091 = vmatpush.msra.mxu0 0.0
        %2092 = vmatpush.msra.mxu0 0.0
        %2093 = vmatpush.msra.mxu0 0.0
        %2094 = vmatpush.msra.mxu0 %v2074
        %2095 = vmatmul.f32.gmra.mxu0 %v2077
        %v2096 = vpop.f32.mrf.mxu0
        %v2097 = vadd.f32 0.0, %v2096
        %2098 = vdwg.mxu0
        %v2099 = vadd.f32 %v2069, %v2097
        %s2100 = scalar_lea.vmem %s12, 8
        %v2101 = vld [vmem:[%s2100] sm:$0xff]
        %s2102 = scalar_lea.vmem %s12, 32
        %v2103 = vld [vmem:[%s2102] sm:$0xff]
        %2104 = vrot.lane.b32.xlu0 %v2018, 119
        %v2105 = vpop.permute.xlu0 %2104
        %v2108 = vsel %vm1477, %v2103, 0
        %2110 = vmatpush.msra.mxu0 0.0
        %2111 = vmatpush.msra.mxu0 0.0
        %2112 = vmatpush.msra.mxu0 0.0
        %2113 = vmatpush.msra.mxu0 0.0
        %2114 = vmatpush.msra.mxu0 0.0
        %2115 = vmatpush.msra.mxu0 0.0
        %2116 = vmatpush.msra.mxu0 0.0
        %2117 = vmatpush.msra.mxu0 0.0
        %2118 = vmatpush.msra.mxu0 0.0
        %2119 = vmatpush.msra.mxu0 0.0
        %2120 = vmatpush.msra.mxu0 0.0
        %2121 = vmatpush.msra.mxu0 0.0
        %2122 = vmatpush.msra.mxu0 0.0
        %2123 = vmatpush.msra.mxu0 0.0
        %2124 = vmatpush.msra.mxu0 0.0
        %2125 = vmatpush.msra.mxu0 %v2105
        %2126 = vmatmul.f32.gmra.mxu0 %v2108
        %v2127 = vpop.f32.mrf.mxu0
        %v2128 = vadd.f32 0.0, %v2127
        %2129 = vdwg.mxu0
        %2130 = vrot.lane.b32.xlu0 %v2018, 127
        %v2131 = vpop.permute.xlu0 %2130
        %v2134 = vsel %vm1477, %v2101, 0
        %2136 = vmatpush.msra.mxu0 0.0
        %2137 = vmatpush.msra.mxu0 0.0
        %2138 = vmatpush.msra.mxu0 0.0
        %2139 = vmatpush.msra.mxu0 0.0
        %2140 = vmatpush.msra.mxu0 0.0
        %2141 = vmatpush.msra.mxu0 0.0
        %2142 = vmatpush.msra.mxu0 0.0
        %2143 = vmatpush.msra.mxu0 0.0
        %2144 = vmatpush.msra.mxu0 0.0
        %2145 = vmatpush.msra.mxu0 0.0
        %2146 = vmatpush.msra.mxu0 0.0
        %2147 = vmatpush.msra.mxu0 0.0
        %2148 = vmatpush.msra.mxu0 0.0
        %2149 = vmatpush.msra.mxu0 0.0
        %2150 = vmatpush.msra.mxu0 0.0
        %2151 = vmatpush.msra.mxu0 %v2131
        %2152 = vmatmul.f32.gmra.mxu0 %v2134
        %v2153 = vpop.f32.mrf.mxu0
        %v2154 = vadd.f32 %v2128, %v2153
        %2155 = vdwg.mxu0
        %s2156 = scalar_lea.vmem %s12, 56
        %v2157 = vld [vmem:[%s2156] sm:$0xff]
        %2158 = vrot.lane.b32.xlu0 %v2018, 111
        %v2159 = vpop.permute.xlu0 %2158
        %v2162 = vsel %vm1477, %v2157, 0
        %2164 = vmatpush.msra.mxu0 0.0
        %2165 = vmatpush.msra.mxu0 0.0
        %2166 = vmatpush.msra.mxu0 0.0
        %2167 = vmatpush.msra.mxu0 0.0
        %2168 = vmatpush.msra.mxu0 0.0
        %2169 = vmatpush.msra.mxu0 0.0
        %2170 = vmatpush.msra.mxu0 0.0
        %2171 = vmatpush.msra.mxu0 0.0
        %2172 = vmatpush.msra.mxu0 0.0
        %2173 = vmatpush.msra.mxu0 0.0
        %2174 = vmatpush.msra.mxu0 0.0
        %2175 = vmatpush.msra.mxu0 0.0
        %2176 = vmatpush.msra.mxu0 0.0
        %2177 = vmatpush.msra.mxu0 0.0
        %2178 = vmatpush.msra.mxu0 0.0
        %2179 = vmatpush.msra.mxu0 %v2159
        %2180 = vmatmul.f32.gmra.mxu0 %v2162
        %v2181 = vpop.f32.mrf.mxu0
        %v2182 = vadd.f32 0.0, %v2181
        %2183 = vdwg.mxu0
        %v2184 = vadd.f32 %v2154, %v2182
        %s2185 = scalar_lea.vmem %s12, 16
        %v2186 = vld [vmem:[%s2185] sm:$0xff]
        %s2187 = scalar_lea.vmem %s12, 40
        %v2188 = vld [vmem:[%s2187] sm:$0xff]
        %2189 = vrot.lane.b32.xlu0 %v2018, 118
        %v2190 = vpop.permute.xlu0 %2189
        %v2193 = vsel %vm1477, %v2188, 0
        %2195 = vmatpush.msra.mxu0 0.0
        %2196 = vmatpush.msra.mxu0 0.0
        %2197 = vmatpush.msra.mxu0 0.0
        %2198 = vmatpush.msra.mxu0 0.0
        %2199 = vmatpush.msra.mxu0 0.0
        %2200 = vmatpush.msra.mxu0 0.0
        %2201 = vmatpush.msra.mxu0 0.0
        %2202 = vmatpush.msra.mxu0 0.0
        %2203 = vmatpush.msra.mxu0 0.0
        %2204 = vmatpush.msra.mxu0 0.0
        %2205 = vmatpush.msra.mxu0 0.0
        %2206 = vmatpush.msra.mxu0 0.0
        %2207 = vmatpush.msra.mxu0 0.0
        %2208 = vmatpush.msra.mxu0 0.0
        %2209 = vmatpush.msra.mxu0 0.0
        %2210 = vmatpush.msra.mxu0 %v2190
        %2211 = vmatmul.f32.gmra.mxu0 %v2193
        %v2212 = vpop.f32.mrf.mxu0
        %v2213 = vadd.f32 0.0, %v2212
        %2214 = vdwg.mxu0
        %2215 = vrot.lane.b32.xlu0 %v2018, 126
        %v2216 = vpop.permute.xlu0 %2215
        %v2219 = vsel %vm1477, %v2186, 0
        %2221 = vmatpush.msra.mxu0 0.0
        %2222 = vmatpush.msra.mxu0 0.0
        %2223 = vmatpush.msra.mxu0 0.0
        %2224 = vmatpush.msra.mxu0 0.0
        %2225 = vmatpush.msra.mxu0 0.0
        %2226 = vmatpush.msra.mxu0 0.0
        %2227 = vmatpush.msra.mxu0 0.0
        %2228 = vmatpush.msra.mxu0 0.0
        %2229 = vmatpush.msra.mxu0 0.0
        %2230 = vmatpush.msra.mxu0 0.0
        %2231 = vmatpush.msra.mxu0 0.0
        %2232 = vmatpush.msra.mxu0 0.0
        %2233 = vmatpush.msra.mxu0 0.0
        %2234 = vmatpush.msra.mxu0 0.0
        %2235 = vmatpush.msra.mxu0 0.0
        %2236 = vmatpush.msra.mxu0 %v2216
        %2237 = vmatmul.f32.gmra.mxu0 %v2219
        %v2238 = vpop.f32.mrf.mxu0
        %v2239 = vadd.f32 %v2213, %v2238
        %2240 = vdwg.mxu0
        %s2241 = scalar_lea.vmem %s12, 64
        %v2242 = vld [vmem:[%s2241] sm:$0xff]
        %2243 = vrot.lane.b32.xlu0 %v2018, 110
        %v2244 = vpop.permute.xlu0 %2243
        %v2247 = vsel %vm1477, %v2242, 0
        %2249 = vmatpush.msra.mxu0 0.0
        %2250 = vmatpush.msra.mxu0 0.0
        %2251 = vmatpush.msra.mxu0 0.0
        %2252 = vmatpush.msra.mxu0 0.0
        %2253 = vmatpush.msra.mxu0 0.0
        %2254 = vmatpush.msra.mxu0 0.0
        %2255 = vmatpush.msra.mxu0 0.0
        %2256 = vmatpush.msra.mxu0 0.0
        %2257 = vmatpush.msra.mxu0 0.0
        %2258 = vmatpush.msra.mxu0 0.0
        %2259 = vmatpush.msra.mxu0 0.0
        %2260 = vmatpush.msra.mxu0 0.0
        %2261 = vmatpush.msra.mxu0 0.0
        %2262 = vmatpush.msra.mxu0 0.0
        %2263 = vmatpush.msra.mxu0 0.0
        %2264 = vmatpush.msra.mxu0 %v2244
        %2265 = vmatmul.f32.gmra.mxu0 %v2247
        %v2266 = vpop.f32.mrf.mxu0
        %v2267 = vadd.f32 0.0, %v2266
        %2268 = vdwg.mxu0
        %v2269 = vadd.f32 %v2239, %v2267
        %v2270 = vmul.f32 %v2099, %v1724
        %v2271 = vadd.f32 %v2270, %v2184
        %v2272 = vmul.f32 %v2269, %v1729
        %v2273 = vadd.f32 %v2271, %v2272
        %v2274 = vld [vmem:[%s13] sm:$0xff]
        %2276 = vset.pattern.permute.xlu0 0
        %2277 = vperm.xlu0 %2276, %v2274
        %v2278 = vpop.permute.xlu0 %2277
        %v2280 = vadd.f32 %v2273, %v2278
        %v2281 = vmax.f32 %v2280, 0.0
        %2283 = vrot.lane.b32.xlu0 %v2281, 9
        %v2284 = vpop.permute.xlu0 %2283
        %2286 = vst.msk [vmem:[#allocation3] sm:$0xff] %vm1467, %v2284
        %v2287 = vld [vmem:[#allocation6] sm:$0xff]
        %v2288 = vld [vmem:[#allocation3] sm:$0xff]
        %s2289 = scalar_lea.vmem [#allocation6], 24
        %v2290 = vld [vmem:[%s2289] sm:$0xff]
        %2292 = vrot.lane.b32.xlu0 %v2288, 120
        %v2293 = vpop.permute.xlu0 %2292
        %v2296 = vsel %vm1477, %v2290, 0
        %2298 = vmatpush.msra.mxu0 0.0
        %2299 = vmatpush.msra.mxu0 0.0
        %2300 = vmatpush.msra.mxu0 0.0
        %2301 = vmatpush.msra.mxu0 0.0
        %2302 = vmatpush.msra.mxu0 0.0
        %2303 = vmatpush.msra.mxu0 0.0
        %2304 = vmatpush.msra.mxu0 0.0
        %2305 = vmatpush.msra.mxu0 0.0
        %2306 = vmatpush.msra.mxu0 0.0
        %2307 = vmatpush.msra.mxu0 0.0
        %2308 = vmatpush.msra.mxu0 0.0
        %2309 = vmatpush.msra.mxu0 0.0
        %2310 = vmatpush.msra.mxu0 0.0
        %2311 = vmatpush.msra.mxu0 0.0
        %2312 = vmatpush.msra.mxu0 0.0
        %2313 = vmatpush.msra.mxu0 %v2293
        %2314 = vmatmul.f32.gmra.mxu0 %v2296
        %v2315 = vpop.f32.mrf.mxu0
        %v2316 = vadd.f32 0.0, %v2315
        %2317 = vdwg.mxu0
        %v2319 = vsel %vm1477, %v2287, 0
        %2321 = vmatpush.msra.mxu0 0.0
        %2322 = vmatpush.msra.mxu0 0.0
        %2323 = vmatpush.msra.mxu0 0.0
        %2324 = vmatpush.msra.mxu0 0.0
        %2325 = vmatpush.msra.mxu0 0.0
        %2326 = vmatpush.msra.mxu0 0.0
        %2327 = vmatpush.msra.mxu0 0.0
        %2328 = vmatpush.msra.mxu0 0.0
        %2329 = vmatpush.msra.mxu0 0.0
        %2330 = vmatpush.msra.mxu0 0.0
        %2331 = vmatpush.msra.mxu0 0.0
        %2332 = vmatpush.msra.mxu0 0.0
        %2333 = vmatpush.msra.mxu0 0.0
        %2334 = vmatpush.msra.mxu0 0.0
        %2335 = vmatpush.msra.mxu0 0.0
        %2336 = vmatpush.msra.mxu0 %v2288
        %2337 = vmatmul.f32.gmra.mxu0 %v2319
        %v2338 = vpop.f32.mrf.mxu0
        %v2339 = vadd.f32 %v2316, %v2338
        %2340 = vdwg.mxu0
        %s2341 = scalar_lea.vmem [#allocation6], 48
        %v2342 = vld [vmem:[%s2341] sm:$0xff]
        %2343 = vrot.lane.b32.xlu0 %v2288, 112
        %v2344 = vpop.permute.xlu0 %2343
        %v2347 = vsel %vm1477, %v2342, 0
        %2349 = vmatpush.msra.mxu0 0.0
        %2350 = vmatpush.msra.mxu0 0.0
        %2351 = vmatpush.msra.mxu0 0.0
        %2352 = vmatpush.msra.mxu0 0.0
        %2353 = vmatpush.msra.mxu0 0.0
        %2354 = vmatpush.msra.mxu0 0.0
        %2355 = vmatpush.msra.mxu0 0.0
        %2356 = vmatpush.msra.mxu0 0.0
        %2357 = vmatpush.msra.mxu0 0.0
        %2358 = vmatpush.msra.mxu0 0.0
        %2359 = vmatpush.msra.mxu0 0.0
        %2360 = vmatpush.msra.mxu0 0.0
        %2361 = vmatpush.msra.mxu0 0.0
        %2362 = vmatpush.msra.mxu0 0.0
        %2363 = vmatpush.msra.mxu0 0.0
        %2364 = vmatpush.msra.mxu0 %v2344
        %2365 = vmatmul.f32.gmra.mxu0 %v2347
        %v2366 = vpop.f32.mrf.mxu0
        %v2367 = vadd.f32 0.0, %v2366
        %2368 = vdwg.mxu0
        %v2369 = vadd.f32 %v2339, %v2367
        %s2370 = scalar_lea.vmem [#allocation6], 8
        %v2371 = vld [vmem:[%s2370] sm:$0xff]
        %s2372 = scalar_lea.vmem [#allocation6], 32
        %v2373 = vld [vmem:[%s2372] sm:$0xff]
        %2374 = vrot.lane.b32.xlu0 %v2288, 119
        %v2375 = vpop.permute.xlu0 %2374
        %v2378 = vsel %vm1477, %v2373, 0
        %2380 = vmatpush.msra.mxu0 0.0
        %2381 = vmatpush.msra.mxu0 0.0
        %2382 = vmatpush.msra.mxu0 0.0
        %2383 = vmatpush.msra.mxu0 0.0
        %2384 = vmatpush.msra.mxu0 0.0
        %2385 = vmatpush.msra.mxu0 0.0
        %2386 = vmatpush.msra.mxu0 0.0
        %2387 = vmatpush.msra.mxu0 0.0
        %2388 = vmatpush.msra.mxu0 0.0
        %2389 = vmatpush.msra.mxu0 0.0
        %2390 = vmatpush.msra.mxu0 0.0
        %2391 = vmatpush.msra.mxu0 0.0
        %2392 = vmatpush.msra.mxu0 0.0
        %2393 = vmatpush.msra.mxu0 0.0
        %2394 = vmatpush.msra.mxu0 0.0
        %2395 = vmatpush.msra.mxu0 %v2375
        %2396 = vmatmul.f32.gmra.mxu0 %v2378
        %v2397 = vpop.f32.mrf.mxu0
        %v2398 = vadd.f32 0.0, %v2397
        %2399 = vdwg.mxu0
        %2400 = vrot.lane.b32.xlu0 %v2288, 127
        %v2401 = vpop.permute.xlu0 %2400
        %v2404 = vsel %vm1477, %v2371, 0
        %2406 = vmatpush.msra.mxu0 0.0
        %2407 = vmatpush.msra.mxu0 0.0
        %2408 = vmatpush.msra.mxu0 0.0
        %2409 = vmatpush.msra.mxu0 0.0
        %2410 = vmatpush.msra.mxu0 0.0
        %2411 = vmatpush.msra.mxu0 0.0
        %2412 = vmatpush.msra.mxu0 0.0
        %2413 = vmatpush.msra.mxu0 0.0
        %2414 = vmatpush.msra.mxu0 0.0
        %2415 = vmatpush.msra.mxu0 0.0
        %2416 = vmatpush.msra.mxu0 0.0
        %2417 = vmatpush.msra.mxu0 0.0
        %2418 = vmatpush.msra.mxu0 0.0
        %2419 = vmatpush.msra.mxu0 0.0
        %2420 = vmatpush.msra.mxu0 0.0
        %2421 = vmatpush.msra.mxu0 %v2401
        %2422 = vmatmul.f32.gmra.mxu0 %v2404
        %v2423 = vpop.f32.mrf.mxu0
        %v2424 = vadd.f32 %v2398, %v2423
        %2425 = vdwg.mxu0
        %s2426 = scalar_lea.vmem [#allocation6], 56
        %v2427 = vld [vmem:[%s2426] sm:$0xff]
        %2428 = vrot.lane.b32.xlu0 %v2288, 111
        %v2429 = vpop.permute.xlu0 %2428
        %v2432 = vsel %vm1477, %v2427, 0
        %2434 = vmatpush.msra.mxu0 0.0
        %2435 = vmatpush.msra.mxu0 0.0
        %2436 = vmatpush.msra.mxu0 0.0
        %2437 = vmatpush.msra.mxu0 0.0
        %2438 = vmatpush.msra.mxu0 0.0
        %2439 = vmatpush.msra.mxu0 0.0
        %2440 = vmatpush.msra.mxu0 0.0
        %2441 = vmatpush.msra.mxu0 0.0
        %2442 = vmatpush.msra.mxu0 0.0
        %2443 = vmatpush.msra.mxu0 0.0
        %2444 = vmatpush.msra.mxu0 0.0
        %2445 = vmatpush.msra.mxu0 0.0
        %2446 = vmatpush.msra.mxu0 0.0
        %2447 = vmatpush.msra.mxu0 0.0
        %2448 = vmatpush.msra.mxu0 0.0
        %2449 = vmatpush.msra.mxu0 %v2429
        %2450 = vmatmul.f32.gmra.mxu0 %v2432
        %v2451 = vpop.f32.mrf.mxu0
        %v2452 = vadd.f32 0.0, %v2451
        %2453 = vdwg.mxu0
        %v2454 = vadd.f32 %v2424, %v2452
        %s2455 = scalar_lea.vmem [#allocation6], 16
        %v2456 = vld [vmem:[%s2455] sm:$0xff]
        %s2457 = scalar_lea.vmem [#allocation6], 40
        %v2458 = vld [vmem:[%s2457] sm:$0xff]
        %2459 = vrot.lane.b32.xlu0 %v2288, 118
        %v2460 = vpop.permute.xlu0 %2459
        %v2463 = vsel %vm1477, %v2458, 0
        %2465 = vmatpush.msra.mxu0 0.0
        %2466 = vmatpush.msra.mxu0 0.0
        %2467 = vmatpush.msra.mxu0 0.0
        %2468 = vmatpush.msra.mxu0 0.0
        %2469 = vmatpush.msra.mxu0 0.0
        %2470 = vmatpush.msra.mxu0 0.0
        %2471 = vmatpush.msra.mxu0 0.0
        %2472 = vmatpush.msra.mxu0 0.0
        %2473 = vmatpush.msra.mxu0 0.0
        %2474 = vmatpush.msra.mxu0 0.0
        %2475 = vmatpush.msra.mxu0 0.0
        %2476 = vmatpush.msra.mxu0 0.0
        %2477 = vmatpush.msra.mxu0 0.0
        %2478 = vmatpush.msra.mxu0 0.0
        %2479 = vmatpush.msra.mxu0 0.0
        %2480 = vmatpush.msra.mxu0 %v2460
        %2481 = vmatmul.f32.gmra.mxu0 %v2463
        %v2482 = vpop.f32.mrf.mxu0
        %v2483 = vadd.f32 0.0, %v2482
        %2484 = vdwg.mxu0
        %2485 = vrot.lane.b32.xlu0 %v2288, 126
        %v2486 = vpop.permute.xlu0 %2485
        %v2489 = vsel %vm1477, %v2456, 0
        %2491 = vmatpush.msra.mxu0 0.0
        %2492 = vmatpush.msra.mxu0 0.0
        %2493 = vmatpush.msra.mxu0 0.0
        %2494 = vmatpush.msra.mxu0 0.0
        %2495 = vmatpush.msra.mxu0 0.0
        %2496 = vmatpush.msra.mxu0 0.0
        %2497 = vmatpush.msra.mxu0 0.0
        %2498 = vmatpush.msra.mxu0 0.0
        %2499 = vmatpush.msra.mxu0 0.0
        %2500 = vmatpush.msra.mxu0 0.0
        %2501 = vmatpush.msra.mxu0 0.0
        %2502 = vmatpush.msra.mxu0 0.0
        %2503 = vmatpush.msra.mxu0 0.0
        %2504 = vmatpush.msra.mxu0 0.0
        %2505 = vmatpush.msra.mxu0 0.0
        %2506 = vmatpush.msra.mxu0 %v2486
        %2507 = vmatmul.f32.gmra.mxu0 %v2489
        %v2508 = vpop.f32.mrf.mxu0
        %v2509 = vadd.f32 %v2483, %v2508
        %2510 = vdwg.mxu0
        %s2511 = scalar_lea.vmem [#allocation6], 64
        %v2512 = vld [vmem:[%s2511] sm:$0xff]
        %2513 = vrot.lane.b32.xlu0 %v2288, 110
        %v2514 = vpop.permute.xlu0 %2513
        %v2517 = vsel %vm1477, %v2512, 0
        %2519 = vmatpush.msra.mxu0 0.0
        %2520 = vmatpush.msra.mxu0 0.0
        %2521 = vmatpush.msra.mxu0 0.0
        %2522 = vmatpush.msra.mxu0 0.0
        %2523 = vmatpush.msra.mxu0 0.0
        %2524 = vmatpush.msra.mxu0 0.0
        %2525 = vmatpush.msra.mxu0 0.0
        %2526 = vmatpush.msra.mxu0 0.0
        %2527 = vmatpush.msra.mxu0 0.0
        %2528 = vmatpush.msra.mxu0 0.0
        %2529 = vmatpush.msra.mxu0 0.0
        %2530 = vmatpush.msra.mxu0 0.0
        %2531 = vmatpush.msra.mxu0 0.0
        %2532 = vmatpush.msra.mxu0 0.0
        %2533 = vmatpush.msra.mxu0 0.0
        %2534 = vmatpush.msra.mxu0 %v2514
        %2535 = vmatmul.f32.gmra.mxu0 %v2517
        %v2536 = vpop.f32.mrf.mxu0
        %v2537 = vadd.f32 0.0, %v2536
        %2538 = vdwg.mxu0
        %v2539 = vadd.f32 %v2509, %v2537
        %v2540 = vmul.f32 %v2369, %v1724
        %v2541 = vadd.f32 %v2540, %v2454
        %v2542 = vmul.f32 %v2539, %v1729
        %v2543 = vadd.f32 %v2541, %v2542
        %v2544 = vld [vmem:[%s15] sm:$0xff]
        %2546 = vset.pattern.permute.xlu0 0
        %2547 = vperm.xlu0 %2546, %v2544
        %v2548 = vpop.permute.xlu0 %2547
        %v2550 = vadd.f32 %v2543, %v2548
        %v2551 = vadd.f32 %v2550, %v2010
        %vm2552 = vcmask 523264
        %2553 = vst.msk [vmem:[%s553] sm:$0xff] %vm2552, %v2551
        %p2554 = scmp.lt.s32.totalorder %s29, 1
        %s2555 = scalar_select %p2554, %s29, 1
        %s2556 = smul.addr %s2555, 8
        %s2557 = scalar_lea.vmem %s16, %s2556
        // Predicated region
        $region93: #{impala_block_forward.1} parent=83 // pred_check
          %p2558 = pneg %p388
        $region94: #{impala_block_forward.1} parent=83 // pred_check_branch
          %2560 = sbr.rel (%p2558) target = $region96
        $region95: #{impala_block_forward.1} parent=83 // pred_region
          _
        $region96: #{impala_block_forward.1} parent=83 // pred_fallthru
          _
      $region84: #{impala_block_forward.1} parent=5 // pred_fallthru
        _
      %p2561 = scmp.le.s32.totalorder 2, %s24
      // Predicated region
      $region97: #{impala_block_forward.1} parent=5 // pred_check
        %p2562 = pneg %p2561
      $region98: #{impala_block_forward.1} parent=5 // pred_check_branch
        %2564 = sbr.rel (%p2562) target = $region100
      $region99: #{impala_block_forward.1} parent=5 // pred_region
        %s2565 = ssub.s32 %s24, 2
        // Predicated region
        $region101: #{impala_block_forward.1} parent=99 // pred_check
          %p2566 = pneg %p394
        $region102: #{impala_block_forward.1} parent=99 // pred_check_branch
          %2568 = sbr.rel (%p2566) target = $region104
        $region103: #{impala_block_forward.1} parent=99 // pred_region
          %p2569 = scmp.lt.s32.totalorder %s30, 1
          %s2570 = scalar_select %p2569, %s30, 1
          %s2571 = smul.addr %s2570, 8
          %s2572 = scalar_lea.vmem %s16, %s2571
        $region104: #{impala_block_forward.1} parent=99 // pred_fallthru
          _
      $region100: #{impala_block_forward.1} parent=5 // pred_fallthru
        _
    $region6: #{impala_block_forward.1} parent=1 // loop_footer
      %s28 = sadd.s32 1, %s24
    $region7: #{impala_block_forward.1} parent=1 // loop_footer_branch
      %23 = sbr.rel target = $region3
    $region8: #{impala_block_forward.1} parent=1 // loop_exit
      _
    %2573 = vsyncpa [#allocation5], 1
    %s2574 = scalar_lea.sflag [#allocation5], 1
    %2575 = vsyncpa %s2574, 1
    %2576 = vsyncpa [#allocation7], 1

</llo_original>
